<compile_context>
chip_gen: v6e
topology: v6e:2x2x1
jax: 0.10.0
libtpu: 0.0.40
codegen_flags: <defaults>
</compile_context>

<pallas_src>
import functools

import jax
import jax.numpy as jnp
from jax import lax
from jax.experimental import pallas as pl
from jax.experimental.pallas import tpu as pltpu


# ----------------------------------------------------------------------------- kernel


def _dcc_fused_kernel(a_ref, b_ref, w_ref, out_ref,
                      stripe_ref, mx_ref, denom_ref, pos_ref, *,
                      B, V, M, TM, TN, loss_scale, scalar_weight, padded):
    """Fused DCC loss: grid (row_stripe r, phase p, col_tile c).

    p == 0: adc tile = (cf/T) @ cf.T  -> stripe scratch + running row max.
    p == 1: re-read stripe, accumulate denom / sum(mask*logits); emit loss rows at
            the last column tile.
    """
    r = pl.program_id(0)
    p = pl.program_id(1)
    c = pl.program_id(2)
    num_c = pl.num_programs(2)

    @pl.when(jnp.logical_and(p == 0, c == 0))
    def _init():
        mx_ref[...] = jnp.full_like(mx_ref, -jnp.inf)
        denom_ref[...] = jnp.zeros_like(denom_ref)
        pos_ref[...] = jnp.zeros_like(pos_ref)

    # Column / row ids from tiny iota vectors (never an MxM mask in VMEM).
    col_ids = c * TN + lax.broadcasted_iota(jnp.int32, (1, TN), 1)      # [1, TN]

    @pl.when(p == 0)
    def _matmul_phase():
        # adc = (cf @ cf.T) / temperature ; 1/temperature is pre-folded into the LHS.
        adc = jnp.dot(a_ref[...], b_ref[...],
                      preferred_element_type=jnp.float32)               # [TM, TN]
        stripe_ref[c] = adc
        if padded:
            adc_m = jnp.where(col_ids < M, adc, -jnp.inf)               # ignore pad cols
        else:
            adc_m = adc
        mx_ref[...] = jnp.maximum(mx_ref[...],
                                  jnp.max(adc_m, axis=1, keepdims=True))

    @pl.when(p == 1)
    def _softmax_phase():
        logits = stripe_ref[c] - mx_ref[...]                            # [TM, TN]
        row_ids = r * TM + lax.broadcasted_iota(jnp.int32, (TM, 1), 0)  # [TM, 1]
        valid = row_ids != col_ids                                      # logits_mask (no self)
        if padded:
            valid = jnp.logical_and(valid, col_ids < M)
        # positives: same sample index (row % B == col % B), excluding self.
        pos = jnp.logical_and((row_ids % B) == (col_ids % B), valid)

        if scalar_weight:
            w = w_ref[0, 0]                                             # SMEM scalar
        else:
            w = w_ref[...].astype(jnp.float32)                          # [TM, TN]

        exp_l = jnp.where(valid, jnp.exp(logits * w), 0.0)
        denom_ref[...] += jnp.sum(exp_l, axis=1, keepdims=True)
        pos_ref[...] += jnp.sum(jnp.where(pos, logits, 0.0), axis=1, keepdims=True)

        @pl.when(c == num_c - 1)
        def _emit():
            # sum(mask, 1) == V - 1 (compile-time constant for labels=None).
            # V == 1 gives 0/0 exactly like the PyTorch reference.
            n_pos = float(V - 1)
            mean_log_prob_pos = (pos_ref[...] - n_pos * jnp.log(denom_ref[...])) / n_pos
            out_ref[...] = -loss_scale * mean_log_prob_pos


# ----------------------------------------------------------------------------- wrapper


def _round_up(x, m):
    return ((x + m - 1) // m) * m


def dcc_loss(features, image_weight, temperature=0.07, base_temperature=0.07,
             *, dense_weight_dtype=None, matmul_dtype=None):
    """Pallas DCCLoss.forward (contrast_mode='all', labels=None, mask=None).

    image_weight: scalar, broadcastable vector, or dense (M, M) array (M = n_views*bsz).
    dense_weight_dtype: e.g. jnp.bfloat16 to halve the dominant (M, M) weight HBM
        stream (value only scales the exp argument; small relative rounding).
    matmul_dtype: e.g. jnp.bfloat16 to feed the MXU bf16 operands (v7x-friendly);
        default keeps float32 operands.
    """
    B, V = features.shape[0], features.shape[1]
    feats = features.reshape(B, V, -1).astype(jnp.float32)
    D = feats.shape[-1]
    M = V * B

    # contrast_feature = torch.cat(torch.unbind(features, dim=1), dim=0) -> [V*B, D]
    cf = jnp.transpose(feats, (1, 0, 2)).reshape(M, D)

    Dp = _round_up(D, 128)     # lane-align the feature (contraction) dim
    Mp = _round_up(M, 256)     # pad M so tiles are always 256-aligned (never full-extent)

    # Fold 1/temperature into the LHS: deletes a [TM, TN] VPU divide per tile.
    cf_lhs = cf * jnp.float32(1.0 / float(temperature))
    cf_rhs = cf
    if matmul_dtype is not None:
        cf_lhs = cf_lhs.astype(matmul_dtype)
        cf_rhs = cf_rhs.astype(matmul_dtype)
    cf_lhs = jnp.pad(cf_lhs, ((0, Mp - M), (0, Dp - D)))                # [Mp, Dp]
    cf_t = jnp.pad(cf_rhs, ((0, Mp - M), (0, Dp - D))).T                # [Dp, Mp] (pre-transposed RHS)

    iw = jnp.asarray(image_weight, jnp.float32)
    scalar_weight = (iw.size == 1)

    op_bytes = jnp.dtype(matmul_dtype).itemsize if matmul_dtype is not None else 4
    w_bytes = (jnp.dtype(dense_weight_dtype).itemsize
               if (dense_weight_dtype is not None and not scalar_weight) else 4)

    # ---- tile selection: biggest 256-aligned tiles that fit the VMEM budget --------
    def footprint(tm, tn):
        fp = (Mp // tn) * tm * tn * 4            # adc stripe scratch (single buffer)
        fp += 2 * tm * Dp * op_bytes             # cf row tile (double-buffered)
        fp += 2 * Dp * tn * op_bytes             # cf^T column tile (double-buffered)
        if not scalar_weight:
            fp += 2 * tm * tn * w_bytes          # image_weight tile (double-buffered)
        fp += 2 * tm * 4 + 3 * tm * 4            # loss rows out + row accumulators
        return fp

    budget = 40 * 1024 * 1024
    tm_opts = [t for t in (512, 256) if Mp % t == 0]
    tn_opts = [t for t in (1024, 512, 256) if Mp % t == 0]
    TM, TN = tm_opts[-1], tn_opts[-1]
    chosen = False
    for tm in tm_opts:
        for tn in tn_opts:
            if footprint(tm, tn) <= budget:
                TM, TN = tm, tn
                chosen = True
                break
        if chosen:
            break
    # TODO(synk): for very large M or D (stripe / untiled feature dim beyond the VMEM
    # budget) a K-tiled 4-D-grid variant would be needed.

    R, C = Mp // TM, Mp // TN

    # ---- image_weight argument / spec ----------------------------------------------
    if scalar_weight:
        w_arg = iw.reshape(1, 1)
        w_spec = pl.BlockSpec(memory_space=pltpu.MemorySpace.SMEM)      # no HBM stream
    else:
        # TODO(synk): per-row / per-column vector weights could be streamed as
        # (TM,1)/(1,TN) tiles; they are currently broadcast to dense (M, M).
        w = jnp.broadcast_to(iw, (M, M))
        if dense_weight_dtype is not None:
            w = w.astype(dense_weight_dtype)
        w_arg = jnp.pad(w, ((0, Mp - M), (0, Mp - M)))
        # Phase-aware map: pinned to (r, 0) during the matmul phase (no wasted DMA),
        # streamed (r, c) during the softmax phase.
        w_spec = pl.BlockSpec((TM, TN), lambda r, p, c: (r, c * p))

    vmem_limit = max(int(footprint(TM, TN) * 1.3) + 4 * 1024 * 1024, 16 * 1024 * 1024)
    cparams = pltpu.CompilerParams(
        dimension_semantics=("parallel", "arbitrary", "arbitrary"),
        vmem_limit_bytes=vmem_limit,
    )
    # NOTE: pipeline_mode=pl.Buffered(3) on the cf^T / w specs is a further option if
    # profiling shows exposed DMA at row-stripe boundaries.

    kernel = functools.partial(
        _dcc_fused_kernel, B=B, V=V, M=M, TM=TM, TN=TN,
        loss_scale=float(temperature) / float(base_temperature),
        scalar_weight=scalar_weight, padded=(Mp != M))

    loss_rows = pl.pallas_call(
        kernel,
        out_shape=jax.ShapeDtypeStruct((Mp, 1), jnp.float32),
        grid=(R, 2, C),
        in_specs=[
            # cf row tile: only changes with r.
            pl.BlockSpec((TM, Dp), lambda r, p, c: (r, 0)),
            # cf^T column tile: streamed in phase 0, pinned at its last block in
            # phase 1 (no re-fetch) -> each byte streamed exactly once per stripe.
            pl.BlockSpec((Dp, TN), lambda r, p, c: (0, c * (1 - p) + (C - 1) * p)),
            w_spec,
        ],
        out_specs=pl.BlockSpec((TM, 1), lambda r, p, c: (r, 0)),
        scratch_shapes=[
            pltpu.VMEM((C, TM, TN), jnp.float32),   # adc stripe (one matmul per tile)
            pltpu.VMEM((TM, 1), jnp.float32),       # row max
            pltpu.VMEM((TM, 1), jnp.float32),       # denom accumulator
            pltpu.VMEM((TM, 1), jnp.float32),       # sum(mask * logits) accumulator
        ],
        compiler_params=cparams,
    )(cf_lhs, cf_t, w_arg)

    # loss.view(anchor_count, batch_size).mean() == mean over the M real anchors.
    return jnp.sum(loss_rows[:M, 0]) / M


# ----------------------------------------------------------------------------- reference


def dcc_loss_ref(features, image_weight, temperature=0.07, base_temperature=0.07):
    """Pure-JAX reference mirroring the PyTorch forward (for verification)."""
    B, V = features.shape[0], features.shape[1]
    feats = features.reshape(B, V, -1).astype(jnp.float32)
    M = V * B
    cf = jnp.transpose(feats, (1, 0, 2)).reshape(M, -1)
    mask = jnp.tile(jnp.eye(B, dtype=jnp.float32), (V, V))
    adc = jnp.matmul(cf, cf.T, precision=lax.Precision.HIGHEST) / temperature
    logits = adc - jnp.max(adc, axis=1, keepdims=True)
    logits_mask = 1.0 - jnp.eye(M, dtype=jnp.float32)
    mask = mask * logits_mask
    w = jnp.broadcast_to(jnp.asarray(image_weight, jnp.float32), (M, M))
    exp_logits = jnp.exp(logits * w) * logits_mask
    log_prob = logits - jnp.log(jnp.sum(exp_logits, axis=1, keepdims=True))
    mean_log_prob_pos = jnp.sum(mask * log_prob, axis=1) / jnp.sum(mask, axis=1)
    loss = -(temperature / base_temperature) * mean_log_prob_pos
    return jnp.mean(loss)


# ----------------------------------------------------------------------------- test


if __name__ == "__main__":
    key = jax.random.PRNGKey(0)
    B, V, D = 8, 2, 32
    k1, k2 = jax.random.split(key)
    features = jax.random.normal(k1, (B, V, D), dtype=jnp.float32)
    # SupCon-style losses expect L2-normalized embeddings (un-normalized random
    # features underflow the softmax denominator to 0 -> NaN in kernel AND reference).
    features = features / jnp.linalg.norm(features, axis=-1, keepdims=True)
    M = V * B
    image_weight = jax.random.uniform(k2, (M, M), minval=0.5, maxval=1.5,
                                      dtype=jnp.float32)

    # 1) dense (M, M) intensity weight, f32 everywhere (bit-faithful path).
    loss = jax.block_until_ready(dcc_loss(features, image_weight))
    ref = jax.block_until_ready(dcc_loss_ref(features, image_weight))
    assert jnp.isfinite(loss), loss
    assert jnp.allclose(loss, ref, rtol=1e-4, atol=1e-4), (loss, ref)

    # 2) scalar intensity weight: passed through SMEM, no (M, M) HBM stream at all.
    w_scalar = jnp.float32(1.3)
    loss_s = jax.block_until_ready(dcc_loss(features, w_scalar))
    ref_s = jax.block_until_ready(dcc_loss_ref(features, w_scalar))
    assert jnp.allclose(loss_s, ref_s, rtol=1e-4, atol=1e-4), (loss_s, ref_s)

    # 3) bandwidth-optimized variant: bf16 weight stream + bf16 MXU operands
    #    (looser tolerance — bf16 rounding ahead of exp()).
    loss_b = jax.block_until_ready(
        dcc_loss(features, image_weight,
                 dense_weight_dtype=jnp.bfloat16, matmul_dtype=jnp.bfloat16))
    assert jnp.isfinite(loss_b), loss_b
    assert jnp.allclose(loss_b, ref, rtol=5e-2, atol=5e-2), (loss_b, ref)

    print("KERNEL_OK")
</pallas_src>

<mosaic_0001>
module attributes {stable_mosaic.version = 11 : i64} {
  func.func @_dcc_fused_kernel(%arg0: i32, %arg1: i32, %arg2: i32, %arg3: memref<256x128xf32, #tpu.memory_space<vmem>>, %arg4: memref<128x256xf32, #tpu.memory_space<vmem>>, %arg5: memref<256x256xf32, #tpu.memory_space<vmem>>, %arg6: memref<256x1xf32, #tpu.memory_space<vmem>>, %arg7: memref<1x256x256xf32, #tpu.memory_space<vmem>>, %arg8: memref<256x1xf32, #tpu.memory_space<vmem>>, %arg9: memref<256x1xf32, #tpu.memory_space<vmem>>, %arg10: memref<256x1xf32, #tpu.memory_space<vmem>>) attributes {dimension_semantics = [#tpu.dimension_semantics<parallel>, #tpu.dimension_semantics<arbitrary>, #tpu.dimension_semantics<arbitrary>], iteration_bounds = array<i64: 1, 2, 1>, scalar_prefetch = 0 : i64, scratch_operands = 4 : i64, tpu.core_type = #tpu.core_type<tc>, window_params = [{transform_indices = @transform_0, window_bounds = array<i64: 256, 128>}, {transform_indices = @transform_1, window_bounds = array<i64: 128, 256>}, {transform_indices = @transform_2, window_bounds = array<i64: 256, 256>}, {transform_indices = @transform_3, window_bounds = array<i64: 256, 1>}]} {
    %c0_i32 = arith.constant 0 : i32
    %0 = arith.cmpi eq, %arg1, %c0_i32 : i32
    %c0_i32_0 = arith.constant 0 : i32
    %1 = arith.cmpi eq, %arg2, %c0_i32_0 : i32
    %2 = arith.andi %0, %1 : i1
    %3 = arith.extui %2 : i1 to i32
    %c0_i32_1 = arith.constant 0 : i32
    %4 = arith.cmpi ne, %3, %c0_i32_1 : i32
    scf.if %4 {
      %cst = arith.constant 0xFF800000 : f32
      %15 = vector.broadcast %cst : f32 to vector<256x1xf32>
      %c0 = arith.constant 0 : index
      %c0_5 = arith.constant 0 : index
      %16 = vector.load %arg8[%c0, %c0_5] : memref<256x1xf32, #tpu.memory_space<vmem>>, vector<256x1xf32>
      tpu.vector_store %arg8[%c0, %c0_5], %15 {strides = array<i32>} : memref<256x1xf32, #tpu.memory_space<vmem>>, vector<256x1xf32>,
      %cst_6 = arith.constant 0.000000e+00 : f32
      %17 = vector.broadcast %cst_6 : f32 to vector<256x1xf32>
      %c0_7 = arith.constant 0 : index
      %c0_8 = arith.constant 0 : index
      %18 = vector.load %arg9[%c0_7, %c0_8] : memref<256x1xf32, #tpu.memory_space<vmem>>, vector<256x1xf32>
      tpu.vector_store %arg9[%c0_7, %c0_8], %17 {strides = array<i32>} : memref<256x1xf32, #tpu.memory_space<vmem>>, vector<256x1xf32>,
      %cst_9 = arith.constant 0.000000e+00 : f32
      %19 = vector.broadcast %cst_9 : f32 to vector<256x1xf32>
      %c0_10 = arith.constant 0 : index
      %c0_11 = arith.constant 0 : index
      %20 = vector.load %arg10[%c0_10, %c0_11] : memref<256x1xf32, #tpu.memory_space<vmem>>, vector<256x1xf32>
      tpu.vector_store %arg10[%c0_10, %c0_11], %19 {strides = array<i32>} : memref<256x1xf32, #tpu.memory_space<vmem>>, vector<256x1xf32>,
    } else {
    }
    %c256_i32 = arith.constant 256 : i32
    %5 = arith.muli %arg2, %c256_i32 : i32
    %6 = tpu.iota {dimensions = array<i32: 1>} : vector<1x256xi32>
    %7 = vector.broadcast %5 : i32 to vector<1x256xi32>
    %8 = arith.addi %7, %6 : vector<1x256xi32>
    %c0_i32_2 = arith.constant 0 : i32
    %9 = arith.cmpi eq, %arg1, %c0_i32_2 : i32
    %10 = arith.extui %9 : i1 to i32
    %c0_i32_3 = arith.constant 0 : i32
    %11 = arith.cmpi ne, %10, %c0_i32_3 : i32
    scf.if %11 {
      %c0 = arith.constant 0 : index
      %c0_5 = arith.constant 0 : index
      %15 = vector.load %arg3[%c0, %c0_5] : memref<256x128xf32, #tpu.memory_space<vmem>>, vector<256x128xf32>
      %c0_6 = arith.constant 0 : index
      %c0_7 = arith.constant 0 : index
      %16 = vector.load %arg4[%c0_6, %c0_7] : memref<128x256xf32, #tpu.memory_space<vmem>>, vector<128x256xf32>
      %cst = arith.constant dense<0.000000e+00> : vector<256x256xf32>
      %17 = tpu.matmul %15, %16, %cst {dimension_numbers = #tpu.dot_dimension_numbers<[1], [0], [0], [1], [0, 0, 1, 1], [], []>} : vector<256x128xf32>, vector<128x256xf32>, vector<256x256xf32> -> vector<256x256xf32>
      %18 = arith.index_cast %arg2 : i32 to index
      %c0_8 = arith.constant 0 : index
      %c0_9 = arith.constant 0 : index
      %19 = vector.load %arg7[%18, %c0_8, %c0_9] : memref<1x256x256xf32, #tpu.memory_space<vmem>>, vector<1x256x256xf32>
      %20 = vector.shape_cast %19 : vector<1x256x256xf32> to vector<256x256xf32>
      %21 = vector.shape_cast %17 : vector<256x256xf32> to vector<1x256x256xf32>
      tpu.vector_store %arg7[%18, %c0_8, %c0_9], %21 {strides = array<i32>} : memref<1x256x256xf32, #tpu.memory_space<vmem>>, vector<1x256x256xf32>,
      %c16_i32 = arith.constant 16 : i32
      %22 = vector.broadcast %c16_i32 : i32 to vector<1x256xi32>
      %23 = arith.cmpi slt, %8, %22 : vector<1x256xi32>
      %cst_10 = arith.constant 0xFF800000 : f32
      %24 = vector.shape_cast %23 : vector<1x256xi1> to vector<1x256xi1>
      %25 = vector.broadcast %24 : vector<1x256xi1> to vector<256x256xi1>
      %26 = vector.broadcast %cst_10 : f32 to vector<256x256xf32>
      %27 = arith.select %25, %17, %26 : vector<256x256xi1>, vector<256x256xf32>
      %c0_11 = arith.constant 0 : index
      %c0_12 = arith.constant 0 : index
      %28 = vector.load %arg8[%c0_11, %c0_12] : memref<256x1xf32, #tpu.memory_space<vmem>>, vector<256x1xf32>
      %cst_13 = arith.constant dense<0xFF800000> : vector<256xf32>
      %29 = vector.multi_reduction <maximumf>, %27, %cst_13 [1] : vector<256x256xf32> to vector<256xf32>
      %30 = vector.shape_cast %29 : vector<256xf32> to vector<256x1xf32>
      %31 = arith.maximumf %28, %30 : vector<256x1xf32>
      %c0_14 = arith.constant 0 : index
      %c0_15 = arith.constant 0 : index
      %32 = vector.load %arg8[%c0_14, %c0_15] : memref<256x1xf32, #tpu.memory_space<vmem>>, vector<256x1xf32>
      tpu.vector_store %arg8[%c0_14, %c0_15], %31 {strides = array<i32>} : memref<256x1xf32, #tpu.memory_space<vmem>>, vector<256x1xf32>,
    } else {
    }
    %c1_i32 = arith.constant 1 : i32
    %12 = arith.cmpi eq, %arg1, %c1_i32 : i32
    %13 = arith.extui %12 : i1 to i32
    %c0_i32_4 = arith.constant 0 : i32
    %14 = arith.cmpi ne, %13, %c0_i32_4 : i32
    scf.if %14 {
      %15 = arith.index_cast %arg2 : i32 to index
      %c0 = arith.constant 0 : index
      %c0_5 = arith.constant 0 : index
      %16 = vector.load %arg7[%15, %c0, %c0_5] : memref<1x256x256xf32, #tpu.memory_space<vmem>>, vector<1x256x256xf32>
      %17 = vector.shape_cast %16 : vector<1x256x256xf32> to vector<256x256xf32>
      %c0_6 = arith.constant 0 : index
      %c0_7 = arith.constant 0 : index
      %18 = vector.load %arg8[%c0_6, %c0_7] : memref<256x1xf32, #tpu.memory_space<vmem>>, vector<256x1xf32>
      %19 = vector.broadcast %18 : vector<256x1xf32> to vector<256x256xf32>
      %20 = arith.subf %17, %19 : vector<256x256xf32>
      %c256_i32_8 = arith.constant 256 : i32
      %21 = arith.muli %arg0, %c256_i32_8 : i32
      %22 = tpu.iota {dimensions = array<i32: 0>} : vector<256x1xi32>
      %23 = vector.broadcast %21 : i32 to vector<256x1xi32>
      %24 = arith.addi %23, %22 : vector<256x1xi32>
      %25 = vector.broadcast %24 : vector<256x1xi32> to vector<256x256xi32>
      %26 = vector.broadcast %8 : vector<1x256xi32> to vector<256x256xi32>
      %27 = arith.cmpi ne, %25, %26 : vector<256x256xi32>
      %c16_i32 = arith.constant 16 : i32
      %28 = vector.broadcast %c16_i32 : i32 to vector<1x256xi32>
      %29 = arith.cmpi slt, %8, %28 : vector<1x256xi32>
      %30 = vector.broadcast %29 : vector<1x256xi1> to vector<256x256xi1>
      %31 = arith.andi %27, %30 : vector<256x256xi1>
      %c8_i32 = arith.constant 8 : i32
      %c0_i32_9 = arith.constant 0 : i32
      %32 = arith.cmpi eq, %c8_i32, %c0_i32_9 : i32
      %c1_i32_10 = arith.constant 1 : i32
      %33 = arith.select %32, %c1_i32_10, %c8_i32 : i32
      %34 = vector.broadcast %33 : i32 to vector<256x1xi32>
      %35 = arith.remsi %24, %34 : vector<256x1xi32>
      %c0_i32_11 = arith.constant 0 : i32
      %36 = vector.broadcast %c0_i32_11 : i32 to vector<256x1xi32>
      %37 = arith.cmpi ne, %35, %36 : vector<256x1xi32>
      %c0_i32_12 = arith.constant 0 : i32
      %38 = vector.broadcast %c0_i32_12 : i32 to vector<256x1xi32>
      %39 = arith.cmpi slt, %35, %38 : vector<256x1xi32>
      %c0_i32_13 = arith.constant 0 : i32
      %40 = arith.cmpi slt, %33, %c0_i32_13 : i32
      %41 = vector.broadcast %40 : i1 to vector<256x1xi1>
      %42 = vector.broadcast %41 : vector<256x1xi1> to vector<256x1xi1>
      %43 = arith.xori %39, %42 : vector<256x1xi1>
      %44 = arith.andi %43, %37 : vector<256x1xi1>
      %45 = vector.broadcast %33 : i32 to vector<256x1xi32>
      %46 = arith.addi %35, %45 : vector<256x1xi32>
      %47 = arith.select %44, %46, %35 : vector<256x1xi1>, vector<256x1xi32>
      %c8_i32_14 = arith.constant 8 : i32
      %c0_i32_15 = arith.constant 0 : i32
      %48 = arith.cmpi eq, %c8_i32_14, %c0_i32_15 : i32
      %c1_i32_16 = arith.constant 1 : i32
      %49 = arith.select %48, %c1_i32_16, %c8_i32_14 : i32
      %50 = vector.broadcast %49 : i32 to vector<1x256xi32>
      %51 = arith.remsi %8, %50 : vector<1x256xi32>
      %c0_i32_17 = arith.constant 0 : i32
      %52 = vector.broadcast %c0_i32_17 : i32 to vector<1x256xi32>
      %53 = arith.cmpi ne, %51, %52 : vector<1x256xi32>
      %c0_i32_18 = arith.constant 0 : i32
      %54 = vector.broadcast %c0_i32_18 : i32 to vector<1x256xi32>
      %55 = arith.cmpi slt, %51, %54 : vector<1x256xi32>
      %c0_i32_19 = arith.constant 0 : i32
      %56 = arith.cmpi slt, %49, %c0_i32_19 : i32
      %57 = vector.broadcast %56 : i1 to vector<1x256xi1>
      %58 = vector.broadcast %57 : vector<1x256xi1> to vector<1x256xi1>
      %59 = arith.xori %55, %58 : vector<1x256xi1>
      %60 = arith.andi %59, %53 : vector<1x256xi1>
      %61 = vector.broadcast %49 : i32 to vector<1x256xi32>
      %62 = arith.addi %51, %61 : vector<1x256xi32>
      %63 = arith.select %60, %62, %51 : vector<1x256xi1>, vector<1x256xi32>
      %64 = vector.broadcast %47 : vector<256x1xi32> to vector<256x256xi32>
      %65 = vector.broadcast %63 : vector<1x256xi32> to vector<256x256xi32>
      %66 = arith.cmpi eq, %64, %65 : vector<256x256xi32>
      %67 = arith.andi %66, %31 : vector<256x256xi1>
      %c0_20 = arith.constant 0 : index
      %c0_21 = arith.constant 0 : index
      %68 = vector.load %arg5[%c0_20, %c0_21] : memref<256x256xf32, #tpu.memory_space<vmem>>, vector<256x256xf32>
      %69 = arith.mulf %20, %68 : vector<256x256xf32>
      %70 = math.exp %69 : vector<256x256xf32>
      %cst = arith.constant 0.000000e+00 : f32
      %71 = vector.broadcast %cst : f32 to vector<256x256xf32>
      %72 = arith.select %31, %70, %71 : vector<256x256xi1>, vector<256x256xf32>
      %c0_22 = arith.constant 0 : index
      %c0_23 = arith.constant 0 : index
      %73 = vector.load %arg9[%c0_22, %c0_23] : memref<256x1xf32, #tpu.memory_space<vmem>>, vector<256x1xf32>
      %cst_24 = arith.constant dense<0.000000e+00> : vector<256xf32>
      %74 = vector.multi_reduction <add>, %72, %cst_24 [1] : vector<256x256xf32> to vector<256xf32>
      %75 = vector.shape_cast %74 : vector<256xf32> to vector<256x1xf32>
      %76 = arith.addf %73, %75 : vector<256x1xf32>
      %c0_25 = arith.constant 0 : index
      %c0_26 = arith.constant 0 : index
      %77 = vector.load %arg9[%c0_25, %c0_26] : memref<256x1xf32, #tpu.memory_space<vmem>>, vector<256x1xf32>
      tpu.vector_store %arg9[%c0_25, %c0_26], %76 {strides = array<i32>} : memref<256x1xf32, #tpu.memory_space<vmem>>, vector<256x1xf32>,
      %c0_27 = arith.constant 0 : index
      %c0_28 = arith.constant 0 : index
      %78 = vector.load %arg10[%c0_27, %c0_28] : memref<256x1xf32, #tpu.memory_space<vmem>>, vector<256x1xf32>
      %cst_29 = arith.constant 0.000000e+00 : f32
      %79 = vector.broadcast %cst_29 : f32 to vector<256x256xf32>
      %80 = arith.select %67, %20, %79 : vector<256x256xi1>, vector<256x256xf32>
      %cst_30 = arith.constant dense<0.000000e+00> : vector<256xf32>
      %81 = vector.multi_reduction <add>, %80, %cst_30 [1] : vector<256x256xf32> to vector<256xf32>
      %82 = vector.shape_cast %81 : vector<256xf32> to vector<256x1xf32>
      %83 = arith.addf %78, %82 : vector<256x1xf32>
      %c0_31 = arith.constant 0 : index
      %c0_32 = arith.constant 0 : index
      %84 = vector.load %arg10[%c0_31, %c0_32] : memref<256x1xf32, #tpu.memory_space<vmem>>, vector<256x1xf32>
      tpu.vector_store %arg10[%c0_31, %c0_32], %83 {strides = array<i32>} : memref<256x1xf32, #tpu.memory_space<vmem>>, vector<256x1xf32>,
      %c0_i32_33 = arith.constant 0 : i32
      %85 = arith.cmpi eq, %arg2, %c0_i32_33 : i32
      %86 = arith.extui %85 : i1 to i32
      %c0_i32_34 = arith.constant 0 : i32
      %87 = arith.cmpi ne, %86, %c0_i32_34 : i32
      scf.if %87 {
        %c0_35 = arith.constant 0 : index
        %c0_36 = arith.constant 0 : index
        %88 = vector.load %arg10[%c0_35, %c0_36] : memref<256x1xf32, #tpu.memory_space<vmem>>, vector<256x1xf32>
        %c0_37 = arith.constant 0 : index
        %c0_38 = arith.constant 0 : index
        %89 = vector.load %arg9[%c0_37, %c0_38] : memref<256x1xf32, #tpu.memory_space<vmem>>, vector<256x1xf32>
        %90 = math.log %89 : vector<256x1xf32>
        %cst_39 = arith.constant 1.000000e+00 : f32
        %91 = vector.broadcast %cst_39 : f32 to vector<256x1xf32>
        %92 = arith.mulf %91, %90 : vector<256x1xf32>
        %93 = arith.subf %88, %92 : vector<256x1xf32>
        %cst_40 = arith.constant 1.000000e+00 : f32
        %94 = vector.broadcast %cst_40 : f32 to vector<256x1xf32>
        %95 = arith.divf %93, %94 : vector<256x1xf32>
        %cst_41 = arith.constant -1.000000e+00 : f32
        %96 = vector.broadcast %cst_41 : f32 to vector<256x1xf32>
        %97 = arith.mulf %96, %95 : vector<256x1xf32>
        %c0_42 = arith.constant 0 : index
        %c0_43 = arith.constant 0 : index
        %98 = vector.load %arg6[%c0_42, %c0_43] : memref<256x1xf32, #tpu.memory_space<vmem>>, vector<256x1xf32>
        tpu.vector_store %arg6[%c0_42, %c0_43], %97 {strides = array<i32>} : memref<256x1xf32, #tpu.memory_space<vmem>>, vector<256x1xf32>,
      } else {
      }
    } else {
    }
    return
  }
  func.func @transform_0(%arg0: i32, %arg1: i32, %arg2: i32) -> (i32, i32) {
    %c0_i32 = arith.constant 0 : i32
    %c0_i32_0 = arith.constant 0 : i32
    return %arg0, %c0_i32 : i32, i32
  }
  func.func @transform_1(%arg0: i32, %arg1: i32, %arg2: i32) -> (i32, i32) {
    %c1_i32 = arith.constant 1 : i32
    %0 = arith.subi %c1_i32, %arg1 : i32
    %1 = arith.muli %arg2, %0 : i32
    %c0_i32 = arith.constant 0 : i32
    %2 = arith.muli %c0_i32, %arg1 : i32
    %3 = arith.addi %1, %2 : i32
    %c0_i32_0 = arith.constant 0 : i32
    %c0_i32_1 = arith.constant 0 : i32
    return %c0_i32_0, %3 : i32, i32
  }
  func.func @transform_2(%arg0: i32, %arg1: i32, %arg2: i32) -> (i32, i32) {
    %0 = arith.muli %arg2, %arg1 : i32
    %c0_i32 = arith.constant 0 : i32
    return %arg0, %0 : i32, i32
  }
  func.func @transform_3(%arg0: i32, %arg1: i32, %arg2: i32) -> (i32, i32) {
    %c0_i32 = arith.constant 0 : i32
    %c0_i32_0 = arith.constant 0 : i32
    return %arg0, %c0_i32 : i32, i32
  }
}

</mosaic_0001>

<llo_original>
// kernel: tpu_custom_call.1
$region0: #{tpu_custom_call.1}
  #allocation0 [shape = 'u32[]', space=smem, size = 0x4, offset = 0x4, fixed_abs, tag = 'smem constant byte address 0x4 - core index']
  #allocation1 [shape = 'u32[144,128]{1,0:T(1,128)}', space=vmem, size = 0x12000, scoped, tag = 'internal scratch']
  #allocation2 [shape = 'f32[1,256,256]{2,1,0:T(8,128)}', space=vmem, size = 0x40000, scoped, tag = 'scratch operand']
  #allocation3 [shape = 'f32[256,1]{1,0:T(8,128)}', space=vmem, size = 0x20000, scoped, tag = 'scratch operand']
  #allocation4 [shape = 'f32[256,1]{1,0:T(8,128)}', space=vmem, size = 0x20000, scoped, tag = 'scratch operand']
  #allocation5 [shape = 'f32[256,1]{1,0:T(8,128)}', space=vmem, size = 0x20000, scoped, tag = 'scratch operand']
  %s0 = inlined_call_operand.hbm [shape: f32[256,128], index: 0, kind: input, shape index: {}]
  %s1 = inlined_call_operand.hbm [shape: f32[128,256], index: 1, kind: input, shape index: {}]
  %s2 = inlined_call_operand.hbm [shape: f32[256,256], index: 2, kind: input, shape index: {}]
  %s3 = inlined_call_operand.vmem [shape: f32[256,1], index: 3, kind: output, shape index: {}]
  %s4 = sld [smem:[#allocation0]]
  $region73: #{tpu_custom_call.1} parent=0
    _
  %s6 = ssub.s32 1, %s4
  %s7 = scalar_select 0, %s6, %s4
  $region1: #{tpu_custom_call.1} parent=0
    #allocation6 [shape = 'u8[131072]{0}', space=vmem, size = 0x20000, scoped, tag = 'input window, operand 0, single buffered']
    #allocation7 [shape = 's32[2]{0}', space=sflag, size = 0x8, scoped, tag = 'scoped memory for tpu_custom_call.1']
    #allocation8 [shape = 'u8[262144]{0}', space=vmem, size = 0x40000, scoped, tag = 'input window, operand 1']
    #allocation9 [shape = 's32[2]{0}', space=sflag, size = 0x8, scoped, tag = 'scoped memory for tpu_custom_call.1']
    #allocation10 [shape = 'u8[524288]{0}', space=vmem, size = 0x80000, scoped, tag = 'input window, operand 2']
    %8 = vsyncpa [#allocation7], 0
    %9 = vsyncpa [#allocation9], 0
    %s10 = scalar_lea.sflag [#allocation9], 1
    %11 = vsyncpa %s10, 0
    loop: start=0, step=1, limit=4
    $region2: #{tpu_custom_call.1} parent=1 // loop_pre_header
      _
    $region3: #{tpu_custom_call.1} parent=1 // loop_header
      %s13 = sphi 0, %s17
      %p14 = scmp.ge.s32.totalorder %s13, 4
      %s20 = sphi 0, %s39
      %s21 = sphi 0, %s35
      %s22 = sphi 0, %s31
      %s23 = sphi 0, %s20
      %s24 = sphi 0, %s21
      %s25 = sphi 0, %s22
      %s26 = sphi 0, %s23
      %s27 = sphi 0, %s24
      %s28 = sphi 0, %s25
      %s42 = sphi 0, %s44
      %s45 = sphi 0, %s42
      %s46 = sphi 0, %s45
      %s62 = sphi 0, %s46
      %s72 = sphi 0, %s74
      %s75 = sphi 0, %s72
      %s76 = sphi 0, %s75
      %s92 = sphi 0, %s76
      %s102 = sphi 0, %s104
      %s105 = sphi 0, %s102
      %s106 = sphi 0, %s105
      %s122 = sphi 0, %s106
      %s128 = sphi 0, %s130
      %s131 = sphi 0, %s128
      %s132 = sphi 0, %s131
      %s148 = sphi 0, %s132
    $region4: #{tpu_custom_call.1} parent=1 // loop_header_branch
      %16 = sbr.rel (%p14) target = $region8
    $region5: #{tpu_custom_call.1} parent=1 // loop_body
      %s18 = ssub.s32 %s13, 1
      %s19 = ssub.s32 %s13, 2
      %s29 = sadd.s32 1, %s22
      %p30 = scmp.ge.s32.totalorder %s29, 1
      %s31 = scalar_select %p30, 0, %s29
      %s32 = sadd.s32 1, %s21
      %s33 = scalar_select %p30, %s32, %s21
      %p34 = scmp.ge.s32.totalorder %s33, 2
      %s35 = scalar_select %p34, 0, %s33
      %s36 = sadd.s32 1, %s20
      %s37 = scalar_select %p34, %s36, %s20
      %p38 = scmp.ge.s32.totalorder %s37, 1
      %s39 = scalar_select %p38, 0, %s37
      %s40 = ssub.s32 %s20, %s39
      %p41 = scmp.eq.s32.totalorder %s40, 0
      %s43 = sadd.s32 %s42, 1
      %s44 = scalar_select %p41, %s42, %s43
      %p47 = pneg %p41
      %p48 = scmp.eq.s32.totalorder %s13, 1
      %p49 = por %p47, %p48
      %p50 = scmp.ne.s32.totalorder %s42, %s45
      %p51 = scmp.eq.s32.totalorder %s13, 0
      %p52 = por %p50, %p51
      %p53 = scmp.ne.s32.totalorder %s42, %s45
      %p54 = scmp.eq.s32.totalorder %s18, 1
      %p55 = por %p53, %p54
      %p56 = scmp.ne.s32.totalorder %s45, %s46
      %p57 = scmp.eq.s32.totalorder %s18, 0
      %p58 = por %p56, %p57
      %p59 = scmp.ne.s32.totalorder %s45, %s46
      %p60 = scmp.eq.s32.totalorder %s19, 1
      %p61 = por %p59, %p60
      %p63 = scmp.ne.s32.totalorder %s46, %s62
      %p64 = scmp.eq.s32.totalorder %s19, 0
      %p65 = por %p63, %p64
      %s66 = ssub.s32 1, %s21
      %s67 = smul.u32 %s22, %s66
      %s68 = ssub.s32 1, %s35
      %s69 = smul.u32 %s31, %s68
      %s70 = ssub.s32 %s67, %s69
      %p71 = scmp.eq.s32.totalorder %s70, 0
      %s73 = sadd.s32 %s72, 1
      %s74 = scalar_select %p71, %s72, %s73
      %p77 = pneg %p71
      %p78 = scmp.eq.s32.totalorder %s13, 1
      %p79 = por %p77, %p78
      %p80 = scmp.ne.s32.totalorder %s72, %s75
      %p81 = scmp.eq.s32.totalorder %s13, 0
      %p82 = por %p80, %p81
      %p83 = scmp.ne.s32.totalorder %s72, %s75
      %p84 = scmp.eq.s32.totalorder %s18, 1
      %p85 = por %p83, %p84
      %p86 = scmp.ne.s32.totalorder %s75, %s76
      %p87 = scmp.eq.s32.totalorder %s18, 0
      %p88 = por %p86, %p87
      %p89 = scmp.ne.s32.totalorder %s75, %s76
      %p90 = scmp.eq.s32.totalorder %s19, 1
      %p91 = por %p89, %p90
      %p93 = scmp.ne.s32.totalorder %s76, %s92
      %p94 = scmp.eq.s32.totalorder %s19, 0
      %p95 = por %p93, %p94
      %s96 = smul.u32 %s22, %s21
      %s97 = smul.u32 %s31, %s35
      %s98 = ssub.s32 %s20, %s39
      %s99 = ssub.s32 %s96, %s97
      %s100 = sor.u32 %s98, %s99
      %p101 = scmp.eq.s32.totalorder %s100, 0
      %s103 = sadd.s32 %s102, 1
      %s104 = scalar_select %p101, %s102, %s103
      %p107 = pneg %p101
      %p108 = scmp.eq.s32.totalorder %s13, 1
      %p109 = por %p107, %p108
      %p110 = scmp.ne.s32.totalorder %s102, %s105
      %p111 = scmp.eq.s32.totalorder %s13, 0
      %p112 = por %p110, %p111
      %p113 = scmp.ne.s32.totalorder %s102, %s105
      %p114 = scmp.eq.s32.totalorder %s18, 1
      %p115 = por %p113, %p114
      %p116 = scmp.ne.s32.totalorder %s105, %s106
      %p117 = scmp.eq.s32.totalorder %s18, 0
      %p118 = por %p116, %p117
      %p119 = scmp.ne.s32.totalorder %s105, %s106
      %p120 = scmp.eq.s32.totalorder %s19, 1
      %p121 = por %p119, %p120
      %p123 = scmp.ne.s32.totalorder %s106, %s122
      %p124 = scmp.eq.s32.totalorder %s19, 0
      %p125 = por %p123, %p124
      %s126 = ssub.s32 %s20, %s39
      %p127 = scmp.eq.s32.totalorder %s126, 0
      %s129 = sadd.s32 %s128, 1
      %s130 = scalar_select %p127, %s128, %s129
      %p133 = pneg %p127
      %p134 = scmp.eq.s32.totalorder %s13, 1
      %p135 = por %p133, %p134
      %p136 = scmp.ne.s32.totalorder %s128, %s131
      %p137 = scmp.eq.s32.totalorder %s13, 0
      %p138 = por %p136, %p137
      %p139 = scmp.ne.s32.totalorder %s128, %s131
      %p140 = scmp.eq.s32.totalorder %s18, 1
      %p141 = por %p139, %p140
      %p142 = scmp.ne.s32.totalorder %s131, %s132
      %p143 = scmp.eq.s32.totalorder %s18, 0
      %p144 = por %p142, %p143
      %p145 = scmp.ne.s32.totalorder %s131, %s132
      %p146 = scmp.eq.s32.totalorder %s19, 1
      %p147 = por %p145, %p146
      %p149 = scmp.ne.s32.totalorder %s132, %s148
      %p150 = scmp.eq.s32.totalorder %s19, 0
      %p151 = por %p149, %p150
      %p152 = scmp.le.s32.totalorder 1, %s13
      %p153 = scmp.lt.s32.totalorder %s13, 3
      %p154 = pnand %p152, %p153
      %p155 = pneg %p154
      // Predicated region
      $region9: #{tpu_custom_call.1} parent=5 // pred_check
        _
      $region10: #{tpu_custom_call.1} parent=5 // pred_check_branch
        %157 = sbr.rel (%p154) target = $region12
      $region11: #{tpu_custom_call.1} parent=5 // pred_region
        %s158 = ssub.s32 %s13, 1
        // Predicated region
        $region13: #{tpu_custom_call.1} parent=11 // pred_check
          %p159 = pneg %p58
        $region14: #{tpu_custom_call.1} parent=11 // pred_check_branch
          %161 = sbr.rel (%p159) target = $region16
        $region15: #{tpu_custom_call.1} parent=11 // pred_region
          %s162 = smul.u32 32, %s23
          %s164 = ssub.s32 4096, 4096
          %165 = vsyncadd [#allocation7], %s164
          %s166 = smul.addr %s162, 128
          %s167 = scalar_lea.hbm %s0, %s166
          %s168 = sshll.u32 [#allocation6], 4
          %s169 = int_to_ptr.vmem [resolvable:$true] %s168
          %174 = dma.hbm_to_vmem [thread:$0]  %s167, 4096, %s169, [#allocation7], 128, 128, 8
        $region16: #{tpu_custom_call.1} parent=11 // pred_fallthru
          _
      $region12: #{tpu_custom_call.1} parent=5 // pred_fallthru
        _
      %p175 = scmp.lt.s32.totalorder %s13, 2
      // Predicated region
      $region17: #{tpu_custom_call.1} parent=5 // pred_check
        %p176 = pneg %p175
      $region18: #{tpu_custom_call.1} parent=5 // pred_check_branch
        %178 = sbr.rel (%p176) target = $region20
      $region19: #{tpu_custom_call.1} parent=5 // pred_region
        // Predicated region
        $region21: #{tpu_custom_call.1} parent=19 // pred_check
          %p179 = pneg %p82
        $region22: #{tpu_custom_call.1} parent=19 // pred_check_branch
          %181 = sbr.rel (%p179) target = $region24
        $region23: #{tpu_custom_call.1} parent=19 // pred_region
          %s182 = sand.u32 %s13, 1
          %s183 = scalar_lea.sflag [#allocation9], %s182
          %s184 = sand.u32 %s72, 1
          %s185 = smul.addr %s184, 256
          %s186 = scalar_lea.vmem [#allocation8], %s185
          %s187 = ssub.s32 1, %s21
          %s188 = smul.u32 %s22, %s187
          %s189 = smul.u32 2, %s188
          %s191 = ssub.s32 4096, 4096
          %192 = vsyncadd %s183, %s191
          %s193 = smul.addr %s189, 128
          %s194 = scalar_lea.hbm %s1, %s193
          %s195 = sshll.u32 %s186, 4
          %s196 = int_to_ptr.vmem [resolvable:$true] %s195
          %201 = dma.hbm_to_vmem [thread:$0]  %s194, 4096, %s196, %s183, 256, 256, 16
        $region24: #{tpu_custom_call.1} parent=19 // pred_fallthru
          _
        // Predicated region
        $region25: #{tpu_custom_call.1} parent=19 // pred_check
          %p202 = pneg %p112
        $region26: #{tpu_custom_call.1} parent=19 // pred_check_branch
          %204 = sbr.rel (%p202) target = $region28
        $region27: #{tpu_custom_call.1} parent=19 // pred_region
          %s205 = sand.u32 %s13, 1
          %s206 = scalar_lea.sflag [#allocation9], %s205
          %s207 = sand.u32 %s102, 1
          %s208 = smul.addr %s207, 512
          %s209 = scalar_lea.vmem [#allocation10], %s208
          %s210 = smul.u32 %s22, %s21
          %s211 = smul.u32 32, %s20
          %s212 = smul.u32 2, %s210
          %s214 = ssub.s32 8192, 8192
          %215 = vsyncadd %s206, %s214
          %s216 = smul.addr %s211, 2
          %s217 = sadd.s32 %s212, %s216
          %s218 = smul.addr %s217, 128
          %s219 = scalar_lea.hbm %s2, %s218
          %s220 = sshll.u32 %s209, 4
          %s221 = int_to_ptr.vmem [resolvable:$true] %s220
          %226 = dma.hbm_to_vmem [thread:$0]  %s219, 8192, %s221, %s206, 256, 256, 16
        $region28: #{tpu_custom_call.1} parent=19 // pred_fallthru
          _
      $region20: #{tpu_custom_call.1} parent=5 // pred_fallthru
        _
      %p227 = scmp.le.s32.totalorder 1, %s13
      %p228 = scmp.lt.s32.totalorder %s13, 3
      %p229 = pnand %p227, %p228
      %p230 = pneg %p229
      // Predicated region
      $region29: #{tpu_custom_call.1} parent=5 // pred_check
        _
      $region30: #{tpu_custom_call.1} parent=5 // pred_check_branch
        %232 = sbr.rel (%p229) target = $region32
      $region31: #{tpu_custom_call.1} parent=5 // pred_region
        %s233 = ssub.s32 %s13, 1
        // Predicated region
        $region33: #{tpu_custom_call.1} parent=31 // pred_check
          %p234 = pneg %p58
        $region34: #{tpu_custom_call.1} parent=31 // pred_check_branch
          %236 = sbr.rel (%p234) target = $region36
        $region35: #{tpu_custom_call.1} parent=31 // pred_region
          %237 = dma.done [#allocation7], 4096
        $region36: #{tpu_custom_call.1} parent=31 // pred_fallthru
          _
        %s238 = sand.u32 %s18, 1
        %s239 = scalar_lea.sflag [#allocation9], %s238
        %s240 = sand.u32 %s75, 1
        %s241 = smul.addr %s240, 256
        %s242 = scalar_lea.vmem [#allocation8], %s241
        // Predicated region
        $region37: #{tpu_custom_call.1} parent=31 // pred_check
          %p243 = pneg %p88
        $region38: #{tpu_custom_call.1} parent=31 // pred_check_branch
          %245 = sbr.rel (%p243) target = $region40
        $region39: #{tpu_custom_call.1} parent=31 // pred_region
          %246 = dma.done %s239, 4096
        $region40: #{tpu_custom_call.1} parent=31 // pred_fallthru
          _
        %s247 = sand.u32 %s18, 1
        %s248 = scalar_lea.sflag [#allocation9], %s247
        %s249 = sand.u32 %s105, 1
        %s250 = smul.addr %s249, 512
        %s251 = scalar_lea.vmem [#allocation10], %s250
        // Predicated region
        $region41: #{tpu_custom_call.1} parent=31 // pred_check
          %p252 = pneg %p118
        $region42: #{tpu_custom_call.1} parent=31 // pred_check_branch
          %254 = sbr.rel (%p252) target = $region44
        $region43: #{tpu_custom_call.1} parent=31 // pred_region
          %255 = dma.done %s248, 8192
        $region44: #{tpu_custom_call.1} parent=31 // pred_fallthru
          _
        %p256 = pneg %p58
        %p257 = pneg %p55
        %s258 = sand.u32 %s18, 1
        %s259 = scalar_lea.sflag [#allocation9], %s258
        %s260 = sand.u32 %s75, 1
        %s261 = smul.addr %s260, 256
        %s262 = scalar_lea.vmem [#allocation8], %s261
        %p263 = pneg %p88
        %p264 = pneg %p85
        %s265 = sand.u32 %s18, 1
        %s266 = scalar_lea.sflag [#allocation9], %s265
        %s267 = sand.u32 %s105, 1
        %s268 = smul.addr %s267, 512
        %s269 = scalar_lea.vmem [#allocation10], %s268
        %p270 = pneg %p118
        %p271 = pneg %p115
        %p272 = pneg %p144
        %p273 = pneg %p141
        %s274 = smul.u32 32, %s23
        %p275 = scmp.lt.s32.totalorder %s274, 31
        %s276 = scalar_select %p275, %s274, 31
        %s277 = smul.addr %s276, 8
        %s278 = scalar_lea.vmem %s3, %s277
        %s279 = smul.u32 32, %s23
        %s280 = ssub.s32 1, %s24
        %s281 = smul.u32 %s25, %s280
        %s282 = smul.u32 2, %s281
        %s283 = smul.u32 %s25, %s24
        %s284 = smul.u32 32, %s23
        %s285 = smul.u32 2, %s283
        %s286 = smul.u32 32, %s23
        %p287 = scmp.lt.s32.totalorder %s286, 31
        %s288 = scalar_select %p287, %s286, 31
        %s289 = smul.addr %s288, 8
        %s290 = scalar_lea.vmem %s3, %s289
        %s291 = smul.u32 32, %s23
        %p292 = scmp.eq.s32.totalorder %s24, 0
        %p293 = scmp.eq.s32.totalorder %s25, 0
        %p294 = pnand %p292, %p293
        %p295 = pneg %p294
        // Predicated region
        $region45: #{tpu_custom_call.1} parent=31 // pred_check
          _
        $region46: #{tpu_custom_call.1} parent=31 // pred_check_branch
          %297 = sbr.rel (%p294) target = $region48
        $region47: #{tpu_custom_call.1} parent=31 // pred_region
          %vm298 = vcmask 7168
          %299 = vst.msk [vmem:[#allocation3] sm:$0xff] %vm298, -inf
          %300 = vst.msk [vmem:[#allocation3 + $0x8] sm:$0xff] %vm298, -inf
          %301 = vst.msk [vmem:[#allocation3 + $0x10] sm:$0xff] %vm298, -inf
          %302 = vst.msk [vmem:[#allocation3 + $0x18] sm:$0xff] %vm298, -inf
          %303 = vst.msk [vmem:[#allocation3 + $0x20] sm:$0xff] %vm298, -inf
          %304 = vst.msk [vmem:[#allocation3 + $0x28] sm:$0xff] %vm298, -inf
          %305 = vst.msk [vmem:[#allocation3 + $0x30] sm:$0xff] %vm298, -inf
          %306 = vst.msk [vmem:[#allocation3 + $0x38] sm:$0xff] %vm298, -inf
          %307 = vst.msk [vmem:[#allocation3 + $0x40] sm:$0xff] %vm298, -inf
          %308 = vst.msk [vmem:[#allocation3 + $0x48] sm:$0xff] %vm298, -inf
          %309 = vst.msk [vmem:[#allocation3 + $0x50] sm:$0xff] %vm298, -inf
          %310 = vst.msk [vmem:[#allocation3 + $0x58] sm:$0xff] %vm298, -inf
          %311 = vst.msk [vmem:[#allocation3 + $0x60] sm:$0xff] %vm298, -inf
          %312 = vst.msk [vmem:[#allocation3 + $0x68] sm:$0xff] %vm298, -inf
          %313 = vst.msk [vmem:[#allocation3 + $0x70] sm:$0xff] %vm298, -inf
          %314 = vst.msk [vmem:[#allocation3 + $0x78] sm:$0xff] %vm298, -inf
          %315 = vst.msk [vmem:[#allocation3 + $0x80] sm:$0xff] %vm298, -inf
          %316 = vst.msk [vmem:[#allocation3 + $0x88] sm:$0xff] %vm298, -inf
          %317 = vst.msk [vmem:[#allocation3 + $0x90] sm:$0xff] %vm298, -inf
          %318 = vst.msk [vmem:[#allocation3 + $0x98] sm:$0xff] %vm298, -inf
          %319 = vst.msk [vmem:[#allocation3 + $0xa0] sm:$0xff] %vm298, -inf
          %320 = vst.msk [vmem:[#allocation3 + $0xa8] sm:$0xff] %vm298, -inf
          %321 = vst.msk [vmem:[#allocation3 + $0xb0] sm:$0xff] %vm298, -inf
          %322 = vst.msk [vmem:[#allocation3 + $0xb8] sm:$0xff] %vm298, -inf
          %323 = vst.msk [vmem:[#allocation3 + $0xc0] sm:$0xff] %vm298, -inf
          %324 = vst.msk [vmem:[#allocation3 + $0xc8] sm:$0xff] %vm298, -inf
          %325 = vst.msk [vmem:[#allocation3 + $0xd0] sm:$0xff] %vm298, -inf
          %326 = vst.msk [vmem:[#allocation3 + $0xd8] sm:$0xff] %vm298, -inf
          %327 = vst.msk [vmem:[#allocation3 + $0xe0] sm:$0xff] %vm298, -inf
          %328 = vst.msk [vmem:[#allocation3 + $0xe8] sm:$0xff] %vm298, -inf
          %329 = vst.msk [vmem:[#allocation3 + $0xf0] sm:$0xff] %vm298, -inf
          %330 = vst.msk [vmem:[#allocation3 + $0xf8] sm:$0xff] %vm298, -inf
          %331 = vst.msk [vmem:[#allocation4] sm:$0xff] %vm298, 0.0
          %332 = vst.msk [vmem:[#allocation4 + $0x8] sm:$0xff] %vm298, 0.0
          %333 = vst.msk [vmem:[#allocation4 + $0x10] sm:$0xff] %vm298, 0.0
          %334 = vst.msk [vmem:[#allocation4 + $0x18] sm:$0xff] %vm298, 0.0
          %335 = vst.msk [vmem:[#allocation4 + $0x20] sm:$0xff] %vm298, 0.0
          %336 = vst.msk [vmem:[#allocation4 + $0x28] sm:$0xff] %vm298, 0.0
          %337 = vst.msk [vmem:[#allocation4 + $0x30] sm:$0xff] %vm298, 0.0
          %338 = vst.msk [vmem:[#allocation4 + $0x38] sm:$0xff] %vm298, 0.0
          %339 = vst.msk [vmem:[#allocation4 + $0x40] sm:$0xff] %vm298, 0.0
          %340 = vst.msk [vmem:[#allocation4 + $0x48] sm:$0xff] %vm298, 0.0
          %341 = vst.msk [vmem:[#allocation4 + $0x50] sm:$0xff] %vm298, 0.0
          %342 = vst.msk [vmem:[#allocation4 + $0x58] sm:$0xff] %vm298, 0.0
          %343 = vst.msk [vmem:[#allocation4 + $0x60] sm:$0xff] %vm298, 0.0
          %344 = vst.msk [vmem:[#allocation4 + $0x68] sm:$0xff] %vm298, 0.0
          %345 = vst.msk [vmem:[#allocation4 + $0x70] sm:$0xff] %vm298, 0.0
          %346 = vst.msk [vmem:[#allocation4 + $0x78] sm:$0xff] %vm298, 0.0
          %347 = vst.msk [vmem:[#allocation4 + $0x80] sm:$0xff] %vm298, 0.0
          %348 = vst.msk [vmem:[#allocation4 + $0x88] sm:$0xff] %vm298, 0.0
          %349 = vst.msk [vmem:[#allocation4 + $0x90] sm:$0xff] %vm298, 0.0
          %350 = vst.msk [vmem:[#allocation4 + $0x98] sm:$0xff] %vm298, 0.0
          %351 = vst.msk [vmem:[#allocation4 + $0xa0] sm:$0xff] %vm298, 0.0
          %352 = vst.msk [vmem:[#allocation4 + $0xa8] sm:$0xff] %vm298, 0.0
          %353 = vst.msk [vmem:[#allocation4 + $0xb0] sm:$0xff] %vm298, 0.0
          %354 = vst.msk [vmem:[#allocation4 + $0xb8] sm:$0xff] %vm298, 0.0
          %355 = vst.msk [vmem:[#allocation4 + $0xc0] sm:$0xff] %vm298, 0.0
          %356 = vst.msk [vmem:[#allocation4 + $0xc8] sm:$0xff] %vm298, 0.0
          %357 = vst.msk [vmem:[#allocation4 + $0xd0] sm:$0xff] %vm298, 0.0
          %358 = vst.msk [vmem:[#allocation4 + $0xd8] sm:$0xff] %vm298, 0.0
          %359 = vst.msk [vmem:[#allocation4 + $0xe0] sm:$0xff] %vm298, 0.0
          %360 = vst.msk [vmem:[#allocation4 + $0xe8] sm:$0xff] %vm298, 0.0
          %361 = vst.msk [vmem:[#allocation4 + $0xf0] sm:$0xff] %vm298, 0.0
          %362 = vst.msk [vmem:[#allocation4 + $0xf8] sm:$0xff] %vm298, 0.0
          %363 = vst.msk [vmem:[#allocation5] sm:$0xff] %vm298, 0.0
          %364 = vst.msk [vmem:[#allocation5 + $0x8] sm:$0xff] %vm298, 0.0
          %365 = vst.msk [vmem:[#allocation5 + $0x10] sm:$0xff] %vm298, 0.0
          %366 = vst.msk [vmem:[#allocation5 + $0x18] sm:$0xff] %vm298, 0.0
          %367 = vst.msk [vmem:[#allocation5 + $0x20] sm:$0xff] %vm298, 0.0
          %368 = vst.msk [vmem:[#allocation5 + $0x28] sm:$0xff] %vm298, 0.0
          %369 = vst.msk [vmem:[#allocation5 + $0x30] sm:$0xff] %vm298, 0.0
          %370 = vst.msk [vmem:[#allocation5 + $0x38] sm:$0xff] %vm298, 0.0
          %371 = vst.msk [vmem:[#allocation5 + $0x40] sm:$0xff] %vm298, 0.0
          %372 = vst.msk [vmem:[#allocation5 + $0x48] sm:$0xff] %vm298, 0.0
          %373 = vst.msk [vmem:[#allocation5 + $0x50] sm:$0xff] %vm298, 0.0
          %374 = vst.msk [vmem:[#allocation5 + $0x58] sm:$0xff] %vm298, 0.0
          %375 = vst.msk [vmem:[#allocation5 + $0x60] sm:$0xff] %vm298, 0.0
          %376 = vst.msk [vmem:[#allocation5 + $0x68] sm:$0xff] %vm298, 0.0
          %377 = vst.msk [vmem:[#allocation5 + $0x70] sm:$0xff] %vm298, 0.0
          %378 = vst.msk [vmem:[#allocation5 + $0x78] sm:$0xff] %vm298, 0.0
          %379 = vst.msk [vmem:[#allocation5 + $0x80] sm:$0xff] %vm298, 0.0
          %380 = vst.msk [vmem:[#allocation5 + $0x88] sm:$0xff] %vm298, 0.0
          %381 = vst.msk [vmem:[#allocation5 + $0x90] sm:$0xff] %vm298, 0.0
          %382 = vst.msk [vmem:[#allocation5 + $0x98] sm:$0xff] %vm298, 0.0
          %383 = vst.msk [vmem:[#allocation5 + $0xa0] sm:$0xff] %vm298, 0.0
          %384 = vst.msk [vmem:[#allocation5 + $0xa8] sm:$0xff] %vm298, 0.0
          %385 = vst.msk [vmem:[#allocation5 + $0xb0] sm:$0xff] %vm298, 0.0
          %386 = vst.msk [vmem:[#allocation5 + $0xb8] sm:$0xff] %vm298, 0.0
          %387 = vst.msk [vmem:[#allocation5 + $0xc0] sm:$0xff] %vm298, 0.0
          %388 = vst.msk [vmem:[#allocation5 + $0xc8] sm:$0xff] %vm298, 0.0
          %389 = vst.msk [vmem:[#allocation5 + $0xd0] sm:$0xff] %vm298, 0.0
          %390 = vst.msk [vmem:[#allocation5 + $0xd8] sm:$0xff] %vm298, 0.0
          %391 = vst.msk [vmem:[#allocation5 + $0xe0] sm:$0xff] %vm298, 0.0
          %392 = vst.msk [vmem:[#allocation5 + $0xe8] sm:$0xff] %vm298, 0.0
          %393 = vst.msk [vmem:[#allocation5 + $0xf0] sm:$0xff] %vm298, 0.0
          %394 = vst.msk [vmem:[#allocation5 + $0xf8] sm:$0xff] %vm298, 0.0
        $region48: #{tpu_custom_call.1} parent=31 // pred_fallthru
          _
        %s395 = smul.u32 %s25, 256
        %v396 = vlaneseq
        %v397 = vand.u32 %v396, 127
        %v398 = vadd.s32 %v397, 128
        %v399 = vstv %s395
        %v400 = vadd.s32 %v399, %v397
        %v401 = vadd.s32 %v399, %v398
        // Predicated region
        $region49: #{tpu_custom_call.1} parent=31 // pred_check
          %p402 = pneg %p292
        $region50: #{tpu_custom_call.1} parent=31 // pred_check_branch
          %404 = sbr.rel (%p402) target = $region52
        $region51: #{tpu_custom_call.1} parent=31 // pred_region
          %v405 = vld [vmem:[#allocation6] sm:$0xff]
          %v406 = vld [vmem:[#allocation6 + $0x8] sm:$0xff]
          %v407 = vld [vmem:[#allocation6 + $0x10] sm:$0xff]
          %v408 = vld [vmem:[#allocation6 + $0x18] sm:$0xff]
          %v409 = vld [vmem:[#allocation6 + $0x20] sm:$0xff]
          %v410 = vld [vmem:[#allocation6 + $0x28] sm:$0xff]
          %v411 = vld [vmem:[#allocation6 + $0x30] sm:$0xff]
          %v412 = vld [vmem:[#allocation6 + $0x38] sm:$0xff]
          %v413 = vld [vmem:[#allocation6 + $0x40] sm:$0xff]
          %v414 = vld [vmem:[#allocation6 + $0x48] sm:$0xff]
          %v415 = vld [vmem:[#allocation6 + $0x50] sm:$0xff]
          %v416 = vld [vmem:[#allocation6 + $0x58] sm:$0xff]
          %v417 = vld [vmem:[#allocation6 + $0x60] sm:$0xff]
          %v418 = vld [vmem:[#allocation6 + $0x68] sm:$0xff]
          %v419 = vld [vmem:[#allocation6 + $0x70] sm:$0xff]
          %v420 = vld [vmem:[#allocation6 + $0x78] sm:$0xff]
          %v421 = vld [vmem:[#allocation6 + $0x80] sm:$0xff]
          %v422 = vld [vmem:[#allocation6 + $0x88] sm:$0xff]
          %v423 = vld [vmem:[#allocation6 + $0x90] sm:$0xff]
          %v424 = vld [vmem:[#allocation6 + $0x98] sm:$0xff]
          %v425 = vld [vmem:[#allocation6 + $0xa0] sm:$0xff]
          %v426 = vld [vmem:[#allocation6 + $0xa8] sm:$0xff]
          %v427 = vld [vmem:[#allocation6 + $0xb0] sm:$0xff]
          %v428 = vld [vmem:[#allocation6 + $0xb8] sm:$0xff]
          %v429 = vld [vmem:[#allocation6 + $0xc0] sm:$0xff]
          %v430 = vld [vmem:[#allocation6 + $0xc8] sm:$0xff]
          %v431 = vld [vmem:[#allocation6 + $0xd0] sm:$0xff]
          %v432 = vld [vmem:[#allocation6 + $0xd8] sm:$0xff]
          %v433 = vld [vmem:[#allocation6 + $0xe0] sm:$0xff]
          %v434 = vld [vmem:[#allocation6 + $0xe8] sm:$0xff]
          %v435 = vld [vmem:[#allocation6 + $0xf0] sm:$0xff]
          %v436 = vld [vmem:[#allocation6 + $0xf8] sm:$0xff]
          %v437 = vld [vmem:[%s242] sm:$0xff]
          %v438 = vld [vmem:[%s242 + $0x8] sm:$0xff]
          %v439 = vld [vmem:[%s242 + $0x10] sm:$0xff]
          %v440 = vld [vmem:[%s242 + $0x18] sm:$0xff]
          %v441 = vld [vmem:[%s242 + $0x20] sm:$0xff]
          %v442 = vld [vmem:[%s242 + $0x28] sm:$0xff]
          %v443 = vld [vmem:[%s242 + $0x30] sm:$0xff]
          %v444 = vld [vmem:[%s242 + $0x38] sm:$0xff]
          %v445 = vld [vmem:[%s242 + $0x40] sm:$0xff]
          %v446 = vld [vmem:[%s242 + $0x48] sm:$0xff]
          %v447 = vld [vmem:[%s242 + $0x50] sm:$0xff]
          %v448 = vld [vmem:[%s242 + $0x58] sm:$0xff]
          %v449 = vld [vmem:[%s242 + $0x60] sm:$0xff]
          %v450 = vld [vmem:[%s242 + $0x68] sm:$0xff]
          %v451 = vld [vmem:[%s242 + $0x70] sm:$0xff]
          %v452 = vld [vmem:[%s242 + $0x78] sm:$0xff]
          %v453 = vld [vmem:[%s242 + $0x80] sm:$0xff]
          %v454 = vld [vmem:[%s242 + $0x88] sm:$0xff]
          %v455 = vld [vmem:[%s242 + $0x90] sm:$0xff]
          %v456 = vld [vmem:[%s242 + $0x98] sm:$0xff]
          %v457 = vld [vmem:[%s242 + $0xa0] sm:$0xff]
          %v458 = vld [vmem:[%s242 + $0xa8] sm:$0xff]
          %v459 = vld [vmem:[%s242 + $0xb0] sm:$0xff]
          %v460 = vld [vmem:[%s242 + $0xb8] sm:$0xff]
          %v461 = vld [vmem:[%s242 + $0xc0] sm:$0xff]
          %v462 = vld [vmem:[%s242 + $0xc8] sm:$0xff]
          %v463 = vld [vmem:[%s242 + $0xd0] sm:$0xff]
          %v464 = vld [vmem:[%s242 + $0xd8] sm:$0xff]
          %v465 = vld [vmem:[%s242 + $0xe0] sm:$0xff]
          %v466 = vld [vmem:[%s242 + $0xe8] sm:$0xff]
          %v467 = vld [vmem:[%s242 + $0xf0] sm:$0xff]
          %v468 = vld [vmem:[%s242 + $0xf8] sm:$0xff]
          %469 = vmatprep.subr.mxu0 %v468
          %470 = vmatpush1.msra.mxu0 %v467
          %471 = vmatprep.subr.mxu0 %v466
          %472 = vmatpush1.msra.mxu0 %v465
          %473 = vmatprep.subr.mxu0 %v464
          %474 = vmatpush1.msra.mxu0 %v463
          %475 = vmatprep.subr.mxu0 %v462
          %476 = vmatpush1.msra.mxu0 %v461
          %477 = vmatprep.subr.mxu0 %v460
          %478 = vmatpush1.msra.mxu0 %v459
          %479 = vmatprep.subr.mxu0 %v458
          %480 = vmatpush1.msra.mxu0 %v457
          %481 = vmatprep.subr.mxu0 %v456
          %482 = vmatpush1.msra.mxu0 %v455
          %483 = vmatprep.subr.mxu0 %v454
          %484 = vmatpush1.msra.mxu0 %v453
          %485 = vmatprep.subr.mxu0 %v452
          %486 = vmatpush1.msra.mxu0 %v451
          %487 = vmatprep.subr.mxu0 %v450
          %488 = vmatpush1.msra.mxu0 %v449
          %489 = vmatprep.subr.mxu0 %v448
          %490 = vmatpush1.msra.mxu0 %v447
          %491 = vmatprep.subr.mxu0 %v446
          %492 = vmatpush1.msra.mxu0 %v445
          %493 = vmatprep.subr.mxu0 %v444
          %494 = vmatpush1.msra.mxu0 %v443
          %495 = vmatprep.subr.mxu0 %v442
          %496 = vmatpush1.msra.mxu0 %v441
          %497 = vmatprep.subr.mxu0 %v440
          %498 = vmatpush1.msra.mxu0 %v439
          %499 = vmatprep.subr.mxu0 %v438
          %500 = vmatpush1.msra.mxu0 %v437
          %501 = vmatprep.subr.mxu0 0.0
          %502 = vmatpush2.msra.mxu0 0.0
          %503 = vmatprep.subr.mxu0 0.0
          %504 = vmatpush2.msra.mxu0 0.0
          %505 = vmatprep.subr.mxu0 0.0
          %506 = vmatpush2.msra.mxu0 0.0
          %507 = vmatprep.subr.mxu0 0.0
          %508 = vmatpush2.msra.mxu0 0.0
          %509 = vmatprep.subr.mxu0 0.0
          %510 = vmatpush2.msra.mxu0 0.0
          %511 = vmatprep.subr.mxu0 0.0
          %512 = vmatpush2.msra.mxu0 0.0
          %513 = vmatprep.subr.mxu0 0.0
          %514 = vmatpush2.msra.mxu0 0.0
          %515 = vmatprep.subr.mxu0 0.0
          %516 = vmatpush2.msra.mxu0 0.0
          %517 = vmatprep.subr.mxu0 0.0
          %518 = vmatpush2.msra.mxu0 0.0
          %519 = vmatprep.subr.mxu0 0.0
          %520 = vmatpush2.msra.mxu0 0.0
          %521 = vmatprep.subr.mxu0 0.0
          %522 = vmatpush2.msra.mxu0 0.0
          %523 = vmatprep.subr.mxu0 0.0
          %524 = vmatpush2.msra.mxu0 0.0
          %525 = vmatprep.subr.mxu0 0.0
          %526 = vmatpush2.msra.mxu0 0.0
          %527 = vmatprep.subr.mxu0 0.0
          %528 = vmatpush2.msra.mxu0 0.0
          %529 = vmatprep.subr.mxu0 0.0
          %530 = vmatpush2.msra.mxu0 0.0
          %531 = vmatprep.subr.mxu0 0.0
          %532 = vmatpush2.msra.mxu0 0.0
          %533 = vmatprep.mubr.f32.mxu0 0.0
          %534 = vmatmul.mubr.f32.gmra.mxu0 %v405
          %v535 = vpop.f32.mrf.mxu0
          %v536 = vadd.f32 0.0, %v535
          %v537 = vpop.f32.mrf.mxu0
          %v538 = vadd.f32 0.0, %v537
          %539 = vmatprep.mubr.f32.mxu0 0.0
          %540 = vmatmul.mubr.f32.gmra.mxu0 %v406
          %v541 = vpop.f32.mrf.mxu0
          %v542 = vadd.f32 0.0, %v541
          %v543 = vpop.f32.mrf.mxu0
          %v544 = vadd.f32 0.0, %v543
          %545 = vmatprep.mubr.f32.mxu0 0.0
          %546 = vmatmul.mubr.f32.gmra.mxu0 %v407
          %v547 = vpop.f32.mrf.mxu0
          %v548 = vadd.f32 0.0, %v547
          %v549 = vpop.f32.mrf.mxu0
          %v550 = vadd.f32 0.0, %v549
          %551 = vmatprep.mubr.f32.mxu0 0.0
          %552 = vmatmul.mubr.f32.gmra.mxu0 %v408
          %v553 = vpop.f32.mrf.mxu0
          %v554 = vadd.f32 0.0, %v553
          %v555 = vpop.f32.mrf.mxu0
          %v556 = vadd.f32 0.0, %v555
          %557 = vmatprep.mubr.f32.mxu0 0.0
          %558 = vmatmul.mubr.f32.gmra.mxu0 %v409
          %v559 = vpop.f32.mrf.mxu0
          %v560 = vadd.f32 0.0, %v559
          %v561 = vpop.f32.mrf.mxu0
          %v562 = vadd.f32 0.0, %v561
          %563 = vmatprep.mubr.f32.mxu0 0.0
          %564 = vmatmul.mubr.f32.gmra.mxu0 %v410
          %v565 = vpop.f32.mrf.mxu0
          %v566 = vadd.f32 0.0, %v565
          %v567 = vpop.f32.mrf.mxu0
          %v568 = vadd.f32 0.0, %v567
          %569 = vmatprep.mubr.f32.mxu0 0.0
          %570 = vmatmul.mubr.f32.gmra.mxu0 %v411
          %v571 = vpop.f32.mrf.mxu0
          %v572 = vadd.f32 0.0, %v571
          %v573 = vpop.f32.mrf.mxu0
          %v574 = vadd.f32 0.0, %v573
          %575 = vmatprep.mubr.f32.mxu0 0.0
          %576 = vmatmul.mubr.f32.gmra.mxu0 %v412
          %v577 = vpop.f32.mrf.mxu0
          %v578 = vadd.f32 0.0, %v577
          %v579 = vpop.f32.mrf.mxu0
          %v580 = vadd.f32 0.0, %v579
          %581 = vmatprep.mubr.f32.mxu0 0.0
          %582 = vmatmul.mubr.f32.gmra.mxu0 %v413
          %v583 = vpop.f32.mrf.mxu0
          %v584 = vadd.f32 0.0, %v583
          %v585 = vpop.f32.mrf.mxu0
          %v586 = vadd.f32 0.0, %v585
          %587 = vmatprep.mubr.f32.mxu0 0.0
          %588 = vmatmul.mubr.f32.gmra.mxu0 %v414
          %v589 = vpop.f32.mrf.mxu0
          %v590 = vadd.f32 0.0, %v589
          %v591 = vpop.f32.mrf.mxu0
          %v592 = vadd.f32 0.0, %v591
          %593 = vmatprep.mubr.f32.mxu0 0.0
          %594 = vmatmul.mubr.f32.gmra.mxu0 %v415
          %v595 = vpop.f32.mrf.mxu0
          %v596 = vadd.f32 0.0, %v595
          %v597 = vpop.f32.mrf.mxu0
          %v598 = vadd.f32 0.0, %v597
          %599 = vmatprep.mubr.f32.mxu0 0.0
          %600 = vmatmul.mubr.f32.gmra.mxu0 %v416
          %v601 = vpop.f32.mrf.mxu0
          %v602 = vadd.f32 0.0, %v601
          %v603 = vpop.f32.mrf.mxu0
          %v604 = vadd.f32 0.0, %v603
          %605 = vmatprep.mubr.f32.mxu0 0.0
          %606 = vmatmul.mubr.f32.gmra.mxu0 %v417
          %v607 = vpop.f32.mrf.mxu0
          %v608 = vadd.f32 0.0, %v607
          %v609 = vpop.f32.mrf.mxu0
          %v610 = vadd.f32 0.0, %v609
          %611 = vmatprep.mubr.f32.mxu0 0.0
          %612 = vmatmul.mubr.f32.gmra.mxu0 %v418
          %v613 = vpop.f32.mrf.mxu0
          %v614 = vadd.f32 0.0, %v613
          %v615 = vpop.f32.mrf.mxu0
          %v616 = vadd.f32 0.0, %v615
          %617 = vmatprep.mubr.f32.mxu0 0.0
          %618 = vmatmul.mubr.f32.gmra.mxu0 %v419
          %v619 = vpop.f32.mrf.mxu0
          %v620 = vadd.f32 0.0, %v619
          %v621 = vpop.f32.mrf.mxu0
          %v622 = vadd.f32 0.0, %v621
          %623 = vmatprep.mubr.f32.mxu0 0.0
          %624 = vmatmul.mubr.f32.gmra.mxu0 %v420
          %v625 = vpop.f32.mrf.mxu0
          %v626 = vadd.f32 0.0, %v625
          %v627 = vpop.f32.mrf.mxu0
          %v628 = vadd.f32 0.0, %v627
          %629 = vmatprep.mubr.f32.mxu0 0.0
          %630 = vmatmul.mubr.f32.gmra.mxu0 %v421
          %v631 = vpop.f32.mrf.mxu0
          %v632 = vadd.f32 0.0, %v631
          %v633 = vpop.f32.mrf.mxu0
          %v634 = vadd.f32 0.0, %v633
          %635 = vmatprep.mubr.f32.mxu0 0.0
          %636 = vmatmul.mubr.f32.gmra.mxu0 %v422
          %v637 = vpop.f32.mrf.mxu0
          %v638 = vadd.f32 0.0, %v637
          %v639 = vpop.f32.mrf.mxu0
          %v640 = vadd.f32 0.0, %v639
          %641 = vmatprep.mubr.f32.mxu0 0.0
          %642 = vmatmul.mubr.f32.gmra.mxu0 %v423
          %v643 = vpop.f32.mrf.mxu0
          %v644 = vadd.f32 0.0, %v643
          %v645 = vpop.f32.mrf.mxu0
          %v646 = vadd.f32 0.0, %v645
          %647 = vmatprep.mubr.f32.mxu0 0.0
          %648 = vmatmul.mubr.f32.gmra.mxu0 %v424
          %v649 = vpop.f32.mrf.mxu0
          %v650 = vadd.f32 0.0, %v649
          %v651 = vpop.f32.mrf.mxu0
          %v652 = vadd.f32 0.0, %v651
          %653 = vmatprep.mubr.f32.mxu0 0.0
          %654 = vmatmul.mubr.f32.gmra.mxu0 %v425
          %v655 = vpop.f32.mrf.mxu0
          %v656 = vadd.f32 0.0, %v655
          %v657 = vpop.f32.mrf.mxu0
          %v658 = vadd.f32 0.0, %v657
          %659 = vmatprep.mubr.f32.mxu0 0.0
          %660 = vmatmul.mubr.f32.gmra.mxu0 %v426
          %v661 = vpop.f32.mrf.mxu0
          %v662 = vadd.f32 0.0, %v661
          %v663 = vpop.f32.mrf.mxu0
          %v664 = vadd.f32 0.0, %v663
          %665 = vmatprep.mubr.f32.mxu0 0.0
          %666 = vmatmul.mubr.f32.gmra.mxu0 %v427
          %v667 = vpop.f32.mrf.mxu0
          %v668 = vadd.f32 0.0, %v667
          %v669 = vpop.f32.mrf.mxu0
          %v670 = vadd.f32 0.0, %v669
          %671 = vmatprep.mubr.f32.mxu0 0.0
          %672 = vmatmul.mubr.f32.gmra.mxu0 %v428
          %v673 = vpop.f32.mrf.mxu0
          %v674 = vadd.f32 0.0, %v673
          %v675 = vpop.f32.mrf.mxu0
          %v676 = vadd.f32 0.0, %v675
          %677 = vmatprep.mubr.f32.mxu0 0.0
          %678 = vmatmul.mubr.f32.gmra.mxu0 %v429
          %v679 = vpop.f32.mrf.mxu0
          %v680 = vadd.f32 0.0, %v679
          %v681 = vpop.f32.mrf.mxu0
          %v682 = vadd.f32 0.0, %v681
          %683 = vmatprep.mubr.f32.mxu0 0.0
          %684 = vmatmul.mubr.f32.gmra.mxu0 %v430
          %v685 = vpop.f32.mrf.mxu0
          %v686 = vadd.f32 0.0, %v685
          %v687 = vpop.f32.mrf.mxu0
          %v688 = vadd.f32 0.0, %v687
          %689 = vmatprep.mubr.f32.mxu0 0.0
          %690 = vmatmul.mubr.f32.gmra.mxu0 %v431
          %v691 = vpop.f32.mrf.mxu0
          %v692 = vadd.f32 0.0, %v691
          %v693 = vpop.f32.mrf.mxu0
          %v694 = vadd.f32 0.0, %v693
          %695 = vmatprep.mubr.f32.mxu0 0.0
          %696 = vmatmul.mubr.f32.gmra.mxu0 %v432
          %v697 = vpop.f32.mrf.mxu0
          %v698 = vadd.f32 0.0, %v697
          %v699 = vpop.f32.mrf.mxu0
          %v700 = vadd.f32 0.0, %v699
          %701 = vmatprep.mubr.f32.mxu0 0.0
          %702 = vmatmul.mubr.f32.gmra.mxu0 %v433
          %v703 = vpop.f32.mrf.mxu0
          %v704 = vadd.f32 0.0, %v703
          %v705 = vpop.f32.mrf.mxu0
          %v706 = vadd.f32 0.0, %v705
          %707 = vmatprep.mubr.f32.mxu0 0.0
          %708 = vmatmul.mubr.f32.gmra.mxu0 %v434
          %v709 = vpop.f32.mrf.mxu0
          %v710 = vadd.f32 0.0, %v709
          %v711 = vpop.f32.mrf.mxu0
          %v712 = vadd.f32 0.0, %v711
          %713 = vmatprep.mubr.f32.mxu0 0.0
          %714 = vmatmul.mubr.f32.gmra.mxu0 %v435
          %v715 = vpop.f32.mrf.mxu0
          %v716 = vadd.f32 0.0, %v715
          %v717 = vpop.f32.mrf.mxu0
          %v718 = vadd.f32 0.0, %v717
          %719 = vmatprep.mubr.f32.mxu0 0.0
          %720 = vmatmul.mubr.f32.gmra.mxu0 %v436
          %v721 = vpop.f32.mrf.mxu0
          %v722 = vadd.f32 0.0, %v721
          %v723 = vpop.f32.mrf.mxu0
          %v724 = vadd.f32 0.0, %v723
          %725 = vdwg.mxu0
          %s726 = smul.u32 %s25, 64
          %s727 = smul.addr %s726, 8
          %s728 = scalar_lea.vmem [#allocation2], %s727
          %729 = vst [vmem:[%s728] sm:$0xff] %v536
          %730 = vst [vmem:[%s728 + $0x8] sm:$0xff] %v538
          %731 = vst [vmem:[%s728 + $0x10] sm:$0xff] %v542
          %732 = vst [vmem:[%s728 + $0x18] sm:$0xff] %v544
          %733 = vst [vmem:[%s728 + $0x20] sm:$0xff] %v548
          %734 = vst [vmem:[%s728 + $0x28] sm:$0xff] %v550
          %735 = vst [vmem:[%s728 + $0x30] sm:$0xff] %v554
          %736 = vst [vmem:[%s728 + $0x38] sm:$0xff] %v556
          %737 = vst [vmem:[%s728 + $0x40] sm:$0xff] %v560
          %738 = vst [vmem:[%s728 + $0x48] sm:$0xff] %v562
          %739 = vst [vmem:[%s728 + $0x50] sm:$0xff] %v566
          %740 = vst [vmem:[%s728 + $0x58] sm:$0xff] %v568
          %741 = vst [vmem:[%s728 + $0x60] sm:$0xff] %v572
          %742 = vst [vmem:[%s728 + $0x68] sm:$0xff] %v574
          %743 = vst [vmem:[%s728 + $0x70] sm:$0xff] %v578
          %744 = vst [vmem:[%s728 + $0x78] sm:$0xff] %v580
          %745 = vst [vmem:[%s728 + $0x80] sm:$0xff] %v584
          %746 = vst [vmem:[%s728 + $0x88] sm:$0xff] %v586
          %747 = vst [vmem:[%s728 + $0x90] sm:$0xff] %v590
          %748 = vst [vmem:[%s728 + $0x98] sm:$0xff] %v592
          %749 = vst [vmem:[%s728 + $0xa0] sm:$0xff] %v596
          %750 = vst [vmem:[%s728 + $0xa8] sm:$0xff] %v598
          %751 = vst [vmem:[%s728 + $0xb0] sm:$0xff] %v602
          %752 = vst [vmem:[%s728 + $0xb8] sm:$0xff] %v604
          %753 = vst [vmem:[%s728 + $0xc0] sm:$0xff] %v608
          %754 = vst [vmem:[%s728 + $0xc8] sm:$0xff] %v610
          %755 = vst [vmem:[%s728 + $0xd0] sm:$0xff] %v614
          %756 = vst [vmem:[%s728 + $0xd8] sm:$0xff] %v616
          %757 = vst [vmem:[%s728 + $0xe0] sm:$0xff] %v620
          %758 = vst [vmem:[%s728 + $0xe8] sm:$0xff] %v622
          %759 = vst [vmem:[%s728 + $0xf0] sm:$0xff] %v626
          %760 = vst [vmem:[%s728 + $0xf8] sm:$0xff] %v628
          %761 = vst [vmem:[%s728 + $0x100] sm:$0xff] %v632
          %762 = vst [vmem:[%s728 + $0x108] sm:$0xff] %v634
          %763 = vst [vmem:[%s728 + $0x110] sm:$0xff] %v638
          %764 = vst [vmem:[%s728 + $0x118] sm:$0xff] %v640
          %765 = vst [vmem:[%s728 + $0x120] sm:$0xff] %v644
          %766 = vst [vmem:[%s728 + $0x128] sm:$0xff] %v646
          %767 = vst [vmem:[%s728 + $0x130] sm:$0xff] %v650
          %768 = vst [vmem:[%s728 + $0x138] sm:$0xff] %v652
          %769 = vst [vmem:[%s728 + $0x140] sm:$0xff] %v656
          %770 = vst [vmem:[%s728 + $0x148] sm:$0xff] %v658
          %771 = vst [vmem:[%s728 + $0x150] sm:$0xff] %v662
          %772 = vst [vmem:[%s728 + $0x158] sm:$0xff] %v664
          %773 = vst [vmem:[%s728 + $0x160] sm:$0xff] %v668
          %774 = vst [vmem:[%s728 + $0x168] sm:$0xff] %v670
          %775 = vst [vmem:[%s728 + $0x170] sm:$0xff] %v674
          %776 = vst [vmem:[%s728 + $0x178] sm:$0xff] %v676
          %777 = vst [vmem:[%s728 + $0x180] sm:$0xff] %v680
          %778 = vst [vmem:[%s728 + $0x188] sm:$0xff] %v682
          %779 = vst [vmem:[%s728 + $0x190] sm:$0xff] %v686
          %780 = vst [vmem:[%s728 + $0x198] sm:$0xff] %v688
          %781 = vst [vmem:[%s728 + $0x1a0] sm:$0xff] %v692
          %782 = vst [vmem:[%s728 + $0x1a8] sm:$0xff] %v694
          %783 = vst [vmem:[%s728 + $0x1b0] sm:$0xff] %v698
          %784 = vst [vmem:[%s728 + $0x1b8] sm:$0xff] %v700
          %785 = vst [vmem:[%s728 + $0x1c0] sm:$0xff] %v704
          %786 = vst [vmem:[%s728 + $0x1c8] sm:$0xff] %v706
          %787 = vst [vmem:[%s728 + $0x1d0] sm:$0xff] %v710
          %788 = vst [vmem:[%s728 + $0x1d8] sm:$0xff] %v712
          %789 = vst [vmem:[%s728 + $0x1e0] sm:$0xff] %v716
          %790 = vst [vmem:[%s728 + $0x1e8] sm:$0xff] %v718
          %791 = vst [vmem:[%s728 + $0x1f0] sm:$0xff] %v722
          %792 = vst [vmem:[%s728 + $0x1f8] sm:$0xff] %v724
          %vm793 = vcmp.lt.s32.totalorder %v400, 16
          %vm794 = vcmp.lt.s32.totalorder %v401, 16
          %v795 = vsel %vm793, 1, 0
          %v796 = vsel %vm794, 1, 0
          %vm797 = vcmp.eq.s32.totalorder %v795, 1
          %vm798 = vcmp.eq.s32.totalorder %v796, 1
          %v799 = vsel %vm797, %v536, -inf
          %v800 = vsel %vm798, %v538, -inf
          %v801 = vsel %vm797, %v542, -inf
          %v802 = vsel %vm798, %v544, -inf
          %v803 = vsel %vm797, %v548, -inf
          %v804 = vsel %vm798, %v550, -inf
          %v805 = vsel %vm797, %v554, -inf
          %v806 = vsel %vm798, %v556, -inf
          %v807 = vsel %vm797, %v560, -inf
          %v808 = vsel %vm798, %v562, -inf
          %v809 = vsel %vm797, %v566, -inf
          %v810 = vsel %vm798, %v568, -inf
          %v811 = vsel %vm797, %v572, -inf
          %v812 = vsel %vm798, %v574, -inf
          %v813 = vsel %vm797, %v578, -inf
          %v814 = vsel %vm798, %v580, -inf
          %v815 = vsel %vm797, %v584, -inf
          %v816 = vsel %vm798, %v586, -inf
          %v817 = vsel %vm797, %v590, -inf
          %v818 = vsel %vm798, %v592, -inf
          %v819 = vsel %vm797, %v596, -inf
          %v820 = vsel %vm798, %v598, -inf
          %v821 = vsel %vm797, %v602, -inf
          %v822 = vsel %vm798, %v604, -inf
          %v823 = vsel %vm797, %v608, -inf
          %v824 = vsel %vm798, %v610, -inf
          %v825 = vsel %vm797, %v614, -inf
          %v826 = vsel %vm798, %v616, -inf
          %v827 = vsel %vm797, %v620, -inf
          %v828 = vsel %vm798, %v622, -inf
          %v829 = vsel %vm797, %v626, -inf
          %v830 = vsel %vm798, %v628, -inf
          %v831 = vsel %vm797, %v632, -inf
          %v832 = vsel %vm798, %v634, -inf
          %v833 = vsel %vm797, %v638, -inf
          %v834 = vsel %vm798, %v640, -inf
          %v835 = vsel %vm797, %v644, -inf
          %v836 = vsel %vm798, %v646, -inf
          %v837 = vsel %vm797, %v650, -inf
          %v838 = vsel %vm798, %v652, -inf
          %v839 = vsel %vm797, %v656, -inf
          %v840 = vsel %vm798, %v658, -inf
          %v841 = vsel %vm797, %v662, -inf
          %v842 = vsel %vm798, %v664, -inf
          %v843 = vsel %vm797, %v668, -inf
          %v844 = vsel %vm798, %v670, -inf
          %v845 = vsel %vm797, %v674, -inf
          %v846 = vsel %vm798, %v676, -inf
          %v847 = vsel %vm797, %v680, -inf
          %v848 = vsel %vm798, %v682, -inf
          %v849 = vsel %vm797, %v686, -inf
          %v850 = vsel %vm798, %v688, -inf
          %v851 = vsel %vm797, %v692, -inf
          %v852 = vsel %vm798, %v694, -inf
          %v853 = vsel %vm797, %v698, -inf
          %v854 = vsel %vm798, %v700, -inf
          %v855 = vsel %vm797, %v704, -inf
          %v856 = vsel %vm798, %v706, -inf
          %v857 = vsel %vm797, %v710, -inf
          %v858 = vsel %vm798, %v712, -inf
          %v859 = vsel %vm797, %v716, -inf
          %v860 = vsel %vm798, %v718, -inf
          %v861 = vsel %vm797, %v722, -inf
          %v862 = vsel %vm798, %v724, -inf
          %v863 = vld [vmem:[#allocation3] sm:$0xff]
          %v864 = vld [vmem:[#allocation3 + $0x8] sm:$0xff]
          %v865 = vld [vmem:[#allocation3 + $0x10] sm:$0xff]
          %v866 = vld [vmem:[#allocation3 + $0x18] sm:$0xff]
          %v867 = vld [vmem:[#allocation3 + $0x20] sm:$0xff]
          %v868 = vld [vmem:[#allocation3 + $0x28] sm:$0xff]
          %v869 = vld [vmem:[#allocation3 + $0x30] sm:$0xff]
          %v870 = vld [vmem:[#allocation3 + $0x38] sm:$0xff]
          %v871 = vld [vmem:[#allocation3 + $0x40] sm:$0xff]
          %v872 = vld [vmem:[#allocation3 + $0x48] sm:$0xff]
          %v873 = vld [vmem:[#allocation3 + $0x50] sm:$0xff]
          %v874 = vld [vmem:[#allocation3 + $0x58] sm:$0xff]
          %v875 = vld [vmem:[#allocation3 + $0x60] sm:$0xff]
          %v876 = vld [vmem:[#allocation3 + $0x68] sm:$0xff]
          %v877 = vld [vmem:[#allocation3 + $0x70] sm:$0xff]
          %v878 = vld [vmem:[#allocation3 + $0x78] sm:$0xff]
          %v879 = vld [vmem:[#allocation3 + $0x80] sm:$0xff]
          %v880 = vld [vmem:[#allocation3 + $0x88] sm:$0xff]
          %v881 = vld [vmem:[#allocation3 + $0x90] sm:$0xff]
          %v882 = vld [vmem:[#allocation3 + $0x98] sm:$0xff]
          %v883 = vld [vmem:[#allocation3 + $0xa0] sm:$0xff]
          %v884 = vld [vmem:[#allocation3 + $0xa8] sm:$0xff]
          %v885 = vld [vmem:[#allocation3 + $0xb0] sm:$0xff]
          %v886 = vld [vmem:[#allocation3 + $0xb8] sm:$0xff]
          %v887 = vld [vmem:[#allocation3 + $0xc0] sm:$0xff]
          %v888 = vld [vmem:[#allocation3 + $0xc8] sm:$0xff]
          %v889 = vld [vmem:[#allocation3 + $0xd0] sm:$0xff]
          %v890 = vld [vmem:[#allocation3 + $0xd8] sm:$0xff]
          %v891 = vld [vmem:[#allocation3 + $0xe0] sm:$0xff]
          %v892 = vld [vmem:[#allocation3 + $0xe8] sm:$0xff]
          %v893 = vld [vmem:[#allocation3 + $0xf0] sm:$0xff]
          %v894 = vld [vmem:[#allocation3 + $0xf8] sm:$0xff]
          %v895 = vmax.f32 %v799, %v800
          %896 = vmax.xlane.f32.xlu0 %v895
          %v897 = vpop.xlane.xlu0 %896
          %v898 = vmax.f32 %v801, %v802
          %899 = vmax.xlane.f32.xlu0 %v898
          %v900 = vpop.xlane.xlu0 %899
          %v901 = vmax.f32 %v803, %v804
          %902 = vmax.xlane.f32.xlu0 %v901
          %v903 = vpop.xlane.xlu0 %902
          %v904 = vmax.f32 %v805, %v806
          %905 = vmax.xlane.f32.xlu0 %v904
          %v906 = vpop.xlane.xlu0 %905
          %v907 = vmax.f32 %v807, %v808
          %908 = vmax.xlane.f32.xlu0 %v907
          %v909 = vpop.xlane.xlu0 %908
          %v910 = vmax.f32 %v809, %v810
          %911 = vmax.xlane.f32.xlu0 %v910
          %v912 = vpop.xlane.xlu0 %911
          %v913 = vmax.f32 %v811, %v812
          %914 = vmax.xlane.f32.xlu0 %v913
          %v915 = vpop.xlane.xlu0 %914
          %v916 = vmax.f32 %v813, %v814
          %917 = vmax.xlane.f32.xlu0 %v916
          %v918 = vpop.xlane.xlu0 %917
          %v919 = vmax.f32 %v815, %v816
          %920 = vmax.xlane.f32.xlu0 %v919
          %v921 = vpop.xlane.xlu0 %920
          %v922 = vmax.f32 %v817, %v818
          %923 = vmax.xlane.f32.xlu0 %v922
          %v924 = vpop.xlane.xlu0 %923
          %v925 = vmax.f32 %v819, %v820
          %926 = vmax.xlane.f32.xlu0 %v925
          %v927 = vpop.xlane.xlu0 %926
          %v928 = vmax.f32 %v821, %v822
          %929 = vmax.xlane.f32.xlu0 %v928
          %v930 = vpop.xlane.xlu0 %929
          %v931 = vmax.f32 %v823, %v824
          %932 = vmax.xlane.f32.xlu0 %v931
          %v933 = vpop.xlane.xlu0 %932
          %v934 = vmax.f32 %v825, %v826
          %935 = vmax.xlane.f32.xlu0 %v934
          %v936 = vpop.xlane.xlu0 %935
          %v937 = vmax.f32 %v827, %v828
          %938 = vmax.xlane.f32.xlu0 %v937
          %v939 = vpop.xlane.xlu0 %938
          %v940 = vmax.f32 %v829, %v830
          %941 = vmax.xlane.f32.xlu0 %v940
          %v942 = vpop.xlane.xlu0 %941
          %v943 = vmax.f32 %v831, %v832
          %944 = vmax.xlane.f32.xlu0 %v943
          %v945 = vpop.xlane.xlu0 %944
          %v946 = vmax.f32 %v833, %v834
          %947 = vmax.xlane.f32.xlu0 %v946
          %v948 = vpop.xlane.xlu0 %947
          %v949 = vmax.f32 %v835, %v836
          %950 = vmax.xlane.f32.xlu0 %v949
          %v951 = vpop.xlane.xlu0 %950
          %v952 = vmax.f32 %v837, %v838
          %953 = vmax.xlane.f32.xlu0 %v952
          %v954 = vpop.xlane.xlu0 %953
          %v955 = vmax.f32 %v839, %v840
          %956 = vmax.xlane.f32.xlu0 %v955
          %v957 = vpop.xlane.xlu0 %956
          %v958 = vmax.f32 %v841, %v842
          %959 = vmax.xlane.f32.xlu0 %v958
          %v960 = vpop.xlane.xlu0 %959
          %v961 = vmax.f32 %v843, %v844
          %962 = vmax.xlane.f32.xlu0 %v961
          %v963 = vpop.xlane.xlu0 %962
          %v964 = vmax.f32 %v845, %v846
          %965 = vmax.xlane.f32.xlu0 %v964
          %v966 = vpop.xlane.xlu0 %965
          %v967 = vmax.f32 %v847, %v848
          %968 = vmax.xlane.f32.xlu0 %v967
          %v969 = vpop.xlane.xlu0 %968
          %v970 = vmax.f32 %v849, %v850
          %971 = vmax.xlane.f32.xlu0 %v970
          %v972 = vpop.xlane.xlu0 %971
          %v973 = vmax.f32 %v851, %v852
          %974 = vmax.xlane.f32.xlu0 %v973
          %v975 = vpop.xlane.xlu0 %974
          %v976 = vmax.f32 %v853, %v854
          %977 = vmax.xlane.f32.xlu0 %v976
          %v978 = vpop.xlane.xlu0 %977
          %v979 = vmax.f32 %v855, %v856
          %980 = vmax.xlane.f32.xlu0 %v979
          %v981 = vpop.xlane.xlu0 %980
          %v982 = vmax.f32 %v857, %v858
          %983 = vmax.xlane.f32.xlu0 %v982
          %v984 = vpop.xlane.xlu0 %983
          %v985 = vmax.f32 %v859, %v860
          %986 = vmax.xlane.f32.xlu0 %v985
          %v987 = vpop.xlane.xlu0 %986
          %v988 = vmax.f32 %v861, %v862
          %989 = vmax.xlane.f32.xlu0 %v988
          %v990 = vpop.xlane.xlu0 %989
          %v991 = vmax.f32 %v863, %v897
          %v992 = vmax.f32 %v864, %v900
          %v993 = vmax.f32 %v865, %v903
          %v994 = vmax.f32 %v866, %v906
          %v995 = vmax.f32 %v867, %v909
          %v996 = vmax.f32 %v868, %v912
          %v997 = vmax.f32 %v869, %v915
          %v998 = vmax.f32 %v870, %v918
          %v999 = vmax.f32 %v871, %v921
          %v1000 = vmax.f32 %v872, %v924
          %v1001 = vmax.f32 %v873, %v927
          %v1002 = vmax.f32 %v874, %v930
          %v1003 = vmax.f32 %v875, %v933
          %v1004 = vmax.f32 %v876, %v936
          %v1005 = vmax.f32 %v877, %v939
          %v1006 = vmax.f32 %v878, %v942
          %v1007 = vmax.f32 %v879, %v945
          %v1008 = vmax.f32 %v880, %v948
          %v1009 = vmax.f32 %v881, %v951
          %v1010 = vmax.f32 %v882, %v954
          %v1011 = vmax.f32 %v883, %v957
          %v1012 = vmax.f32 %v884, %v960
          %v1013 = vmax.f32 %v885, %v963
          %v1014 = vmax.f32 %v886, %v966
          %v1015 = vmax.f32 %v887, %v969
          %v1016 = vmax.f32 %v888, %v972
          %v1017 = vmax.f32 %v889, %v975
          %v1018 = vmax.f32 %v890, %v978
          %v1019 = vmax.f32 %v891, %v981
          %v1020 = vmax.f32 %v892, %v984
          %v1021 = vmax.f32 %v893, %v987
          %v1022 = vmax.f32 %v894, %v990
          %vm1023 = vcmask 7168
          %1024 = vst.msk [vmem:[#allocation3] sm:$0xff] %vm1023, %v991
          %1025 = vst.msk [vmem:[#allocation3 + $0x8] sm:$0xff] %vm1023, %v992
          %1026 = vst.msk [vmem:[#allocation3 + $0x10] sm:$0xff] %vm1023, %v993
          %1027 = vst.msk [vmem:[#allocation3 + $0x18] sm:$0xff] %vm1023, %v994
          %1028 = vst.msk [vmem:[#allocation3 + $0x20] sm:$0xff] %vm1023, %v995
          %1029 = vst.msk [vmem:[#allocation3 + $0x28] sm:$0xff] %vm1023, %v996
          %1030 = vst.msk [vmem:[#allocation3 + $0x30] sm:$0xff] %vm1023, %v997
          %1031 = vst.msk [vmem:[#allocation3 + $0x38] sm:$0xff] %vm1023, %v998
          %1032 = vst.msk [vmem:[#allocation3 + $0x40] sm:$0xff] %vm1023, %v999
          %1033 = vst.msk [vmem:[#allocation3 + $0x48] sm:$0xff] %vm1023, %v1000
          %1034 = vst.msk [vmem:[#allocation3 + $0x50] sm:$0xff] %vm1023, %v1001
          %1035 = vst.msk [vmem:[#allocation3 + $0x58] sm:$0xff] %vm1023, %v1002
          %1036 = vst.msk [vmem:[#allocation3 + $0x60] sm:$0xff] %vm1023, %v1003
          %1037 = vst.msk [vmem:[#allocation3 + $0x68] sm:$0xff] %vm1023, %v1004
          %1038 = vst.msk [vmem:[#allocation3 + $0x70] sm:$0xff] %vm1023, %v1005
          %1039 = vst.msk [vmem:[#allocation3 + $0x78] sm:$0xff] %vm1023, %v1006
          %1040 = vst.msk [vmem:[#allocation3 + $0x80] sm:$0xff] %vm1023, %v1007
          %1041 = vst.msk [vmem:[#allocation3 + $0x88] sm:$0xff] %vm1023, %v1008
          %1042 = vst.msk [vmem:[#allocation3 + $0x90] sm:$0xff] %vm1023, %v1009
          %1043 = vst.msk [vmem:[#allocation3 + $0x98] sm:$0xff] %vm1023, %v1010
          %1044 = vst.msk [vmem:[#allocation3 + $0xa0] sm:$0xff] %vm1023, %v1011
          %1045 = vst.msk [vmem:[#allocation3 + $0xa8] sm:$0xff] %vm1023, %v1012
          %1046 = vst.msk [vmem:[#allocation3 + $0xb0] sm:$0xff] %vm1023, %v1013
          %1047 = vst.msk [vmem:[#allocation3 + $0xb8] sm:$0xff] %vm1023, %v1014
          %1048 = vst.msk [vmem:[#allocation3 + $0xc0] sm:$0xff] %vm1023, %v1015
          %1049 = vst.msk [vmem:[#allocation3 + $0xc8] sm:$0xff] %vm1023, %v1016
          %1050 = vst.msk [vmem:[#allocation3 + $0xd0] sm:$0xff] %vm1023, %v1017
          %1051 = vst.msk [vmem:[#allocation3 + $0xd8] sm:$0xff] %vm1023, %v1018
          %1052 = vst.msk [vmem:[#allocation3 + $0xe0] sm:$0xff] %vm1023, %v1019
          %1053 = vst.msk [vmem:[#allocation3 + $0xe8] sm:$0xff] %vm1023, %v1020
          %1054 = vst.msk [vmem:[#allocation3 + $0xf0] sm:$0xff] %vm1023, %v1021
          %1055 = vst.msk [vmem:[#allocation3 + $0xf8] sm:$0xff] %vm1023, %v1022
        $region52: #{tpu_custom_call.1} parent=31 // pred_fallthru
          _
        %p1056 = scmp.eq.s32.totalorder %s24, 1
        // Predicated region
        $region53: #{tpu_custom_call.1} parent=31 // pred_check
          %p1057 = pneg %p1056
        $region54: #{tpu_custom_call.1} parent=31 // pred_check_branch
          %1059 = sbr.rel (%p1057) target = $region56
        $region55: #{tpu_custom_call.1} parent=31 // pred_region
          %s1060 = smul.u32 %s25, 64
          %s1061 = smul.addr %s1060, 8
          %s1062 = scalar_lea.vmem [#allocation2], %s1061
          %v1063 = vld [vmem:[%s1062] sm:$0xff]
          %v1064 = vld [vmem:[%s1062 + $0x8] sm:$0xff]
          %v1065 = vld [vmem:[%s1062 + $0x10] sm:$0xff]
          %v1066 = vld [vmem:[%s1062 + $0x18] sm:$0xff]
          %v1067 = vld [vmem:[%s1062 + $0x20] sm:$0xff]
          %v1068 = vld [vmem:[%s1062 + $0x28] sm:$0xff]
          %v1069 = vld [vmem:[%s1062 + $0x30] sm:$0xff]
          %v1070 = vld [vmem:[%s1062 + $0x38] sm:$0xff]
          %v1071 = vld [vmem:[%s1062 + $0x40] sm:$0xff]
          %v1072 = vld [vmem:[%s1062 + $0x48] sm:$0xff]
          %v1073 = vld [vmem:[%s1062 + $0x50] sm:$0xff]
          %v1074 = vld [vmem:[%s1062 + $0x58] sm:$0xff]
          %v1075 = vld [vmem:[%s1062 + $0x60] sm:$0xff]
          %v1076 = vld [vmem:[%s1062 + $0x68] sm:$0xff]
          %v1077 = vld [vmem:[%s1062 + $0x70] sm:$0xff]
          %v1078 = vld [vmem:[%s1062 + $0x78] sm:$0xff]
          %v1079 = vld [vmem:[%s1062 + $0x80] sm:$0xff]
          %v1080 = vld [vmem:[%s1062 + $0x88] sm:$0xff]
          %v1081 = vld [vmem:[%s1062 + $0x90] sm:$0xff]
          %v1082 = vld [vmem:[%s1062 + $0x98] sm:$0xff]
          %v1083 = vld [vmem:[%s1062 + $0xa0] sm:$0xff]
          %v1084 = vld [vmem:[%s1062 + $0xa8] sm:$0xff]
          %v1085 = vld [vmem:[%s1062 + $0xb0] sm:$0xff]
          %v1086 = vld [vmem:[%s1062 + $0xb8] sm:$0xff]
          %v1087 = vld [vmem:[%s1062 + $0xc0] sm:$0xff]
          %v1088 = vld [vmem:[%s1062 + $0xc8] sm:$0xff]
          %v1089 = vld [vmem:[%s1062 + $0xd0] sm:$0xff]
          %v1090 = vld [vmem:[%s1062 + $0xd8] sm:$0xff]
          %v1091 = vld [vmem:[%s1062 + $0xe0] sm:$0xff]
          %v1092 = vld [vmem:[%s1062 + $0xe8] sm:$0xff]
          %v1093 = vld [vmem:[%s1062 + $0xf0] sm:$0xff]
          %v1094 = vld [vmem:[%s1062 + $0xf8] sm:$0xff]
          %v1095 = vld [vmem:[%s1062 + $0x100] sm:$0xff]
          %v1096 = vld [vmem:[%s1062 + $0x108] sm:$0xff]
          %v1097 = vld [vmem:[%s1062 + $0x110] sm:$0xff]
          %v1098 = vld [vmem:[%s1062 + $0x118] sm:$0xff]
          %v1099 = vld [vmem:[%s1062 + $0x120] sm:$0xff]
          %v1100 = vld [vmem:[%s1062 + $0x128] sm:$0xff]
          %v1101 = vld [vmem:[%s1062 + $0x130] sm:$0xff]
          %v1102 = vld [vmem:[%s1062 + $0x138] sm:$0xff]
          %v1103 = vld [vmem:[%s1062 + $0x140] sm:$0xff]
          %v1104 = vld [vmem:[%s1062 + $0x148] sm:$0xff]
          %v1105 = vld [vmem:[%s1062 + $0x150] sm:$0xff]
          %v1106 = vld [vmem:[%s1062 + $0x158] sm:$0xff]
          %v1107 = vld [vmem:[%s1062 + $0x160] sm:$0xff]
          %v1108 = vld [vmem:[%s1062 + $0x168] sm:$0xff]
          %v1109 = vld [vmem:[%s1062 + $0x170] sm:$0xff]
          %v1110 = vld [vmem:[%s1062 + $0x178] sm:$0xff]
          %v1111 = vld [vmem:[%s1062 + $0x180] sm:$0xff]
          %v1112 = vld [vmem:[%s1062 + $0x188] sm:$0xff]
          %v1113 = vld [vmem:[%s1062 + $0x190] sm:$0xff]
          %v1114 = vld [vmem:[%s1062 + $0x198] sm:$0xff]
          %v1115 = vld [vmem:[%s1062 + $0x1a0] sm:$0xff]
          %v1116 = vld [vmem:[%s1062 + $0x1a8] sm:$0xff]
          %v1117 = vld [vmem:[%s1062 + $0x1b0] sm:$0xff]
          %v1118 = vld [vmem:[%s1062 + $0x1b8] sm:$0xff]
          %v1119 = vld [vmem:[%s1062 + $0x1c0] sm:$0xff]
          %v1120 = vld [vmem:[%s1062 + $0x1c8] sm:$0xff]
          %v1121 = vld [vmem:[%s1062 + $0x1d0] sm:$0xff]
          %v1122 = vld [vmem:[%s1062 + $0x1d8] sm:$0xff]
          %v1123 = vld [vmem:[%s1062 + $0x1e0] sm:$0xff]
          %v1124 = vld [vmem:[%s1062 + $0x1e8] sm:$0xff]
          %v1125 = vld [vmem:[%s1062 + $0x1f0] sm:$0xff]
          %v1126 = vld [vmem:[%s1062 + $0x1f8] sm:$0xff]
          %v1127 = vld [vmem:[#allocation3] sm:$0xff]
          %v1128 = vld [vmem:[#allocation3 + $0x8] sm:$0xff]
          %v1129 = vld [vmem:[#allocation3 + $0x10] sm:$0xff]
          %v1130 = vld [vmem:[#allocation3 + $0x18] sm:$0xff]
          %v1131 = vld [vmem:[#allocation3 + $0x20] sm:$0xff]
          %v1132 = vld [vmem:[#allocation3 + $0x28] sm:$0xff]
          %v1133 = vld [vmem:[#allocation3 + $0x30] sm:$0xff]
          %v1134 = vld [vmem:[#allocation3 + $0x38] sm:$0xff]
          %v1135 = vld [vmem:[#allocation3 + $0x40] sm:$0xff]
          %v1136 = vld [vmem:[#allocation3 + $0x48] sm:$0xff]
          %v1137 = vld [vmem:[#allocation3 + $0x50] sm:$0xff]
          %v1138 = vld [vmem:[#allocation3 + $0x58] sm:$0xff]
          %v1139 = vld [vmem:[#allocation3 + $0x60] sm:$0xff]
          %v1140 = vld [vmem:[#allocation3 + $0x68] sm:$0xff]
          %v1141 = vld [vmem:[#allocation3 + $0x70] sm:$0xff]
          %v1142 = vld [vmem:[#allocation3 + $0x78] sm:$0xff]
          %v1143 = vld [vmem:[#allocation3 + $0x80] sm:$0xff]
          %v1144 = vld [vmem:[#allocation3 + $0x88] sm:$0xff]
          %v1145 = vld [vmem:[#allocation3 + $0x90] sm:$0xff]
          %v1146 = vld [vmem:[#allocation3 + $0x98] sm:$0xff]
          %v1147 = vld [vmem:[#allocation3 + $0xa0] sm:$0xff]
          %v1148 = vld [vmem:[#allocation3 + $0xa8] sm:$0xff]
          %v1149 = vld [vmem:[#allocation3 + $0xb0] sm:$0xff]
          %v1150 = vld [vmem:[#allocation3 + $0xb8] sm:$0xff]
          %v1151 = vld [vmem:[#allocation3 + $0xc0] sm:$0xff]
          %v1152 = vld [vmem:[#allocation3 + $0xc8] sm:$0xff]
          %v1153 = vld [vmem:[#allocation3 + $0xd0] sm:$0xff]
          %v1154 = vld [vmem:[#allocation3 + $0xd8] sm:$0xff]
          %v1155 = vld [vmem:[#allocation3 + $0xe0] sm:$0xff]
          %v1156 = vld [vmem:[#allocation3 + $0xe8] sm:$0xff]
          %v1157 = vld [vmem:[#allocation3 + $0xf0] sm:$0xff]
          %v1158 = vld [vmem:[#allocation3 + $0xf8] sm:$0xff]
          %1160 = vset.pattern.permute.xlu0 0
          %1161 = vperm.xlu0 %1160, %v1127
          %v1162 = vpop.permute.xlu0 %1161
          %1165 = vset.pattern.permute.xlu0 0
          %1166 = vperm.xlu0 %1165, %v1128
          %v1167 = vpop.permute.xlu0 %1166
          %1170 = vset.pattern.permute.xlu0 0
          %1171 = vperm.xlu0 %1170, %v1129
          %v1172 = vpop.permute.xlu0 %1171
          %1175 = vset.pattern.permute.xlu0 0
          %1176 = vperm.xlu0 %1175, %v1130
          %v1177 = vpop.permute.xlu0 %1176
          %1180 = vset.pattern.permute.xlu0 0
          %1181 = vperm.xlu0 %1180, %v1131
          %v1182 = vpop.permute.xlu0 %1181
          %1185 = vset.pattern.permute.xlu0 0
          %1186 = vperm.xlu0 %1185, %v1132
          %v1187 = vpop.permute.xlu0 %1186
          %1190 = vset.pattern.permute.xlu0 0
          %1191 = vperm.xlu0 %1190, %v1133
          %v1192 = vpop.permute.xlu0 %1191
          %1195 = vset.pattern.permute.xlu0 0
          %1196 = vperm.xlu0 %1195, %v1134
          %v1197 = vpop.permute.xlu0 %1196
          %1200 = vset.pattern.permute.xlu0 0
          %1201 = vperm.xlu0 %1200, %v1135
          %v1202 = vpop.permute.xlu0 %1201
          %1205 = vset.pattern.permute.xlu0 0
          %1206 = vperm.xlu0 %1205, %v1136
          %v1207 = vpop.permute.xlu0 %1206
          %1210 = vset.pattern.permute.xlu0 0
          %1211 = vperm.xlu0 %1210, %v1137
          %v1212 = vpop.permute.xlu0 %1211
          %1215 = vset.pattern.permute.xlu0 0
          %1216 = vperm.xlu0 %1215, %v1138
          %v1217 = vpop.permute.xlu0 %1216
          %1220 = vset.pattern.permute.xlu0 0
          %1221 = vperm.xlu0 %1220, %v1139
          %v1222 = vpop.permute.xlu0 %1221
          %1225 = vset.pattern.permute.xlu0 0
          %1226 = vperm.xlu0 %1225, %v1140
          %v1227 = vpop.permute.xlu0 %1226
          %1230 = vset.pattern.permute.xlu0 0
          %1231 = vperm.xlu0 %1230, %v1141
          %v1232 = vpop.permute.xlu0 %1231
          %1235 = vset.pattern.permute.xlu0 0
          %1236 = vperm.xlu0 %1235, %v1142
          %v1237 = vpop.permute.xlu0 %1236
          %1240 = vset.pattern.permute.xlu0 0
          %1241 = vperm.xlu0 %1240, %v1143
          %v1242 = vpop.permute.xlu0 %1241
          %1245 = vset.pattern.permute.xlu0 0
          %1246 = vperm.xlu0 %1245, %v1144
          %v1247 = vpop.permute.xlu0 %1246
          %1250 = vset.pattern.permute.xlu0 0
          %1251 = vperm.xlu0 %1250, %v1145
          %v1252 = vpop.permute.xlu0 %1251
          %1255 = vset.pattern.permute.xlu0 0
          %1256 = vperm.xlu0 %1255, %v1146
          %v1257 = vpop.permute.xlu0 %1256
          %1260 = vset.pattern.permute.xlu0 0
          %1261 = vperm.xlu0 %1260, %v1147
          %v1262 = vpop.permute.xlu0 %1261
          %1265 = vset.pattern.permute.xlu0 0
          %1266 = vperm.xlu0 %1265, %v1148
          %v1267 = vpop.permute.xlu0 %1266
          %1270 = vset.pattern.permute.xlu0 0
          %1271 = vperm.xlu0 %1270, %v1149
          %v1272 = vpop.permute.xlu0 %1271
          %1275 = vset.pattern.permute.xlu0 0
          %1276 = vperm.xlu0 %1275, %v1150
          %v1277 = vpop.permute.xlu0 %1276
          %1280 = vset.pattern.permute.xlu0 0
          %1281 = vperm.xlu0 %1280, %v1151
          %v1282 = vpop.permute.xlu0 %1281
          %1285 = vset.pattern.permute.xlu0 0
          %1286 = vperm.xlu0 %1285, %v1152
          %v1287 = vpop.permute.xlu0 %1286
          %1290 = vset.pattern.permute.xlu0 0
          %1291 = vperm.xlu0 %1290, %v1153
          %v1292 = vpop.permute.xlu0 %1291
          %1295 = vset.pattern.permute.xlu0 0
          %1296 = vperm.xlu0 %1295, %v1154
          %v1297 = vpop.permute.xlu0 %1296
          %1300 = vset.pattern.permute.xlu0 0
          %1301 = vperm.xlu0 %1300, %v1155
          %v1302 = vpop.permute.xlu0 %1301
          %1305 = vset.pattern.permute.xlu0 0
          %1306 = vperm.xlu0 %1305, %v1156
          %v1307 = vpop.permute.xlu0 %1306
          %1310 = vset.pattern.permute.xlu0 0
          %1311 = vperm.xlu0 %1310, %v1157
          %v1312 = vpop.permute.xlu0 %1311
          %1315 = vset.pattern.permute.xlu0 0
          %1316 = vperm.xlu0 %1315, %v1158
          %v1317 = vpop.permute.xlu0 %1316
          %v1319 = vsub.f32 %v1063, %v1162
          %v1320 = vsub.f32 %v1064, %v1162
          %v1321 = vsub.f32 %v1065, %v1167
          %v1322 = vsub.f32 %v1066, %v1167
          %v1323 = vsub.f32 %v1067, %v1172
          %v1324 = vsub.f32 %v1068, %v1172
          %v1325 = vsub.f32 %v1069, %v1177
          %v1326 = vsub.f32 %v1070, %v1177
          %v1327 = vsub.f32 %v1071, %v1182
          %v1328 = vsub.f32 %v1072, %v1182
          %v1329 = vsub.f32 %v1073, %v1187
          %v1330 = vsub.f32 %v1074, %v1187
          %v1331 = vsub.f32 %v1075, %v1192
          %v1332 = vsub.f32 %v1076, %v1192
          %v1333 = vsub.f32 %v1077, %v1197
          %v1334 = vsub.f32 %v1078, %v1197
          %v1335 = vsub.f32 %v1079, %v1202
          %v1336 = vsub.f32 %v1080, %v1202
          %v1337 = vsub.f32 %v1081, %v1207
          %v1338 = vsub.f32 %v1082, %v1207
          %v1339 = vsub.f32 %v1083, %v1212
          %v1340 = vsub.f32 %v1084, %v1212
          %v1341 = vsub.f32 %v1085, %v1217
          %v1342 = vsub.f32 %v1086, %v1217
          %v1343 = vsub.f32 %v1087, %v1222
          %v1344 = vsub.f32 %v1088, %v1222
          %v1345 = vsub.f32 %v1089, %v1227
          %v1346 = vsub.f32 %v1090, %v1227
          %v1347 = vsub.f32 %v1091, %v1232
          %v1348 = vsub.f32 %v1092, %v1232
          %v1349 = vsub.f32 %v1093, %v1237
          %v1350 = vsub.f32 %v1094, %v1237
          %v1351 = vsub.f32 %v1095, %v1242
          %v1352 = vsub.f32 %v1096, %v1242
          %v1353 = vsub.f32 %v1097, %v1247
          %v1354 = vsub.f32 %v1098, %v1247
          %v1355 = vsub.f32 %v1099, %v1252
          %v1356 = vsub.f32 %v1100, %v1252
          %v1357 = vsub.f32 %v1101, %v1257
          %v1358 = vsub.f32 %v1102, %v1257
          %v1359 = vsub.f32 %v1103, %v1262
          %v1360 = vsub.f32 %v1104, %v1262
          %v1361 = vsub.f32 %v1105, %v1267
          %v1362 = vsub.f32 %v1106, %v1267
          %v1363 = vsub.f32 %v1107, %v1272
          %v1364 = vsub.f32 %v1108, %v1272
          %v1365 = vsub.f32 %v1109, %v1277
          %v1366 = vsub.f32 %v1110, %v1277
          %v1367 = vsub.f32 %v1111, %v1282
          %v1368 = vsub.f32 %v1112, %v1282
          %v1369 = vsub.f32 %v1113, %v1287
          %v1370 = vsub.f32 %v1114, %v1287
          %v1371 = vsub.f32 %v1115, %v1292
          %v1372 = vsub.f32 %v1116, %v1292
          %v1373 = vsub.f32 %v1117, %v1297
          %v1374 = vsub.f32 %v1118, %v1297
          %v1375 = vsub.f32 %v1119, %v1302
          %v1376 = vsub.f32 %v1120, %v1302
          %v1377 = vsub.f32 %v1121, %v1307
          %v1378 = vsub.f32 %v1122, %v1307
          %v1379 = vsub.f32 %v1123, %v1312
          %v1380 = vsub.f32 %v1124, %v1312
          %v1381 = vsub.f32 %v1125, %v1317
          %v1382 = vsub.f32 %v1126, %v1317
          %s1383 = smul.u32 %s23, 256
          %v1384 = vlaneseq
          %v1385 = vshrl.u32 %v1384, 7
          %v1386 = vadd.s32 %v1385, 8
          %v1387 = vadd.s32 %v1385, 16
          %v1388 = vadd.s32 %v1385, 24
          %v1389 = vadd.s32 %v1385, 32
          %v1390 = vadd.s32 %v1385, 40
          %v1391 = vadd.s32 %v1385, 48
          %v1392 = vadd.s32 %v1385, 56
          %v1393 = vadd.s32 %v1385, 64
          %v1394 = vadd.s32 %v1385, 72
          %v1395 = vadd.s32 %v1385, 80
          %v1396 = vadd.s32 %v1385, 88
          %v1397 = vadd.s32 %v1385, 96
          %v1398 = vadd.s32 %v1385, 104
          %v1399 = vadd.s32 %v1385, 112
          %v1400 = vadd.s32 %v1385, 120
          %v1401 = vadd.s32 %v1385, 128
          %v1402 = vadd.s32 %v1385, 136
          %v1403 = vadd.s32 %v1385, 144
          %v1404 = vadd.s32 %v1385, 152
          %v1405 = vadd.s32 %v1385, 160
          %v1406 = vadd.s32 %v1385, 168
          %v1407 = vadd.s32 %v1385, 176
          %v1408 = vadd.s32 %v1385, 184
          %v1409 = vadd.s32 %v1385, 192
          %v1410 = vadd.s32 %v1385, 200
          %v1411 = vadd.s32 %v1385, 208
          %v1412 = vadd.s32 %v1385, 216
          %v1413 = vadd.s32 %v1385, 224
          %v1414 = vadd.s32 %v1385, 232
          %v1415 = vadd.s32 %v1385, 240
          %v1416 = vadd.s32 %v1385, 248
          %v1417 = vstv %s1383
          %v1418 = vadd.s32 %v1417, %v1385
          %v1419 = vadd.s32 %v1417, %v1386
          %v1420 = vadd.s32 %v1417, %v1387
          %v1421 = vadd.s32 %v1417, %v1388
          %v1422 = vadd.s32 %v1417, %v1389
          %v1423 = vadd.s32 %v1417, %v1390
          %v1424 = vadd.s32 %v1417, %v1391
          %v1425 = vadd.s32 %v1417, %v1392
          %v1426 = vadd.s32 %v1417, %v1393
          %v1427 = vadd.s32 %v1417, %v1394
          %v1428 = vadd.s32 %v1417, %v1395
          %v1429 = vadd.s32 %v1417, %v1396
          %v1430 = vadd.s32 %v1417, %v1397
          %v1431 = vadd.s32 %v1417, %v1398
          %v1432 = vadd.s32 %v1417, %v1399
          %v1433 = vadd.s32 %v1417, %v1400
          %v1434 = vadd.s32 %v1417, %v1401
          %v1435 = vadd.s32 %v1417, %v1402
          %v1436 = vadd.s32 %v1417, %v1403
          %v1437 = vadd.s32 %v1417, %v1404
          %v1438 = vadd.s32 %v1417, %v1405
          %v1439 = vadd.s32 %v1417, %v1406
          %v1440 = vadd.s32 %v1417, %v1407
          %v1441 = vadd.s32 %v1417, %v1408
          %v1442 = vadd.s32 %v1417, %v1409
          %v1443 = vadd.s32 %v1417, %v1410
          %v1444 = vadd.s32 %v1417, %v1411
          %v1445 = vadd.s32 %v1417, %v1412
          %v1446 = vadd.s32 %v1417, %v1413
          %v1447 = vadd.s32 %v1417, %v1414
          %v1448 = vadd.s32 %v1417, %v1415
          %v1449 = vadd.s32 %v1417, %v1416
          %vm1450 = vcmp.ne.s32.totalorder %v1418, %v400
          %vm1451 = vcmp.ne.s32.totalorder %v1418, %v401
          %vm1452 = vcmp.ne.s32.totalorder %v1419, %v400
          %vm1453 = vcmp.ne.s32.totalorder %v1419, %v401
          %vm1454 = vcmp.ne.s32.totalorder %v1420, %v400
          %vm1455 = vcmp.ne.s32.totalorder %v1420, %v401
          %vm1456 = vcmp.ne.s32.totalorder %v1421, %v400
          %vm1457 = vcmp.ne.s32.totalorder %v1421, %v401
          %vm1458 = vcmp.ne.s32.totalorder %v1422, %v400
          %vm1459 = vcmp.ne.s32.totalorder %v1422, %v401
          %vm1460 = vcmp.ne.s32.totalorder %v1423, %v400
          %vm1461 = vcmp.ne.s32.totalorder %v1423, %v401
          %vm1462 = vcmp.ne.s32.totalorder %v1424, %v400
          %vm1463 = vcmp.ne.s32.totalorder %v1424, %v401
          %vm1464 = vcmp.ne.s32.totalorder %v1425, %v400
          %vm1465 = vcmp.ne.s32.totalorder %v1425, %v401
          %vm1466 = vcmp.ne.s32.totalorder %v1426, %v400
          %vm1467 = vcmp.ne.s32.totalorder %v1426, %v401
          %vm1468 = vcmp.ne.s32.totalorder %v1427, %v400
          %vm1469 = vcmp.ne.s32.totalorder %v1427, %v401
          %vm1470 = vcmp.ne.s32.totalorder %v1428, %v400
          %vm1471 = vcmp.ne.s32.totalorder %v1428, %v401
          %vm1472 = vcmp.ne.s32.totalorder %v1429, %v400
          %vm1473 = vcmp.ne.s32.totalorder %v1429, %v401
          %vm1474 = vcmp.ne.s32.totalorder %v1430, %v400
          %vm1475 = vcmp.ne.s32.totalorder %v1430, %v401
          %vm1476 = vcmp.ne.s32.totalorder %v1431, %v400
          %vm1477 = vcmp.ne.s32.totalorder %v1431, %v401
          %vm1478 = vcmp.ne.s32.totalorder %v1432, %v400
          %vm1479 = vcmp.ne.s32.totalorder %v1432, %v401
          %vm1480 = vcmp.ne.s32.totalorder %v1433, %v400
          %vm1481 = vcmp.ne.s32.totalorder %v1433, %v401
          %vm1482 = vcmp.ne.s32.totalorder %v1434, %v400
          %vm1483 = vcmp.ne.s32.totalorder %v1434, %v401
          %vm1484 = vcmp.ne.s32.totalorder %v1435, %v400
          %vm1485 = vcmp.ne.s32.totalorder %v1435, %v401
          %vm1486 = vcmp.ne.s32.totalorder %v1436, %v400
          %vm1487 = vcmp.ne.s32.totalorder %v1436, %v401
          %vm1488 = vcmp.ne.s32.totalorder %v1437, %v400
          %vm1489 = vcmp.ne.s32.totalorder %v1437, %v401
          %vm1490 = vcmp.ne.s32.totalorder %v1438, %v400
          %vm1491 = vcmp.ne.s32.totalorder %v1438, %v401
          %vm1492 = vcmp.ne.s32.totalorder %v1439, %v400
          %vm1493 = vcmp.ne.s32.totalorder %v1439, %v401
          %vm1494 = vcmp.ne.s32.totalorder %v1440, %v400
          %vm1495 = vcmp.ne.s32.totalorder %v1440, %v401
          %vm1496 = vcmp.ne.s32.totalorder %v1441, %v400
          %vm1497 = vcmp.ne.s32.totalorder %v1441, %v401
          %vm1498 = vcmp.ne.s32.totalorder %v1442, %v400
          %vm1499 = vcmp.ne.s32.totalorder %v1442, %v401
          %vm1500 = vcmp.ne.s32.totalorder %v1443, %v400
          %vm1501 = vcmp.ne.s32.totalorder %v1443, %v401
          %vm1502 = vcmp.ne.s32.totalorder %v1444, %v400
          %vm1503 = vcmp.ne.s32.totalorder %v1444, %v401
          %vm1504 = vcmp.ne.s32.totalorder %v1445, %v400
          %vm1505 = vcmp.ne.s32.totalorder %v1445, %v401
          %vm1506 = vcmp.ne.s32.totalorder %v1446, %v400
          %vm1507 = vcmp.ne.s32.totalorder %v1446, %v401
          %vm1508 = vcmp.ne.s32.totalorder %v1447, %v400
          %vm1509 = vcmp.ne.s32.totalorder %v1447, %v401
          %vm1510 = vcmp.ne.s32.totalorder %v1448, %v400
          %vm1511 = vcmp.ne.s32.totalorder %v1448, %v401
          %vm1512 = vcmp.ne.s32.totalorder %v1449, %v400
          %vm1513 = vcmp.ne.s32.totalorder %v1449, %v401
          %vm1514 = vcmp.lt.s32.totalorder %v400, 16
          %vm1515 = vcmp.lt.s32.totalorder %v401, 16
          %v1516 = vsel %vm1514, 1, 0
          %v1517 = vsel %vm1515, 1, 0
          %vm1518 = vcmp.eq.s32.totalorder %v1516, 1
          %vm1519 = vcmp.eq.s32.totalorder %v1517, 1
          %vm1520 = vmand %vm1450, %vm1518
          %vm1521 = vmand %vm1451, %vm1519
          %vm1522 = vmand %vm1452, %vm1518
          %vm1523 = vmand %vm1453, %vm1519
          %vm1524 = vmand %vm1454, %vm1518
          %vm1525 = vmand %vm1455, %vm1519
          %vm1526 = vmand %vm1456, %vm1518
          %vm1527 = vmand %vm1457, %vm1519
          %vm1528 = vmand %vm1458, %vm1518
          %vm1529 = vmand %vm1459, %vm1519
          %vm1530 = vmand %vm1460, %vm1518
          %vm1531 = vmand %vm1461, %vm1519
          %vm1532 = vmand %vm1462, %vm1518
          %vm1533 = vmand %vm1463, %vm1519
          %vm1534 = vmand %vm1464, %vm1518
          %vm1535 = vmand %vm1465, %vm1519
          %vm1536 = vmand %vm1466, %vm1518
          %vm1537 = vmand %vm1467, %vm1519
          %vm1538 = vmand %vm1468, %vm1518
          %vm1539 = vmand %vm1469, %vm1519
          %vm1540 = vmand %vm1470, %vm1518
          %vm1541 = vmand %vm1471, %vm1519
          %vm1542 = vmand %vm1472, %vm1518
          %vm1543 = vmand %vm1473, %vm1519
          %vm1544 = vmand %vm1474, %vm1518
          %vm1545 = vmand %vm1475, %vm1519
          %vm1546 = vmand %vm1476, %vm1518
          %vm1547 = vmand %vm1477, %vm1519
          %vm1548 = vmand %vm1478, %vm1518
          %vm1549 = vmand %vm1479, %vm1519
          %vm1550 = vmand %vm1480, %vm1518
          %vm1551 = vmand %vm1481, %vm1519
          %vm1552 = vmand %vm1482, %vm1518
          %vm1553 = vmand %vm1483, %vm1519
          %vm1554 = vmand %vm1484, %vm1518
          %vm1555 = vmand %vm1485, %vm1519
          %vm1556 = vmand %vm1486, %vm1518
          %vm1557 = vmand %vm1487, %vm1519
          %vm1558 = vmand %vm1488, %vm1518
          %vm1559 = vmand %vm1489, %vm1519
          %vm1560 = vmand %vm1490, %vm1518
          %vm1561 = vmand %vm1491, %vm1519
          %vm1562 = vmand %vm1492, %vm1518
          %vm1563 = vmand %vm1493, %vm1519
          %vm1564 = vmand %vm1494, %vm1518
          %vm1565 = vmand %vm1495, %vm1519
          %vm1566 = vmand %vm1496, %vm1518
          %vm1567 = vmand %vm1497, %vm1519
          %vm1568 = vmand %vm1498, %vm1518
          %vm1569 = vmand %vm1499, %vm1519
          %vm1570 = vmand %vm1500, %vm1518
          %vm1571 = vmand %vm1501, %vm1519
          %vm1572 = vmand %vm1502, %vm1518
          %vm1573 = vmand %vm1503, %vm1519
          %vm1574 = vmand %vm1504, %vm1518
          %vm1575 = vmand %vm1505, %vm1519
          %vm1576 = vmand %vm1506, %vm1518
          %vm1577 = vmand %vm1507, %vm1519
          %vm1578 = vmand %vm1508, %vm1518
          %vm1579 = vmand %vm1509, %vm1519
          %vm1580 = vmand %vm1510, %vm1518
          %vm1581 = vmand %vm1511, %vm1519
          %vm1582 = vmand %vm1512, %vm1518
          %vm1583 = vmand %vm1513, %vm1519
          %vm1584 = vcmp.lt.s32.totalorder %v1418, 0
          %v1585 = vsub.s32 0, %v1418
          %v1586 = vsel %vm1584, %v1585, %v1418
          %v1587 = vshrl.u32 %v1586, 3
          %v1588 = vand.u32 %v1586, 7
          %v1589 = vsub.s32 0, %v1588
          %v1590 = vsel %vm1584, %v1589, %v1588
          %vm1591 = vcmp.lt.s32.totalorder %v1419, 0
          %v1592 = vsub.s32 0, %v1419
          %v1593 = vsel %vm1591, %v1592, %v1419
          %v1594 = vshrl.u32 %v1593, 3
          %v1595 = vand.u32 %v1593, 7
          %v1596 = vsub.s32 0, %v1595
          %v1597 = vsel %vm1591, %v1596, %v1595
          %vm1598 = vcmp.lt.s32.totalorder %v1420, 0
          %v1599 = vsub.s32 0, %v1420
          %v1600 = vsel %vm1598, %v1599, %v1420
          %v1601 = vshrl.u32 %v1600, 3
          %v1602 = vand.u32 %v1600, 7
          %v1603 = vsub.s32 0, %v1602
          %v1604 = vsel %vm1598, %v1603, %v1602
          %vm1605 = vcmp.lt.s32.totalorder %v1421, 0
          %v1606 = vsub.s32 0, %v1421
          %v1607 = vsel %vm1605, %v1606, %v1421
          %v1608 = vshrl.u32 %v1607, 3
          %v1609 = vand.u32 %v1607, 7
          %v1610 = vsub.s32 0, %v1609
          %v1611 = vsel %vm1605, %v1610, %v1609
          %vm1612 = vcmp.lt.s32.totalorder %v1422, 0
          %v1613 = vsub.s32 0, %v1422
          %v1614 = vsel %vm1612, %v1613, %v1422
          %v1615 = vshrl.u32 %v1614, 3
          %v1616 = vand.u32 %v1614, 7
          %v1617 = vsub.s32 0, %v1616
          %v1618 = vsel %vm1612, %v1617, %v1616
          %vm1619 = vcmp.lt.s32.totalorder %v1423, 0
          %v1620 = vsub.s32 0, %v1423
          %v1621 = vsel %vm1619, %v1620, %v1423
          %v1622 = vshrl.u32 %v1621, 3
          %v1623 = vand.u32 %v1621, 7
          %v1624 = vsub.s32 0, %v1623
          %v1625 = vsel %vm1619, %v1624, %v1623
          %vm1626 = vcmp.lt.s32.totalorder %v1424, 0
          %v1627 = vsub.s32 0, %v1424
          %v1628 = vsel %vm1626, %v1627, %v1424
          %v1629 = vshrl.u32 %v1628, 3
          %v1630 = vand.u32 %v1628, 7
          %v1631 = vsub.s32 0, %v1630
          %v1632 = vsel %vm1626, %v1631, %v1630
          %vm1633 = vcmp.lt.s32.totalorder %v1425, 0
          %v1634 = vsub.s32 0, %v1425
          %v1635 = vsel %vm1633, %v1634, %v1425
          %v1636 = vshrl.u32 %v1635, 3
          %v1637 = vand.u32 %v1635, 7
          %v1638 = vsub.s32 0, %v1637
          %v1639 = vsel %vm1633, %v1638, %v1637
          %vm1640 = vcmp.lt.s32.totalorder %v1426, 0
          %v1641 = vsub.s32 0, %v1426
          %v1642 = vsel %vm1640, %v1641, %v1426
          %v1643 = vshrl.u32 %v1642, 3
          %v1644 = vand.u32 %v1642, 7
          %v1645 = vsub.s32 0, %v1644
          %v1646 = vsel %vm1640, %v1645, %v1644
          %vm1647 = vcmp.lt.s32.totalorder %v1427, 0
          %v1648 = vsub.s32 0, %v1427
          %v1649 = vsel %vm1647, %v1648, %v1427
          %v1650 = vshrl.u32 %v1649, 3
          %v1651 = vand.u32 %v1649, 7
          %v1652 = vsub.s32 0, %v1651
          %v1653 = vsel %vm1647, %v1652, %v1651
          %vm1654 = vcmp.lt.s32.totalorder %v1428, 0
          %v1655 = vsub.s32 0, %v1428
          %v1656 = vsel %vm1654, %v1655, %v1428
          %v1657 = vshrl.u32 %v1656, 3
          %v1658 = vand.u32 %v1656, 7
          %v1659 = vsub.s32 0, %v1658
          %v1660 = vsel %vm1654, %v1659, %v1658
          %vm1661 = vcmp.lt.s32.totalorder %v1429, 0
          %v1662 = vsub.s32 0, %v1429
          %v1663 = vsel %vm1661, %v1662, %v1429
          %v1664 = vshrl.u32 %v1663, 3
          %v1665 = vand.u32 %v1663, 7
          %v1666 = vsub.s32 0, %v1665
          %v1667 = vsel %vm1661, %v1666, %v1665
          %vm1668 = vcmp.lt.s32.totalorder %v1430, 0
          %v1669 = vsub.s32 0, %v1430
          %v1670 = vsel %vm1668, %v1669, %v1430
          %v1671 = vshrl.u32 %v1670, 3
          %v1672 = vand.u32 %v1670, 7
          %v1673 = vsub.s32 0, %v1672
          %v1674 = vsel %vm1668, %v1673, %v1672
          %vm1675 = vcmp.lt.s32.totalorder %v1431, 0
          %v1676 = vsub.s32 0, %v1431
          %v1677 = vsel %vm1675, %v1676, %v1431
          %v1678 = vshrl.u32 %v1677, 3
          %v1679 = vand.u32 %v1677, 7
          %v1680 = vsub.s32 0, %v1679
          %v1681 = vsel %vm1675, %v1680, %v1679
          %vm1682 = vcmp.lt.s32.totalorder %v1432, 0
          %v1683 = vsub.s32 0, %v1432
          %v1684 = vsel %vm1682, %v1683, %v1432
          %v1685 = vshrl.u32 %v1684, 3
          %v1686 = vand.u32 %v1684, 7
          %v1687 = vsub.s32 0, %v1686
          %v1688 = vsel %vm1682, %v1687, %v1686
          %vm1689 = vcmp.lt.s32.totalorder %v1433, 0
          %v1690 = vsub.s32 0, %v1433
          %v1691 = vsel %vm1689, %v1690, %v1433
          %v1692 = vshrl.u32 %v1691, 3
          %v1693 = vand.u32 %v1691, 7
          %v1694 = vsub.s32 0, %v1693
          %v1695 = vsel %vm1689, %v1694, %v1693
          %vm1696 = vcmp.lt.s32.totalorder %v1434, 0
          %v1697 = vsub.s32 0, %v1434
          %v1698 = vsel %vm1696, %v1697, %v1434
          %v1699 = vshrl.u32 %v1698, 3
          %v1700 = vand.u32 %v1698, 7
          %v1701 = vsub.s32 0, %v1700
          %v1702 = vsel %vm1696, %v1701, %v1700
          %vm1703 = vcmp.lt.s32.totalorder %v1435, 0
          %v1704 = vsub.s32 0, %v1435
          %v1705 = vsel %vm1703, %v1704, %v1435
          %v1706 = vshrl.u32 %v1705, 3
          %v1707 = vand.u32 %v1705, 7
          %v1708 = vsub.s32 0, %v1707
          %v1709 = vsel %vm1703, %v1708, %v1707
          %vm1710 = vcmp.lt.s32.totalorder %v1436, 0
          %v1711 = vsub.s32 0, %v1436
          %v1712 = vsel %vm1710, %v1711, %v1436
          %v1713 = vshrl.u32 %v1712, 3
          %v1714 = vand.u32 %v1712, 7
          %v1715 = vsub.s32 0, %v1714
          %v1716 = vsel %vm1710, %v1715, %v1714
          %vm1717 = vcmp.lt.s32.totalorder %v1437, 0
          %v1718 = vsub.s32 0, %v1437
          %v1719 = vsel %vm1717, %v1718, %v1437
          %v1720 = vshrl.u32 %v1719, 3
          %v1721 = vand.u32 %v1719, 7
          %v1722 = vsub.s32 0, %v1721
          %v1723 = vsel %vm1717, %v1722, %v1721
          %vm1724 = vcmp.lt.s32.totalorder %v1438, 0
          %v1725 = vsub.s32 0, %v1438
          %v1726 = vsel %vm1724, %v1725, %v1438
          %v1727 = vshrl.u32 %v1726, 3
          %v1728 = vand.u32 %v1726, 7
          %v1729 = vsub.s32 0, %v1728
          %v1730 = vsel %vm1724, %v1729, %v1728
          %vm1731 = vcmp.lt.s32.totalorder %v1439, 0
          %v1732 = vsub.s32 0, %v1439
          %v1733 = vsel %vm1731, %v1732, %v1439
          %v1734 = vshrl.u32 %v1733, 3
          %v1735 = vand.u32 %v1733, 7
          %v1736 = vsub.s32 0, %v1735
          %v1737 = vsel %vm1731, %v1736, %v1735
          %vm1738 = vcmp.lt.s32.totalorder %v1440, 0
          %v1739 = vsub.s32 0, %v1440
          %v1740 = vsel %vm1738, %v1739, %v1440
          %v1741 = vshrl.u32 %v1740, 3
          %v1742 = vand.u32 %v1740, 7
          %v1743 = vsub.s32 0, %v1742
          %v1744 = vsel %vm1738, %v1743, %v1742
          %vm1745 = vcmp.lt.s32.totalorder %v1441, 0
          %v1746 = vsub.s32 0, %v1441
          %v1747 = vsel %vm1745, %v1746, %v1441
          %v1748 = vshrl.u32 %v1747, 3
          %v1749 = vand.u32 %v1747, 7
          %v1750 = vsub.s32 0, %v1749
          %v1751 = vsel %vm1745, %v1750, %v1749
          %vm1752 = vcmp.lt.s32.totalorder %v1442, 0
          %v1753 = vsub.s32 0, %v1442
          %v1754 = vsel %vm1752, %v1753, %v1442
          %v1755 = vshrl.u32 %v1754, 3
          %v1756 = vand.u32 %v1754, 7
          %v1757 = vsub.s32 0, %v1756
          %v1758 = vsel %vm1752, %v1757, %v1756
          %vm1759 = vcmp.lt.s32.totalorder %v1443, 0
          %v1760 = vsub.s32 0, %v1443
          %v1761 = vsel %vm1759, %v1760, %v1443
          %v1762 = vshrl.u32 %v1761, 3
          %v1763 = vand.u32 %v1761, 7
          %v1764 = vsub.s32 0, %v1763
          %v1765 = vsel %vm1759, %v1764, %v1763
          %vm1766 = vcmp.lt.s32.totalorder %v1444, 0
          %v1767 = vsub.s32 0, %v1444
          %v1768 = vsel %vm1766, %v1767, %v1444
          %v1769 = vshrl.u32 %v1768, 3
          %v1770 = vand.u32 %v1768, 7
          %v1771 = vsub.s32 0, %v1770
          %v1772 = vsel %vm1766, %v1771, %v1770
          %vm1773 = vcmp.lt.s32.totalorder %v1445, 0
          %v1774 = vsub.s32 0, %v1445
          %v1775 = vsel %vm1773, %v1774, %v1445
          %v1776 = vshrl.u32 %v1775, 3
          %v1777 = vand.u32 %v1775, 7
          %v1778 = vsub.s32 0, %v1777
          %v1779 = vsel %vm1773, %v1778, %v1777
          %vm1780 = vcmp.lt.s32.totalorder %v1446, 0
          %v1781 = vsub.s32 0, %v1446
          %v1782 = vsel %vm1780, %v1781, %v1446
          %v1783 = vshrl.u32 %v1782, 3
          %v1784 = vand.u32 %v1782, 7
          %v1785 = vsub.s32 0, %v1784
          %v1786 = vsel %vm1780, %v1785, %v1784
          %vm1787 = vcmp.lt.s32.totalorder %v1447, 0
          %v1788 = vsub.s32 0, %v1447
          %v1789 = vsel %vm1787, %v1788, %v1447
          %v1790 = vshrl.u32 %v1789, 3
          %v1791 = vand.u32 %v1789, 7
          %v1792 = vsub.s32 0, %v1791
          %v1793 = vsel %vm1787, %v1792, %v1791
          %vm1794 = vcmp.lt.s32.totalorder %v1448, 0
          %v1795 = vsub.s32 0, %v1448
          %v1796 = vsel %vm1794, %v1795, %v1448
          %v1797 = vshrl.u32 %v1796, 3
          %v1798 = vand.u32 %v1796, 7
          %v1799 = vsub.s32 0, %v1798
          %v1800 = vsel %vm1794, %v1799, %v1798
          %vm1801 = vcmp.lt.s32.totalorder %v1449, 0
          %v1802 = vsub.s32 0, %v1449
          %v1803 = vsel %vm1801, %v1802, %v1449
          %v1804 = vshrl.u32 %v1803, 3
          %v1805 = vand.u32 %v1803, 7
          %v1806 = vsub.s32 0, %v1805
          %v1807 = vsel %vm1801, %v1806, %v1805
          %vm1808 = vcmp.ne.s32.totalorder %v1590, 0
          %vm1809 = vcmp.ne.s32.totalorder %v1597, 0
          %vm1810 = vcmp.ne.s32.totalorder %v1604, 0
          %vm1811 = vcmp.ne.s32.totalorder %v1611, 0
          %vm1812 = vcmp.ne.s32.totalorder %v1618, 0
          %vm1813 = vcmp.ne.s32.totalorder %v1625, 0
          %vm1814 = vcmp.ne.s32.totalorder %v1632, 0
          %vm1815 = vcmp.ne.s32.totalorder %v1639, 0
          %vm1816 = vcmp.ne.s32.totalorder %v1646, 0
          %vm1817 = vcmp.ne.s32.totalorder %v1653, 0
          %vm1818 = vcmp.ne.s32.totalorder %v1660, 0
          %vm1819 = vcmp.ne.s32.totalorder %v1667, 0
          %vm1820 = vcmp.ne.s32.totalorder %v1674, 0
          %vm1821 = vcmp.ne.s32.totalorder %v1681, 0
          %vm1822 = vcmp.ne.s32.totalorder %v1688, 0
          %vm1823 = vcmp.ne.s32.totalorder %v1695, 0
          %vm1824 = vcmp.ne.s32.totalorder %v1702, 0
          %vm1825 = vcmp.ne.s32.totalorder %v1709, 0
          %vm1826 = vcmp.ne.s32.totalorder %v1716, 0
          %vm1827 = vcmp.ne.s32.totalorder %v1723, 0
          %vm1828 = vcmp.ne.s32.totalorder %v1730, 0
          %vm1829 = vcmp.ne.s32.totalorder %v1737, 0
          %vm1830 = vcmp.ne.s32.totalorder %v1744, 0
          %vm1831 = vcmp.ne.s32.totalorder %v1751, 0
          %vm1832 = vcmp.ne.s32.totalorder %v1758, 0
          %vm1833 = vcmp.ne.s32.totalorder %v1765, 0
          %vm1834 = vcmp.ne.s32.totalorder %v1772, 0
          %vm1835 = vcmp.ne.s32.totalorder %v1779, 0
          %vm1836 = vcmp.ne.s32.totalorder %v1786, 0
          %vm1837 = vcmp.ne.s32.totalorder %v1793, 0
          %vm1838 = vcmp.ne.s32.totalorder %v1800, 0
          %vm1839 = vcmp.ne.s32.totalorder %v1807, 0
          %vm1840 = vcmp.lt.s32.totalorder %v1590, 0
          %vm1841 = vcmp.lt.s32.totalorder %v1597, 0
          %vm1842 = vcmp.lt.s32.totalorder %v1604, 0
          %vm1843 = vcmp.lt.s32.totalorder %v1611, 0
          %vm1844 = vcmp.lt.s32.totalorder %v1618, 0
          %vm1845 = vcmp.lt.s32.totalorder %v1625, 0
          %vm1846 = vcmp.lt.s32.totalorder %v1632, 0
          %vm1847 = vcmp.lt.s32.totalorder %v1639, 0
          %vm1848 = vcmp.lt.s32.totalorder %v1646, 0
          %vm1849 = vcmp.lt.s32.totalorder %v1653, 0
          %vm1850 = vcmp.lt.s32.totalorder %v1660, 0
          %vm1851 = vcmp.lt.s32.totalorder %v1667, 0
          %vm1852 = vcmp.lt.s32.totalorder %v1674, 0
          %vm1853 = vcmp.lt.s32.totalorder %v1681, 0
          %vm1854 = vcmp.lt.s32.totalorder %v1688, 0
          %vm1855 = vcmp.lt.s32.totalorder %v1695, 0
          %vm1856 = vcmp.lt.s32.totalorder %v1702, 0
          %vm1857 = vcmp.lt.s32.totalorder %v1709, 0
          %vm1858 = vcmp.lt.s32.totalorder %v1716, 0
          %vm1859 = vcmp.lt.s32.totalorder %v1723, 0
          %vm1860 = vcmp.lt.s32.totalorder %v1730, 0
          %vm1861 = vcmp.lt.s32.totalorder %v1737, 0
          %vm1862 = vcmp.lt.s32.totalorder %v1744, 0
          %vm1863 = vcmp.lt.s32.totalorder %v1751, 0
          %vm1864 = vcmp.lt.s32.totalorder %v1758, 0
          %vm1865 = vcmp.lt.s32.totalorder %v1765, 0
          %vm1866 = vcmp.lt.s32.totalorder %v1772, 0
          %vm1867 = vcmp.lt.s32.totalorder %v1779, 0
          %vm1868 = vcmp.lt.s32.totalorder %v1786, 0
          %vm1869 = vcmp.lt.s32.totalorder %v1793, 0
          %vm1870 = vcmp.lt.s32.totalorder %v1800, 0
          %vm1871 = vcmp.lt.s32.totalorder %v1807, 0
          %vm1872 = vmand %vm1840, %vm1808
          %vm1873 = vmand %vm1841, %vm1809
          %vm1874 = vmand %vm1842, %vm1810
          %vm1875 = vmand %vm1843, %vm1811
          %vm1876 = vmand %vm1844, %vm1812
          %vm1877 = vmand %vm1845, %vm1813
          %vm1878 = vmand %vm1846, %vm1814
          %vm1879 = vmand %vm1847, %vm1815
          %vm1880 = vmand %vm1848, %vm1816
          %vm1881 = vmand %vm1849, %vm1817
          %vm1882 = vmand %vm1850, %vm1818
          %vm1883 = vmand %vm1851, %vm1819
          %vm1884 = vmand %vm1852, %vm1820
          %vm1885 = vmand %vm1853, %vm1821
          %vm1886 = vmand %vm1854, %vm1822
          %vm1887 = vmand %vm1855, %vm1823
          %vm1888 = vmand %vm1856, %vm1824
          %vm1889 = vmand %vm1857, %vm1825
          %vm1890 = vmand %vm1858, %vm1826
          %vm1891 = vmand %vm1859, %vm1827
          %vm1892 = vmand %vm1860, %vm1828
          %vm1893 = vmand %vm1861, %vm1829
          %vm1894 = vmand %vm1862, %vm1830
          %vm1895 = vmand %vm1863, %vm1831
          %vm1896 = vmand %vm1864, %vm1832
          %vm1897 = vmand %vm1865, %vm1833
          %vm1898 = vmand %vm1866, %vm1834
          %vm1899 = vmand %vm1867, %vm1835
          %vm1900 = vmand %vm1868, %vm1836
          %vm1901 = vmand %vm1869, %vm1837
          %vm1902 = vmand %vm1870, %vm1838
          %vm1903 = vmand %vm1871, %vm1839
          %v1904 = vadd.s32 %v1590, 8
          %v1905 = vadd.s32 %v1597, 8
          %v1906 = vadd.s32 %v1604, 8
          %v1907 = vadd.s32 %v1611, 8
          %v1908 = vadd.s32 %v1618, 8
          %v1909 = vadd.s32 %v1625, 8
          %v1910 = vadd.s32 %v1632, 8
          %v1911 = vadd.s32 %v1639, 8
          %v1912 = vadd.s32 %v1646, 8
          %v1913 = vadd.s32 %v1653, 8
          %v1914 = vadd.s32 %v1660, 8
          %v1915 = vadd.s32 %v1667, 8
          %v1916 = vadd.s32 %v1674, 8
          %v1917 = vadd.s32 %v1681, 8
          %v1918 = vadd.s32 %v1688, 8
          %v1919 = vadd.s32 %v1695, 8
          %v1920 = vadd.s32 %v1702, 8
          %v1921 = vadd.s32 %v1709, 8
          %v1922 = vadd.s32 %v1716, 8
          %v1923 = vadd.s32 %v1723, 8
          %v1924 = vadd.s32 %v1730, 8
          %v1925 = vadd.s32 %v1737, 8
          %v1926 = vadd.s32 %v1744, 8
          %v1927 = vadd.s32 %v1751, 8
          %v1928 = vadd.s32 %v1758, 8
          %v1929 = vadd.s32 %v1765, 8
          %v1930 = vadd.s32 %v1772, 8
          %v1931 = vadd.s32 %v1779, 8
          %v1932 = vadd.s32 %v1786, 8
          %v1933 = vadd.s32 %v1793, 8
          %v1934 = vadd.s32 %v1800, 8
          %v1935 = vadd.s32 %v1807, 8
          %v1936 = vsel %vm1872, %v1904, %v1590
          %v1937 = vsel %vm1873, %v1905, %v1597
          %v1938 = vsel %vm1874, %v1906, %v1604
          %v1939 = vsel %vm1875, %v1907, %v1611
          %v1940 = vsel %vm1876, %v1908, %v1618
          %v1941 = vsel %vm1877, %v1909, %v1625
          %v1942 = vsel %vm1878, %v1910, %v1632
          %v1943 = vsel %vm1879, %v1911, %v1639
          %v1944 = vsel %vm1880, %v1912, %v1646
          %v1945 = vsel %vm1881, %v1913, %v1653
          %v1946 = vsel %vm1882, %v1914, %v1660
          %v1947 = vsel %vm1883, %v1915, %v1667
          %v1948 = vsel %vm1884, %v1916, %v1674
          %v1949 = vsel %vm1885, %v1917, %v1681
          %v1950 = vsel %vm1886, %v1918, %v1688
          %v1951 = vsel %vm1887, %v1919, %v1695
          %v1952 = vsel %vm1888, %v1920, %v1702
          %v1953 = vsel %vm1889, %v1921, %v1709
          %v1954 = vsel %vm1890, %v1922, %v1716
          %v1955 = vsel %vm1891, %v1923, %v1723
          %v1956 = vsel %vm1892, %v1924, %v1730
          %v1957 = vsel %vm1893, %v1925, %v1737
          %v1958 = vsel %vm1894, %v1926, %v1744
          %v1959 = vsel %vm1895, %v1927, %v1751
          %v1960 = vsel %vm1896, %v1928, %v1758
          %v1961 = vsel %vm1897, %v1929, %v1765
          %v1962 = vsel %vm1898, %v1930, %v1772
          %v1963 = vsel %vm1899, %v1931, %v1779
          %v1964 = vsel %vm1900, %v1932, %v1786
          %v1965 = vsel %vm1901, %v1933, %v1793
          %v1966 = vsel %vm1902, %v1934, %v1800
          %v1967 = vsel %vm1903, %v1935, %v1807
          %vm1968 = vcmp.lt.s32.totalorder %v400, 0
          %v1969 = vsub.s32 0, %v400
          %v1970 = vsel %vm1968, %v1969, %v400
          %v1971 = vshrl.u32 %v1970, 3
          %v1972 = vand.u32 %v1970, 7
          %v1973 = vsub.s32 0, %v1972
          %v1974 = vsel %vm1968, %v1973, %v1972
          %vm1975 = vcmp.lt.s32.totalorder %v401, 0
          %v1976 = vsub.s32 0, %v401
          %v1977 = vsel %vm1975, %v1976, %v401
          %v1978 = vshrl.u32 %v1977, 3
          %v1979 = vand.u32 %v1977, 7
          %v1980 = vsub.s32 0, %v1979
          %v1981 = vsel %vm1975, %v1980, %v1979
          %vm1982 = vcmp.ne.s32.totalorder %v1974, 0
          %vm1983 = vcmp.ne.s32.totalorder %v1981, 0
          %vm1984 = vcmp.lt.s32.totalorder %v1974, 0
          %vm1985 = vcmp.lt.s32.totalorder %v1981, 0
          %vm1986 = vmand %vm1984, %vm1982
          %vm1987 = vmand %vm1985, %vm1983
          %v1988 = vadd.s32 %v1974, 8
          %v1989 = vadd.s32 %v1981, 8
          %v1990 = vsel %vm1986, %v1988, %v1974
          %v1991 = vsel %vm1987, %v1989, %v1981
          %vm1992 = vcmp.eq.s32.totalorder %v1936, %v1990
          %vm1993 = vcmp.eq.s32.totalorder %v1936, %v1991
          %vm1994 = vcmp.eq.s32.totalorder %v1937, %v1990
          %vm1995 = vcmp.eq.s32.totalorder %v1937, %v1991
          %vm1996 = vcmp.eq.s32.totalorder %v1938, %v1990
          %vm1997 = vcmp.eq.s32.totalorder %v1938, %v1991
          %vm1998 = vcmp.eq.s32.totalorder %v1939, %v1990
          %vm1999 = vcmp.eq.s32.totalorder %v1939, %v1991
          %vm2000 = vcmp.eq.s32.totalorder %v1940, %v1990
          %vm2001 = vcmp.eq.s32.totalorder %v1940, %v1991
          %vm2002 = vcmp.eq.s32.totalorder %v1941, %v1990
          %vm2003 = vcmp.eq.s32.totalorder %v1941, %v1991
          %vm2004 = vcmp.eq.s32.totalorder %v1942, %v1990
          %vm2005 = vcmp.eq.s32.totalorder %v1942, %v1991
          %vm2006 = vcmp.eq.s32.totalorder %v1943, %v1990
          %vm2007 = vcmp.eq.s32.totalorder %v1943, %v1991
          %vm2008 = vcmp.eq.s32.totalorder %v1944, %v1990
          %vm2009 = vcmp.eq.s32.totalorder %v1944, %v1991
          %vm2010 = vcmp.eq.s32.totalorder %v1945, %v1990
          %vm2011 = vcmp.eq.s32.totalorder %v1945, %v1991
          %vm2012 = vcmp.eq.s32.totalorder %v1946, %v1990
          %vm2013 = vcmp.eq.s32.totalorder %v1946, %v1991
          %vm2014 = vcmp.eq.s32.totalorder %v1947, %v1990
          %vm2015 = vcmp.eq.s32.totalorder %v1947, %v1991
          %vm2016 = vcmp.eq.s32.totalorder %v1948, %v1990
          %vm2017 = vcmp.eq.s32.totalorder %v1948, %v1991
          %vm2018 = vcmp.eq.s32.totalorder %v1949, %v1990
          %vm2019 = vcmp.eq.s32.totalorder %v1949, %v1991
          %vm2020 = vcmp.eq.s32.totalorder %v1950, %v1990
          %vm2021 = vcmp.eq.s32.totalorder %v1950, %v1991
          %vm2022 = vcmp.eq.s32.totalorder %v1951, %v1990
          %vm2023 = vcmp.eq.s32.totalorder %v1951, %v1991
          %vm2024 = vcmp.eq.s32.totalorder %v1952, %v1990
          %vm2025 = vcmp.eq.s32.totalorder %v1952, %v1991
          %vm2026 = vcmp.eq.s32.totalorder %v1953, %v1990
          %vm2027 = vcmp.eq.s32.totalorder %v1953, %v1991
          %vm2028 = vcmp.eq.s32.totalorder %v1954, %v1990
          %vm2029 = vcmp.eq.s32.totalorder %v1954, %v1991
          %vm2030 = vcmp.eq.s32.totalorder %v1955, %v1990
          %vm2031 = vcmp.eq.s32.totalorder %v1955, %v1991
          %vm2032 = vcmp.eq.s32.totalorder %v1956, %v1990
          %vm2033 = vcmp.eq.s32.totalorder %v1956, %v1991
          %vm2034 = vcmp.eq.s32.totalorder %v1957, %v1990
          %vm2035 = vcmp.eq.s32.totalorder %v1957, %v1991
          %vm2036 = vcmp.eq.s32.totalorder %v1958, %v1990
          %vm2037 = vcmp.eq.s32.totalorder %v1958, %v1991
          %vm2038 = vcmp.eq.s32.totalorder %v1959, %v1990
          %vm2039 = vcmp.eq.s32.totalorder %v1959, %v1991
          %vm2040 = vcmp.eq.s32.totalorder %v1960, %v1990
          %vm2041 = vcmp.eq.s32.totalorder %v1960, %v1991
          %vm2042 = vcmp.eq.s32.totalorder %v1961, %v1990
          %vm2043 = vcmp.eq.s32.totalorder %v1961, %v1991
          %vm2044 = vcmp.eq.s32.totalorder %v1962, %v1990
          %vm2045 = vcmp.eq.s32.totalorder %v1962, %v1991
          %vm2046 = vcmp.eq.s32.totalorder %v1963, %v1990
          %vm2047 = vcmp.eq.s32.totalorder %v1963, %v1991
          %vm2048 = vcmp.eq.s32.totalorder %v1964, %v1990
          %vm2049 = vcmp.eq.s32.totalorder %v1964, %v1991
          %vm2050 = vcmp.eq.s32.totalorder %v1965, %v1990
          %vm2051 = vcmp.eq.s32.totalorder %v1965, %v1991
          %vm2052 = vcmp.eq.s32.totalorder %v1966, %v1990
          %vm2053 = vcmp.eq.s32.totalorder %v1966, %v1991
          %vm2054 = vcmp.eq.s32.totalorder %v1967, %v1990
          %vm2055 = vcmp.eq.s32.totalorder %v1967, %v1991
          %vm2056 = vmand %vm1992, %vm1520
          %vm2057 = vmand %vm1993, %vm1521
          %vm2058 = vmand %vm1994, %vm1522
          %vm2059 = vmand %vm1995, %vm1523
          %vm2060 = vmand %vm1996, %vm1524
          %vm2061 = vmand %vm1997, %vm1525
          %vm2062 = vmand %vm1998, %vm1526
          %vm2063 = vmand %vm1999, %vm1527
          %vm2064 = vmand %vm2000, %vm1528
          %vm2065 = vmand %vm2001, %vm1529
          %vm2066 = vmand %vm2002, %vm1530
          %vm2067 = vmand %vm2003, %vm1531
          %vm2068 = vmand %vm2004, %vm1532
          %vm2069 = vmand %vm2005, %vm1533
          %vm2070 = vmand %vm2006, %vm1534
          %vm2071 = vmand %vm2007, %vm1535
          %vm2072 = vmand %vm2008, %vm1536
          %vm2073 = vmand %vm2009, %vm1537
          %vm2074 = vmand %vm2010, %vm1538
          %vm2075 = vmand %vm2011, %vm1539
          %vm2076 = vmand %vm2012, %vm1540
          %vm2077 = vmand %vm2013, %vm1541
          %vm2078 = vmand %vm2014, %vm1542
          %vm2079 = vmand %vm2015, %vm1543
          %vm2080 = vmand %vm2016, %vm1544
          %vm2081 = vmand %vm2017, %vm1545
          %vm2082 = vmand %vm2018, %vm1546
          %vm2083 = vmand %vm2019, %vm1547
          %vm2084 = vmand %vm2020, %vm1548
          %vm2085 = vmand %vm2021, %vm1549
          %vm2086 = vmand %vm2022, %vm1550
          %vm2087 = vmand %vm2023, %vm1551
          %vm2088 = vmand %vm2024, %vm1552
          %vm2089 = vmand %vm2025, %vm1553
          %vm2090 = vmand %vm2026, %vm1554
          %vm2091 = vmand %vm2027, %vm1555
          %vm2092 = vmand %vm2028, %vm1556
          %vm2093 = vmand %vm2029, %vm1557
          %vm2094 = vmand %vm2030, %vm1558
          %vm2095 = vmand %vm2031, %vm1559
          %vm2096 = vmand %vm2032, %vm1560
          %vm2097 = vmand %vm2033, %vm1561
          %vm2098 = vmand %vm2034, %vm1562
          %vm2099 = vmand %vm2035, %vm1563
          %vm2100 = vmand %vm2036, %vm1564
          %vm2101 = vmand %vm2037, %vm1565
          %vm2102 = vmand %vm2038, %vm1566
          %vm2103 = vmand %vm2039, %vm1567
          %vm2104 = vmand %vm2040, %vm1568
          %vm2105 = vmand %vm2041, %vm1569
          %vm2106 = vmand %vm2042, %vm1570
          %vm2107 = vmand %vm2043, %vm1571
          %vm2108 = vmand %vm2044, %vm1572
          %vm2109 = vmand %vm2045, %vm1573
          %vm2110 = vmand %vm2046, %vm1574
          %vm2111 = vmand %vm2047, %vm1575
          %vm2112 = vmand %vm2048, %vm1576
          %vm2113 = vmand %vm2049, %vm1577
          %vm2114 = vmand %vm2050, %vm1578
          %vm2115 = vmand %vm2051, %vm1579
          %vm2116 = vmand %vm2052, %vm1580
          %vm2117 = vmand %vm2053, %vm1581
          %vm2118 = vmand %vm2054, %vm1582
          %vm2119 = vmand %vm2055, %vm1583
          %v2120 = vld [vmem:[%s251] sm:$0xff]
          %v2121 = vld [vmem:[%s251 + $0x8] sm:$0xff]
          %v2122 = vld [vmem:[%s251 + $0x10] sm:$0xff]
          %v2123 = vld [vmem:[%s251 + $0x18] sm:$0xff]
          %v2124 = vld [vmem:[%s251 + $0x20] sm:$0xff]
          %v2125 = vld [vmem:[%s251 + $0x28] sm:$0xff]
          %v2126 = vld [vmem:[%s251 + $0x30] sm:$0xff]
          %v2127 = vld [vmem:[%s251 + $0x38] sm:$0xff]
          %v2128 = vld [vmem:[%s251 + $0x40] sm:$0xff]
          %v2129 = vld [vmem:[%s251 + $0x48] sm:$0xff]
          %v2130 = vld [vmem:[%s251 + $0x50] sm:$0xff]
          %v2131 = vld [vmem:[%s251 + $0x58] sm:$0xff]
          %v2132 = vld [vmem:[%s251 + $0x60] sm:$0xff]
          %v2133 = vld [vmem:[%s251 + $0x68] sm:$0xff]
          %v2134 = vld [vmem:[%s251 + $0x70] sm:$0xff]
          %v2135 = vld [vmem:[%s251 + $0x78] sm:$0xff]
          %v2136 = vld [vmem:[%s251 + $0x80] sm:$0xff]
          %v2137 = vld [vmem:[%s251 + $0x88] sm:$0xff]
          %v2138 = vld [vmem:[%s251 + $0x90] sm:$0xff]
          %v2139 = vld [vmem:[%s251 + $0x98] sm:$0xff]
          %v2140 = vld [vmem:[%s251 + $0xa0] sm:$0xff]
          %v2141 = vld [vmem:[%s251 + $0xa8] sm:$0xff]
          %v2142 = vld [vmem:[%s251 + $0xb0] sm:$0xff]
          %v2143 = vld [vmem:[%s251 + $0xb8] sm:$0xff]
          %v2144 = vld [vmem:[%s251 + $0xc0] sm:$0xff]
          %v2145 = vld [vmem:[%s251 + $0xc8] sm:$0xff]
          %v2146 = vld [vmem:[%s251 + $0xd0] sm:$0xff]
          %v2147 = vld [vmem:[%s251 + $0xd8] sm:$0xff]
          %v2148 = vld [vmem:[%s251 + $0xe0] sm:$0xff]
          %v2149 = vld [vmem:[%s251 + $0xe8] sm:$0xff]
          %v2150 = vld [vmem:[%s251 + $0xf0] sm:$0xff]
          %v2151 = vld [vmem:[%s251 + $0xf8] sm:$0xff]
          %v2152 = vld [vmem:[%s251 + $0x100] sm:$0xff]
          %v2153 = vld [vmem:[%s251 + $0x108] sm:$0xff]
          %v2154 = vld [vmem:[%s251 + $0x110] sm:$0xff]
          %v2155 = vld [vmem:[%s251 + $0x118] sm:$0xff]
          %v2156 = vld [vmem:[%s251 + $0x120] sm:$0xff]
          %v2157 = vld [vmem:[%s251 + $0x128] sm:$0xff]
          %v2158 = vld [vmem:[%s251 + $0x130] sm:$0xff]
          %v2159 = vld [vmem:[%s251 + $0x138] sm:$0xff]
          %v2160 = vld [vmem:[%s251 + $0x140] sm:$0xff]
          %v2161 = vld [vmem:[%s251 + $0x148] sm:$0xff]
          %v2162 = vld [vmem:[%s251 + $0x150] sm:$0xff]
          %v2163 = vld [vmem:[%s251 + $0x158] sm:$0xff]
          %v2164 = vld [vmem:[%s251 + $0x160] sm:$0xff]
          %v2165 = vld [vmem:[%s251 + $0x168] sm:$0xff]
          %v2166 = vld [vmem:[%s251 + $0x170] sm:$0xff]
          %v2167 = vld [vmem:[%s251 + $0x178] sm:$0xff]
          %v2168 = vld [vmem:[%s251 + $0x180] sm:$0xff]
          %v2169 = vld [vmem:[%s251 + $0x188] sm:$0xff]
          %v2170 = vld [vmem:[%s251 + $0x190] sm:$0xff]
          %v2171 = vld [vmem:[%s251 + $0x198] sm:$0xff]
          %v2172 = vld [vmem:[%s251 + $0x1a0] sm:$0xff]
          %v2173 = vld [vmem:[%s251 + $0x1a8] sm:$0xff]
          %v2174 = vld [vmem:[%s251 + $0x1b0] sm:$0xff]
          %v2175 = vld [vmem:[%s251 + $0x1b8] sm:$0xff]
          %v2176 = vld [vmem:[%s251 + $0x1c0] sm:$0xff]
          %v2177 = vld [vmem:[%s251 + $0x1c8] sm:$0xff]
          %v2178 = vld [vmem:[%s251 + $0x1d0] sm:$0xff]
          %v2179 = vld [vmem:[%s251 + $0x1d8] sm:$0xff]
          %v2180 = vld [vmem:[%s251 + $0x1e0] sm:$0xff]
          %v2181 = vld [vmem:[%s251 + $0x1e8] sm:$0xff]
          %v2182 = vld [vmem:[%s251 + $0x1f0] sm:$0xff]
          %v2183 = vld [vmem:[%s251 + $0x1f8] sm:$0xff]
          %v2184 = vmul.f32 %v1319, %v2120
          %v2185 = vmul.f32 %v1320, %v2121
          %v2186 = vmul.f32 %v1321, %v2122
          %v2187 = vmul.f32 %v1322, %v2123
          %v2188 = vmul.f32 %v1323, %v2124
          %v2189 = vmul.f32 %v1324, %v2125
          %v2190 = vmul.f32 %v1325, %v2126
          %v2191 = vmul.f32 %v1326, %v2127
          %v2192 = vmul.f32 %v1327, %v2128
          %v2193 = vmul.f32 %v1328, %v2129
          %v2194 = vmul.f32 %v1329, %v2130
          %v2195 = vmul.f32 %v1330, %v2131
          %v2196 = vmul.f32 %v1331, %v2132
          %v2197 = vmul.f32 %v1332, %v2133
          %v2198 = vmul.f32 %v1333, %v2134
          %v2199 = vmul.f32 %v1334, %v2135
          %v2200 = vmul.f32 %v1335, %v2136
          %v2201 = vmul.f32 %v1336, %v2137
          %v2202 = vmul.f32 %v1337, %v2138
          %v2203 = vmul.f32 %v1338, %v2139
          %v2204 = vmul.f32 %v1339, %v2140
          %v2205 = vmul.f32 %v1340, %v2141
          %v2206 = vmul.f32 %v1341, %v2142
          %v2207 = vmul.f32 %v1342, %v2143
          %v2208 = vmul.f32 %v1343, %v2144
          %v2209 = vmul.f32 %v1344, %v2145
          %v2210 = vmul.f32 %v1345, %v2146
          %v2211 = vmul.f32 %v1346, %v2147
          %v2212 = vmul.f32 %v1347, %v2148
          %v2213 = vmul.f32 %v1348, %v2149
          %v2214 = vmul.f32 %v1349, %v2150
          %v2215 = vmul.f32 %v1350, %v2151
          %v2216 = vmul.f32 %v1351, %v2152
          %v2217 = vmul.f32 %v1352, %v2153
          %v2218 = vmul.f32 %v1353, %v2154
          %v2219 = vmul.f32 %v1354, %v2155
          %v2220 = vmul.f32 %v1355, %v2156
          %v2221 = vmul.f32 %v1356, %v2157
          %v2222 = vmul.f32 %v1357, %v2158
          %v2223 = vmul.f32 %v1358, %v2159
          %v2224 = vmul.f32 %v1359, %v2160
          %v2225 = vmul.f32 %v1360, %v2161
          %v2226 = vmul.f32 %v1361, %v2162
          %v2227 = vmul.f32 %v1362, %v2163
          %v2228 = vmul.f32 %v1363, %v2164
          %v2229 = vmul.f32 %v1364, %v2165
          %v2230 = vmul.f32 %v1365, %v2166
          %v2231 = vmul.f32 %v1366, %v2167
          %v2232 = vmul.f32 %v1367, %v2168
          %v2233 = vmul.f32 %v1368, %v2169
          %v2234 = vmul.f32 %v1369, %v2170
          %v2235 = vmul.f32 %v1370, %v2171
          %v2236 = vmul.f32 %v1371, %v2172
          %v2237 = vmul.f32 %v1372, %v2173
          %v2238 = vmul.f32 %v1373, %v2174
          %v2239 = vmul.f32 %v1374, %v2175
          %v2240 = vmul.f32 %v1375, %v2176
          %v2241 = vmul.f32 %v1376, %v2177
          %v2242 = vmul.f32 %v1377, %v2178
          %v2243 = vmul.f32 %v1378, %v2179
          %v2244 = vmul.f32 %v1379, %v2180
          %v2245 = vmul.f32 %v1380, %v2181
          %v2246 = vmul.f32 %v1381, %v2182
          %v2247 = vmul.f32 %v1382, %v2183
          %v2248 = vmul.f32 %v2184, 1.442695
          %v2249 = vpow.pop %v2248
          %v2250 = vmul.f32 %v2185, 1.442695
          %v2251 = vpow.pop %v2250
          %v2252 = vmul.f32 %v2186, 1.442695
          %v2253 = vpow.pop %v2252
          %v2254 = vmul.f32 %v2187, 1.442695
          %v2255 = vpow.pop %v2254
          %v2256 = vmul.f32 %v2188, 1.442695
          %v2257 = vpow.pop %v2256
          %v2258 = vmul.f32 %v2189, 1.442695
          %v2259 = vpow.pop %v2258
          %v2260 = vmul.f32 %v2190, 1.442695
          %v2261 = vpow.pop %v2260
          %v2262 = vmul.f32 %v2191, 1.442695
          %v2263 = vpow.pop %v2262
          %v2264 = vmul.f32 %v2192, 1.442695
          %v2265 = vpow.pop %v2264
          %v2266 = vmul.f32 %v2193, 1.442695
          %v2267 = vpow.pop %v2266
          %v2268 = vmul.f32 %v2194, 1.442695
          %v2269 = vpow.pop %v2268
          %v2270 = vmul.f32 %v2195, 1.442695
          %v2271 = vpow.pop %v2270
          %v2272 = vmul.f32 %v2196, 1.442695
          %v2273 = vpow.pop %v2272
          %v2274 = vmul.f32 %v2197, 1.442695
          %v2275 = vpow.pop %v2274
          %v2276 = vmul.f32 %v2198, 1.442695
          %v2277 = vpow.pop %v2276
          %v2278 = vmul.f32 %v2199, 1.442695
          %v2279 = vpow.pop %v2278
          %v2280 = vmul.f32 %v2200, 1.442695
          %v2281 = vpow.pop %v2280
          %v2282 = vmul.f32 %v2201, 1.442695
          %v2283 = vpow.pop %v2282
          %v2284 = vmul.f32 %v2202, 1.442695
          %v2285 = vpow.pop %v2284
          %v2286 = vmul.f32 %v2203, 1.442695
          %v2287 = vpow.pop %v2286
          %v2288 = vmul.f32 %v2204, 1.442695
          %v2289 = vpow.pop %v2288
          %v2290 = vmul.f32 %v2205, 1.442695
          %v2291 = vpow.pop %v2290
          %v2292 = vmul.f32 %v2206, 1.442695
          %v2293 = vpow.pop %v2292
          %v2294 = vmul.f32 %v2207, 1.442695
          %v2295 = vpow.pop %v2294
          %v2296 = vmul.f32 %v2208, 1.442695
          %v2297 = vpow.pop %v2296
          %v2298 = vmul.f32 %v2209, 1.442695
          %v2299 = vpow.pop %v2298
          %v2300 = vmul.f32 %v2210, 1.442695
          %v2301 = vpow.pop %v2300
          %v2302 = vmul.f32 %v2211, 1.442695
          %v2303 = vpow.pop %v2302
          %v2304 = vmul.f32 %v2212, 1.442695
          %v2305 = vpow.pop %v2304
          %v2306 = vmul.f32 %v2213, 1.442695
          %v2307 = vpow.pop %v2306
          %v2308 = vmul.f32 %v2214, 1.442695
          %v2309 = vpow.pop %v2308
          %v2310 = vmul.f32 %v2215, 1.442695
          %v2311 = vpow.pop %v2310
          %v2312 = vmul.f32 %v2216, 1.442695
          %v2313 = vpow.pop %v2312
          %v2314 = vmul.f32 %v2217, 1.442695
          %v2315 = vpow.pop %v2314
          %v2316 = vmul.f32 %v2218, 1.442695
          %v2317 = vpow.pop %v2316
          %v2318 = vmul.f32 %v2219, 1.442695
          %v2319 = vpow.pop %v2318
          %v2320 = vmul.f32 %v2220, 1.442695
          %v2321 = vpow.pop %v2320
          %v2322 = vmul.f32 %v2221, 1.442695
          %v2323 = vpow.pop %v2322
          %v2324 = vmul.f32 %v2222, 1.442695
          %v2325 = vpow.pop %v2324
          %v2326 = vmul.f32 %v2223, 1.442695
          %v2327 = vpow.pop %v2326
          %v2328 = vmul.f32 %v2224, 1.442695
          %v2329 = vpow.pop %v2328
          %v2330 = vmul.f32 %v2225, 1.442695
          %v2331 = vpow.pop %v2330
          %v2332 = vmul.f32 %v2226, 1.442695
          %v2333 = vpow.pop %v2332
          %v2334 = vmul.f32 %v2227, 1.442695
          %v2335 = vpow.pop %v2334
          %v2336 = vmul.f32 %v2228, 1.442695
          %v2337 = vpow.pop %v2336
          %v2338 = vmul.f32 %v2229, 1.442695
          %v2339 = vpow.pop %v2338
          %v2340 = vmul.f32 %v2230, 1.442695
          %v2341 = vpow.pop %v2340
          %v2342 = vmul.f32 %v2231, 1.442695
          %v2343 = vpow.pop %v2342
          %v2344 = vmul.f32 %v2232, 1.442695
          %v2345 = vpow.pop %v2344
          %v2346 = vmul.f32 %v2233, 1.442695
          %v2347 = vpow.pop %v2346
          %v2348 = vmul.f32 %v2234, 1.442695
          %v2349 = vpow.pop %v2348
          %v2350 = vmul.f32 %v2235, 1.442695
          %v2351 = vpow.pop %v2350
          %v2352 = vmul.f32 %v2236, 1.442695
          %v2353 = vpow.pop %v2352
          %v2354 = vmul.f32 %v2237, 1.442695
          %v2355 = vpow.pop %v2354
          %v2356 = vmul.f32 %v2238, 1.442695
          %v2357 = vpow.pop %v2356
          %v2358 = vmul.f32 %v2239, 1.442695
          %v2359 = vpow.pop %v2358
          %v2360 = vmul.f32 %v2240, 1.442695
          %v2361 = vpow.pop %v2360
          %v2362 = vmul.f32 %v2241, 1.442695
          %v2363 = vpow.pop %v2362
          %v2364 = vmul.f32 %v2242, 1.442695
          %v2365 = vpow.pop %v2364
          %v2366 = vmul.f32 %v2243, 1.442695
          %v2367 = vpow.pop %v2366
          %v2368 = vmul.f32 %v2244, 1.442695
          %v2369 = vpow.pop %v2368
          %v2370 = vmul.f32 %v2245, 1.442695
          %v2371 = vpow.pop %v2370
          %v2372 = vmul.f32 %v2246, 1.442695
          %v2373 = vpow.pop %v2372
          %v2374 = vmul.f32 %v2247, 1.442695
          %v2375 = vpow.pop %v2374
          %v2376 = vsel %vm1520, %v2249, 0.0
          %v2377 = vsel %vm1521, %v2251, 0.0
          %v2378 = vsel %vm1522, %v2253, 0.0
          %v2379 = vsel %vm1523, %v2255, 0.0
          %v2380 = vsel %vm1524, %v2257, 0.0
          %v2381 = vsel %vm1525, %v2259, 0.0
          %v2382 = vsel %vm1526, %v2261, 0.0
          %v2383 = vsel %vm1527, %v2263, 0.0
          %v2384 = vsel %vm1528, %v2265, 0.0
          %v2385 = vsel %vm1529, %v2267, 0.0
          %v2386 = vsel %vm1530, %v2269, 0.0
          %v2387 = vsel %vm1531, %v2271, 0.0
          %v2388 = vsel %vm1532, %v2273, 0.0
          %v2389 = vsel %vm1533, %v2275, 0.0
          %v2390 = vsel %vm1534, %v2277, 0.0
          %v2391 = vsel %vm1535, %v2279, 0.0
          %v2392 = vsel %vm1536, %v2281, 0.0
          %v2393 = vsel %vm1537, %v2283, 0.0
          %v2394 = vsel %vm1538, %v2285, 0.0
          %v2395 = vsel %vm1539, %v2287, 0.0
          %v2396 = vsel %vm1540, %v2289, 0.0
          %v2397 = vsel %vm1541, %v2291, 0.0
          %v2398 = vsel %vm1542, %v2293, 0.0
          %v2399 = vsel %vm1543, %v2295, 0.0
          %v2400 = vsel %vm1544, %v2297, 0.0
          %v2401 = vsel %vm1545, %v2299, 0.0
          %v2402 = vsel %vm1546, %v2301, 0.0
          %v2403 = vsel %vm1547, %v2303, 0.0
          %v2404 = vsel %vm1548, %v2305, 0.0
          %v2405 = vsel %vm1549, %v2307, 0.0
          %v2406 = vsel %vm1550, %v2309, 0.0
          %v2407 = vsel %vm1551, %v2311, 0.0
          %v2408 = vsel %vm1552, %v2313, 0.0
          %v2409 = vsel %vm1553, %v2315, 0.0
          %v2410 = vsel %vm1554, %v2317, 0.0
          %v2411 = vsel %vm1555, %v2319, 0.0
          %v2412 = vsel %vm1556, %v2321, 0.0
          %v2413 = vsel %vm1557, %v2323, 0.0
          %v2414 = vsel %vm1558, %v2325, 0.0
          %v2415 = vsel %vm1559, %v2327, 0.0
          %v2416 = vsel %vm1560, %v2329, 0.0
          %v2417 = vsel %vm1561, %v2331, 0.0
          %v2418 = vsel %vm1562, %v2333, 0.0
          %v2419 = vsel %vm1563, %v2335, 0.0
          %v2420 = vsel %vm1564, %v2337, 0.0
          %v2421 = vsel %vm1565, %v2339, 0.0
          %v2422 = vsel %vm1566, %v2341, 0.0
          %v2423 = vsel %vm1567, %v2343, 0.0
          %v2424 = vsel %vm1568, %v2345, 0.0
          %v2425 = vsel %vm1569, %v2347, 0.0
          %v2426 = vsel %vm1570, %v2349, 0.0
          %v2427 = vsel %vm1571, %v2351, 0.0
          %v2428 = vsel %vm1572, %v2353, 0.0
          %v2429 = vsel %vm1573, %v2355, 0.0
          %v2430 = vsel %vm1574, %v2357, 0.0
          %v2431 = vsel %vm1575, %v2359, 0.0
          %v2432 = vsel %vm1576, %v2361, 0.0
          %v2433 = vsel %vm1577, %v2363, 0.0
          %v2434 = vsel %vm1578, %v2365, 0.0
          %v2435 = vsel %vm1579, %v2367, 0.0
          %v2436 = vsel %vm1580, %v2369, 0.0
          %v2437 = vsel %vm1581, %v2371, 0.0
          %v2438 = vsel %vm1582, %v2373, 0.0
          %v2439 = vsel %vm1583, %v2375, 0.0
          %v2440 = vld [vmem:[#allocation4] sm:$0xff]
          %v2441 = vld [vmem:[#allocation4 + $0x8] sm:$0xff]
          %v2442 = vld [vmem:[#allocation4 + $0x10] sm:$0xff]
          %v2443 = vld [vmem:[#allocation4 + $0x18] sm:$0xff]
          %v2444 = vld [vmem:[#allocation4 + $0x20] sm:$0xff]
          %v2445 = vld [vmem:[#allocation4 + $0x28] sm:$0xff]
          %v2446 = vld [vmem:[#allocation4 + $0x30] sm:$0xff]
          %v2447 = vld [vmem:[#allocation4 + $0x38] sm:$0xff]
          %v2448 = vld [vmem:[#allocation4 + $0x40] sm:$0xff]
          %v2449 = vld [vmem:[#allocation4 + $0x48] sm:$0xff]
          %v2450 = vld [vmem:[#allocation4 + $0x50] sm:$0xff]
          %v2451 = vld [vmem:[#allocation4 + $0x58] sm:$0xff]
          %v2452 = vld [vmem:[#allocation4 + $0x60] sm:$0xff]
          %v2453 = vld [vmem:[#allocation4 + $0x68] sm:$0xff]
          %v2454 = vld [vmem:[#allocation4 + $0x70] sm:$0xff]
          %v2455 = vld [vmem:[#allocation4 + $0x78] sm:$0xff]
          %v2456 = vld [vmem:[#allocation4 + $0x80] sm:$0xff]
          %v2457 = vld [vmem:[#allocation4 + $0x88] sm:$0xff]
          %v2458 = vld [vmem:[#allocation4 + $0x90] sm:$0xff]
          %v2459 = vld [vmem:[#allocation4 + $0x98] sm:$0xff]
          %v2460 = vld [vmem:[#allocation4 + $0xa0] sm:$0xff]
          %v2461 = vld [vmem:[#allocation4 + $0xa8] sm:$0xff]
          %v2462 = vld [vmem:[#allocation4 + $0xb0] sm:$0xff]
          %v2463 = vld [vmem:[#allocation4 + $0xb8] sm:$0xff]
          %v2464 = vld [vmem:[#allocation4 + $0xc0] sm:$0xff]
          %v2465 = vld [vmem:[#allocation4 + $0xc8] sm:$0xff]
          %v2466 = vld [vmem:[#allocation4 + $0xd0] sm:$0xff]
          %v2467 = vld [vmem:[#allocation4 + $0xd8] sm:$0xff]
          %v2468 = vld [vmem:[#allocation4 + $0xe0] sm:$0xff]
          %v2469 = vld [vmem:[#allocation4 + $0xe8] sm:$0xff]
          %v2470 = vld [vmem:[#allocation4 + $0xf0] sm:$0xff]
          %v2471 = vld [vmem:[#allocation4 + $0xf8] sm:$0xff]
          %v2472 = vadd.f32 %v2376, %v2377
          %2473 = vadd.xlane.f32.xlu0 %v2472
          %v2474 = vpop.xlane.xlu0 %2473
          %v2475 = vadd.f32 %v2378, %v2379
          %2476 = vadd.xlane.f32.xlu0 %v2475
          %v2477 = vpop.xlane.xlu0 %2476
          %v2478 = vadd.f32 %v2380, %v2381
          %2479 = vadd.xlane.f32.xlu0 %v2478
          %v2480 = vpop.xlane.xlu0 %2479
          %v2481 = vadd.f32 %v2382, %v2383
          %2482 = vadd.xlane.f32.xlu0 %v2481
          %v2483 = vpop.xlane.xlu0 %2482
          %v2484 = vadd.f32 %v2384, %v2385
          %2485 = vadd.xlane.f32.xlu0 %v2484
          %v2486 = vpop.xlane.xlu0 %2485
          %v2487 = vadd.f32 %v2386, %v2387
          %2488 = vadd.xlane.f32.xlu0 %v2487
          %v2489 = vpop.xlane.xlu0 %2488
          %v2490 = vadd.f32 %v2388, %v2389
          %2491 = vadd.xlane.f32.xlu0 %v2490
          %v2492 = vpop.xlane.xlu0 %2491
          %v2493 = vadd.f32 %v2390, %v2391
          %2494 = vadd.xlane.f32.xlu0 %v2493
          %v2495 = vpop.xlane.xlu0 %2494
          %v2496 = vadd.f32 %v2392, %v2393
          %2497 = vadd.xlane.f32.xlu0 %v2496
          %v2498 = vpop.xlane.xlu0 %2497
          %v2499 = vadd.f32 %v2394, %v2395
          %2500 = vadd.xlane.f32.xlu0 %v2499
          %v2501 = vpop.xlane.xlu0 %2500
          %v2502 = vadd.f32 %v2396, %v2397
          %2503 = vadd.xlane.f32.xlu0 %v2502
          %v2504 = vpop.xlane.xlu0 %2503
          %v2505 = vadd.f32 %v2398, %v2399
          %2506 = vadd.xlane.f32.xlu0 %v2505
          %v2507 = vpop.xlane.xlu0 %2506
          %v2508 = vadd.f32 %v2400, %v2401
          %2509 = vadd.xlane.f32.xlu0 %v2508
          %v2510 = vpop.xlane.xlu0 %2509
          %v2511 = vadd.f32 %v2402, %v2403
          %2512 = vadd.xlane.f32.xlu0 %v2511
          %v2513 = vpop.xlane.xlu0 %2512
          %v2514 = vadd.f32 %v2404, %v2405
          %2515 = vadd.xlane.f32.xlu0 %v2514
          %v2516 = vpop.xlane.xlu0 %2515
          %v2517 = vadd.f32 %v2406, %v2407
          %2518 = vadd.xlane.f32.xlu0 %v2517
          %v2519 = vpop.xlane.xlu0 %2518
          %v2520 = vadd.f32 %v2408, %v2409
          %2521 = vadd.xlane.f32.xlu0 %v2520
          %v2522 = vpop.xlane.xlu0 %2521
          %v2523 = vadd.f32 %v2410, %v2411
          %2524 = vadd.xlane.f32.xlu0 %v2523
          %v2525 = vpop.xlane.xlu0 %2524
          %v2526 = vadd.f32 %v2412, %v2413
          %2527 = vadd.xlane.f32.xlu0 %v2526
          %v2528 = vpop.xlane.xlu0 %2527
          %v2529 = vadd.f32 %v2414, %v2415
          %2530 = vadd.xlane.f32.xlu0 %v2529
          %v2531 = vpop.xlane.xlu0 %2530
          %v2532 = vadd.f32 %v2416, %v2417
          %2533 = vadd.xlane.f32.xlu0 %v2532
          %v2534 = vpop.xlane.xlu0 %2533
          %v2535 = vadd.f32 %v2418, %v2419
          %2536 = vadd.xlane.f32.xlu0 %v2535
          %v2537 = vpop.xlane.xlu0 %2536
          %v2538 = vadd.f32 %v2420, %v2421
          %2539 = vadd.xlane.f32.xlu0 %v2538
          %v2540 = vpop.xlane.xlu0 %2539
          %v2541 = vadd.f32 %v2422, %v2423
          %2542 = vadd.xlane.f32.xlu0 %v2541
          %v2543 = vpop.xlane.xlu0 %2542
          %v2544 = vadd.f32 %v2424, %v2425
          %2545 = vadd.xlane.f32.xlu0 %v2544
          %v2546 = vpop.xlane.xlu0 %2545
          %v2547 = vadd.f32 %v2426, %v2427
          %2548 = vadd.xlane.f32.xlu0 %v2547
          %v2549 = vpop.xlane.xlu0 %2548
          %v2550 = vadd.f32 %v2428, %v2429
          %2551 = vadd.xlane.f32.xlu0 %v2550
          %v2552 = vpop.xlane.xlu0 %2551
          %v2553 = vadd.f32 %v2430, %v2431
          %2554 = vadd.xlane.f32.xlu0 %v2553
          %v2555 = vpop.xlane.xlu0 %2554
          %v2556 = vadd.f32 %v2432, %v2433
          %2557 = vadd.xlane.f32.xlu0 %v2556
          %v2558 = vpop.xlane.xlu0 %2557
          %v2559 = vadd.f32 %v2434, %v2435
          %2560 = vadd.xlane.f32.xlu0 %v2559
          %v2561 = vpop.xlane.xlu0 %2560
          %v2562 = vadd.f32 %v2436, %v2437
          %2563 = vadd.xlane.f32.xlu0 %v2562
          %v2564 = vpop.xlane.xlu0 %2563
          %v2565 = vadd.f32 %v2438, %v2439
          %2566 = vadd.xlane.f32.xlu0 %v2565
          %v2567 = vpop.xlane.xlu0 %2566
          %v2568 = vadd.f32 %v2440, %v2474
          %v2569 = vadd.f32 %v2441, %v2477
          %v2570 = vadd.f32 %v2442, %v2480
          %v2571 = vadd.f32 %v2443, %v2483
          %v2572 = vadd.f32 %v2444, %v2486
          %v2573 = vadd.f32 %v2445, %v2489
          %v2574 = vadd.f32 %v2446, %v2492
          %v2575 = vadd.f32 %v2447, %v2495
          %v2576 = vadd.f32 %v2448, %v2498
          %v2577 = vadd.f32 %v2449, %v2501
          %v2578 = vadd.f32 %v2450, %v2504
          %v2579 = vadd.f32 %v2451, %v2507
          %v2580 = vadd.f32 %v2452, %v2510
          %v2581 = vadd.f32 %v2453, %v2513
          %v2582 = vadd.f32 %v2454, %v2516
          %v2583 = vadd.f32 %v2455, %v2519
          %v2584 = vadd.f32 %v2456, %v2522
          %v2585 = vadd.f32 %v2457, %v2525
          %v2586 = vadd.f32 %v2458, %v2528
          %v2587 = vadd.f32 %v2459, %v2531
          %v2588 = vadd.f32 %v2460, %v2534
          %v2589 = vadd.f32 %v2461, %v2537
          %v2590 = vadd.f32 %v2462, %v2540
          %v2591 = vadd.f32 %v2463, %v2543
          %v2592 = vadd.f32 %v2464, %v2546
          %v2593 = vadd.f32 %v2465, %v2549
          %v2594 = vadd.f32 %v2466, %v2552
          %v2595 = vadd.f32 %v2467, %v2555
          %v2596 = vadd.f32 %v2468, %v2558
          %v2597 = vadd.f32 %v2469, %v2561
          %v2598 = vadd.f32 %v2470, %v2564
          %v2599 = vadd.f32 %v2471, %v2567
          %vm2600 = vcmask 7168
          %2601 = vst.msk [vmem:[#allocation4] sm:$0xff] %vm2600, %v2568
          %2602 = vst.msk [vmem:[#allocation4 + $0x8] sm:$0xff] %vm2600, %v2569
          %2603 = vst.msk [vmem:[#allocation4 + $0x10] sm:$0xff] %vm2600, %v2570
          %2604 = vst.msk [vmem:[#allocation4 + $0x18] sm:$0xff] %vm2600, %v2571
          %2605 = vst.msk [vmem:[#allocation4 + $0x20] sm:$0xff] %vm2600, %v2572
          %2606 = vst.msk [vmem:[#allocation4 + $0x28] sm:$0xff] %vm2600, %v2573
          %2607 = vst.msk [vmem:[#allocation4 + $0x30] sm:$0xff] %vm2600, %v2574
          %2608 = vst.msk [vmem:[#allocation4 + $0x38] sm:$0xff] %vm2600, %v2575
          %2609 = vst.msk [vmem:[#allocation4 + $0x40] sm:$0xff] %vm2600, %v2576
          %2610 = vst.msk [vmem:[#allocation4 + $0x48] sm:$0xff] %vm2600, %v2577
          %2611 = vst.msk [vmem:[#allocation4 + $0x50] sm:$0xff] %vm2600, %v2578
          %2612 = vst.msk [vmem:[#allocation4 + $0x58] sm:$0xff] %vm2600, %v2579
          %2613 = vst.msk [vmem:[#allocation4 + $0x60] sm:$0xff] %vm2600, %v2580
          %2614 = vst.msk [vmem:[#allocation4 + $0x68] sm:$0xff] %vm2600, %v2581
          %2615 = vst.msk [vmem:[#allocation4 + $0x70] sm:$0xff] %vm2600, %v2582
          %2616 = vst.msk [vmem:[#allocation4 + $0x78] sm:$0xff] %vm2600, %v2583
          %2617 = vst.msk [vmem:[#allocation4 + $0x80] sm:$0xff] %vm2600, %v2584
          %2618 = vst.msk [vmem:[#allocation4 + $0x88] sm:$0xff] %vm2600, %v2585
          %2619 = vst.msk [vmem:[#allocation4 + $0x90] sm:$0xff] %vm2600, %v2586
          %2620 = vst.msk [vmem:[#allocation4 + $0x98] sm:$0xff] %vm2600, %v2587
          %2621 = vst.msk [vmem:[#allocation4 + $0xa0] sm:$0xff] %vm2600, %v2588
          %2622 = vst.msk [vmem:[#allocation4 + $0xa8] sm:$0xff] %vm2600, %v2589
          %2623 = vst.msk [vmem:[#allocation4 + $0xb0] sm:$0xff] %vm2600, %v2590
          %2624 = vst.msk [vmem:[#allocation4 + $0xb8] sm:$0xff] %vm2600, %v2591
          %2625 = vst.msk [vmem:[#allocation4 + $0xc0] sm:$0xff] %vm2600, %v2592
          %2626 = vst.msk [vmem:[#allocation4 + $0xc8] sm:$0xff] %vm2600, %v2593
          %2627 = vst.msk [vmem:[#allocation4 + $0xd0] sm:$0xff] %vm2600, %v2594
          %2628 = vst.msk [vmem:[#allocation4 + $0xd8] sm:$0xff] %vm2600, %v2595
          %2629 = vst.msk [vmem:[#allocation4 + $0xe0] sm:$0xff] %vm2600, %v2596
          %2630 = vst.msk [vmem:[#allocation4 + $0xe8] sm:$0xff] %vm2600, %v2597
          %2631 = vst.msk [vmem:[#allocation4 + $0xf0] sm:$0xff] %vm2600, %v2598
          %2632 = vst.msk [vmem:[#allocation4 + $0xf8] sm:$0xff] %vm2600, %v2599
          %v2633 = vld [vmem:[#allocation5] sm:$0xff]
          %v2634 = vld [vmem:[#allocation5 + $0x8] sm:$0xff]
          %v2635 = vld [vmem:[#allocation5 + $0x10] sm:$0xff]
          %v2636 = vld [vmem:[#allocation5 + $0x18] sm:$0xff]
          %v2637 = vld [vmem:[#allocation5 + $0x20] sm:$0xff]
          %v2638 = vld [vmem:[#allocation5 + $0x28] sm:$0xff]
          %v2639 = vld [vmem:[#allocation5 + $0x30] sm:$0xff]
          %v2640 = vld [vmem:[#allocation5 + $0x38] sm:$0xff]
          %v2641 = vld [vmem:[#allocation5 + $0x40] sm:$0xff]
          %v2642 = vld [vmem:[#allocation5 + $0x48] sm:$0xff]
          %v2643 = vld [vmem:[#allocation5 + $0x50] sm:$0xff]
          %v2644 = vld [vmem:[#allocation5 + $0x58] sm:$0xff]
          %v2645 = vld [vmem:[#allocation5 + $0x60] sm:$0xff]
          %v2646 = vld [vmem:[#allocation5 + $0x68] sm:$0xff]
          %v2647 = vld [vmem:[#allocation5 + $0x70] sm:$0xff]
          %v2648 = vld [vmem:[#allocation5 + $0x78] sm:$0xff]
          %v2649 = vld [vmem:[#allocation5 + $0x80] sm:$0xff]
          %v2650 = vld [vmem:[#allocation5 + $0x88] sm:$0xff]
          %v2651 = vld [vmem:[#allocation5 + $0x90] sm:$0xff]
          %v2652 = vld [vmem:[#allocation5 + $0x98] sm:$0xff]
          %v2653 = vld [vmem:[#allocation5 + $0xa0] sm:$0xff]
          %v2654 = vld [vmem:[#allocation5 + $0xa8] sm:$0xff]
          %v2655 = vld [vmem:[#allocation5 + $0xb0] sm:$0xff]
          %v2656 = vld [vmem:[#allocation5 + $0xb8] sm:$0xff]
          %v2657 = vld [vmem:[#allocation5 + $0xc0] sm:$0xff]
          %v2658 = vld [vmem:[#allocation5 + $0xc8] sm:$0xff]
          %v2659 = vld [vmem:[#allocation5 + $0xd0] sm:$0xff]
          %v2660 = vld [vmem:[#allocation5 + $0xd8] sm:$0xff]
          %v2661 = vld [vmem:[#allocation5 + $0xe0] sm:$0xff]
          %v2662 = vld [vmem:[#allocation5 + $0xe8] sm:$0xff]
          %v2663 = vld [vmem:[#allocation5 + $0xf0] sm:$0xff]
          %v2664 = vld [vmem:[#allocation5 + $0xf8] sm:$0xff]
          %v2665 = vsel %vm2056, %v1319, 0.0
          %v2666 = vsel %vm2057, %v1320, 0.0
          %v2667 = vsel %vm2058, %v1321, 0.0
          %v2668 = vsel %vm2059, %v1322, 0.0
          %v2669 = vsel %vm2060, %v1323, 0.0
          %v2670 = vsel %vm2061, %v1324, 0.0
          %v2671 = vsel %vm2062, %v1325, 0.0
          %v2672 = vsel %vm2063, %v1326, 0.0
          %v2673 = vsel %vm2064, %v1327, 0.0
          %v2674 = vsel %vm2065, %v1328, 0.0
          %v2675 = vsel %vm2066, %v1329, 0.0
          %v2676 = vsel %vm2067, %v1330, 0.0
          %v2677 = vsel %vm2068, %v1331, 0.0
          %v2678 = vsel %vm2069, %v1332, 0.0
          %v2679 = vsel %vm2070, %v1333, 0.0
          %v2680 = vsel %vm2071, %v1334, 0.0
          %v2681 = vsel %vm2072, %v1335, 0.0
          %v2682 = vsel %vm2073, %v1336, 0.0
          %v2683 = vsel %vm2074, %v1337, 0.0
          %v2684 = vsel %vm2075, %v1338, 0.0
          %v2685 = vsel %vm2076, %v1339, 0.0
          %v2686 = vsel %vm2077, %v1340, 0.0
          %v2687 = vsel %vm2078, %v1341, 0.0
          %v2688 = vsel %vm2079, %v1342, 0.0
          %v2689 = vsel %vm2080, %v1343, 0.0
          %v2690 = vsel %vm2081, %v1344, 0.0
          %v2691 = vsel %vm2082, %v1345, 0.0
          %v2692 = vsel %vm2083, %v1346, 0.0
          %v2693 = vsel %vm2084, %v1347, 0.0
          %v2694 = vsel %vm2085, %v1348, 0.0
          %v2695 = vsel %vm2086, %v1349, 0.0
          %v2696 = vsel %vm2087, %v1350, 0.0
          %v2697 = vsel %vm2088, %v1351, 0.0
          %v2698 = vsel %vm2089, %v1352, 0.0
          %v2699 = vsel %vm2090, %v1353, 0.0
          %v2700 = vsel %vm2091, %v1354, 0.0
          %v2701 = vsel %vm2092, %v1355, 0.0
          %v2702 = vsel %vm2093, %v1356, 0.0
          %v2703 = vsel %vm2094, %v1357, 0.0
          %v2704 = vsel %vm2095, %v1358, 0.0
          %v2705 = vsel %vm2096, %v1359, 0.0
          %v2706 = vsel %vm2097, %v1360, 0.0
          %v2707 = vsel %vm2098, %v1361, 0.0
          %v2708 = vsel %vm2099, %v1362, 0.0
          %v2709 = vsel %vm2100, %v1363, 0.0
          %v2710 = vsel %vm2101, %v1364, 0.0
          %v2711 = vsel %vm2102, %v1365, 0.0
          %v2712 = vsel %vm2103, %v1366, 0.0
          %v2713 = vsel %vm2104, %v1367, 0.0
          %v2714 = vsel %vm2105, %v1368, 0.0
          %v2715 = vsel %vm2106, %v1369, 0.0
          %v2716 = vsel %vm2107, %v1370, 0.0
          %v2717 = vsel %vm2108, %v1371, 0.0
          %v2718 = vsel %vm2109, %v1372, 0.0
          %v2719 = vsel %vm2110, %v1373, 0.0
          %v2720 = vsel %vm2111, %v1374, 0.0
          %v2721 = vsel %vm2112, %v1375, 0.0
          %v2722 = vsel %vm2113, %v1376, 0.0
          %v2723 = vsel %vm2114, %v1377, 0.0
          %v2724 = vsel %vm2115, %v1378, 0.0
          %v2725 = vsel %vm2116, %v1379, 0.0
          %v2726 = vsel %vm2117, %v1380, 0.0
          %v2727 = vsel %vm2118, %v1381, 0.0
          %v2728 = vsel %vm2119, %v1382, 0.0
          %v2729 = vadd.f32 %v2665, %v2666
          %2730 = vadd.xlane.f32.xlu0 %v2729
          %v2731 = vpop.xlane.xlu0 %2730
          %v2732 = vadd.f32 %v2667, %v2668
          %2733 = vadd.xlane.f32.xlu0 %v2732
          %v2734 = vpop.xlane.xlu0 %2733
          %v2735 = vadd.f32 %v2669, %v2670
          %2736 = vadd.xlane.f32.xlu0 %v2735
          %v2737 = vpop.xlane.xlu0 %2736
          %v2738 = vadd.f32 %v2671, %v2672
          %2739 = vadd.xlane.f32.xlu0 %v2738
          %v2740 = vpop.xlane.xlu0 %2739
          %v2741 = vadd.f32 %v2673, %v2674
          %2742 = vadd.xlane.f32.xlu0 %v2741
          %v2743 = vpop.xlane.xlu0 %2742
          %v2744 = vadd.f32 %v2675, %v2676
          %2745 = vadd.xlane.f32.xlu0 %v2744
          %v2746 = vpop.xlane.xlu0 %2745
          %v2747 = vadd.f32 %v2677, %v2678
          %2748 = vadd.xlane.f32.xlu0 %v2747
          %v2749 = vpop.xlane.xlu0 %2748
          %v2750 = vadd.f32 %v2679, %v2680
          %2751 = vadd.xlane.f32.xlu0 %v2750
          %v2752 = vpop.xlane.xlu0 %2751
          %v2753 = vadd.f32 %v2681, %v2682
          %2754 = vadd.xlane.f32.xlu0 %v2753
          %v2755 = vpop.xlane.xlu0 %2754
          %v2756 = vadd.f32 %v2683, %v2684
          %2757 = vadd.xlane.f32.xlu0 %v2756
          %v2758 = vpop.xlane.xlu0 %2757
          %v2759 = vadd.f32 %v2685, %v2686
          %2760 = vadd.xlane.f32.xlu0 %v2759
          %v2761 = vpop.xlane.xlu0 %2760
          %v2762 = vadd.f32 %v2687, %v2688
          %2763 = vadd.xlane.f32.xlu0 %v2762
          %v2764 = vpop.xlane.xlu0 %2763
          %v2765 = vadd.f32 %v2689, %v2690
          %2766 = vadd.xlane.f32.xlu0 %v2765
          %v2767 = vpop.xlane.xlu0 %2766
          %v2768 = vadd.f32 %v2691, %v2692
          %2769 = vadd.xlane.f32.xlu0 %v2768
          %v2770 = vpop.xlane.xlu0 %2769
          %v2771 = vadd.f32 %v2693, %v2694
          %2772 = vadd.xlane.f32.xlu0 %v2771
          %v2773 = vpop.xlane.xlu0 %2772
          %v2774 = vadd.f32 %v2695, %v2696
          %2775 = vadd.xlane.f32.xlu0 %v2774
          %v2776 = vpop.xlane.xlu0 %2775
          %v2777 = vadd.f32 %v2697, %v2698
          %2778 = vadd.xlane.f32.xlu0 %v2777
          %v2779 = vpop.xlane.xlu0 %2778
          %v2780 = vadd.f32 %v2699, %v2700
          %2781 = vadd.xlane.f32.xlu0 %v2780
          %v2782 = vpop.xlane.xlu0 %2781
          %v2783 = vadd.f32 %v2701, %v2702
          %2784 = vadd.xlane.f32.xlu0 %v2783
          %v2785 = vpop.xlane.xlu0 %2784
          %v2786 = vadd.f32 %v2703, %v2704
          %2787 = vadd.xlane.f32.xlu0 %v2786
          %v2788 = vpop.xlane.xlu0 %2787
          %v2789 = vadd.f32 %v2705, %v2706
          %2790 = vadd.xlane.f32.xlu0 %v2789
          %v2791 = vpop.xlane.xlu0 %2790
          %v2792 = vadd.f32 %v2707, %v2708
          %2793 = vadd.xlane.f32.xlu0 %v2792
          %v2794 = vpop.xlane.xlu0 %2793
          %v2795 = vadd.f32 %v2709, %v2710
          %2796 = vadd.xlane.f32.xlu0 %v2795
          %v2797 = vpop.xlane.xlu0 %2796
          %v2798 = vadd.f32 %v2711, %v2712
          %2799 = vadd.xlane.f32.xlu0 %v2798
          %v2800 = vpop.xlane.xlu0 %2799
          %v2801 = vadd.f32 %v2713, %v2714
          %2802 = vadd.xlane.f32.xlu0 %v2801
          %v2803 = vpop.xlane.xlu0 %2802
          %v2804 = vadd.f32 %v2715, %v2716
          %2805 = vadd.xlane.f32.xlu0 %v2804
          %v2806 = vpop.xlane.xlu0 %2805
          %v2807 = vadd.f32 %v2717, %v2718
          %2808 = vadd.xlane.f32.xlu0 %v2807
          %v2809 = vpop.xlane.xlu0 %2808
          %v2810 = vadd.f32 %v2719, %v2720
          %2811 = vadd.xlane.f32.xlu0 %v2810
          %v2812 = vpop.xlane.xlu0 %2811
          %v2813 = vadd.f32 %v2721, %v2722
          %2814 = vadd.xlane.f32.xlu0 %v2813
          %v2815 = vpop.xlane.xlu0 %2814
          %v2816 = vadd.f32 %v2723, %v2724
          %2817 = vadd.xlane.f32.xlu0 %v2816
          %v2818 = vpop.xlane.xlu0 %2817
          %v2819 = vadd.f32 %v2725, %v2726
          %2820 = vadd.xlane.f32.xlu0 %v2819
          %v2821 = vpop.xlane.xlu0 %2820
          %v2822 = vadd.f32 %v2727, %v2728
          %2823 = vadd.xlane.f32.xlu0 %v2822
          %v2824 = vpop.xlane.xlu0 %2823
          %v2825 = vadd.f32 %v2633, %v2731
          %v2826 = vadd.f32 %v2634, %v2734
          %v2827 = vadd.f32 %v2635, %v2737
          %v2828 = vadd.f32 %v2636, %v2740
          %v2829 = vadd.f32 %v2637, %v2743
          %v2830 = vadd.f32 %v2638, %v2746
          %v2831 = vadd.f32 %v2639, %v2749
          %v2832 = vadd.f32 %v2640, %v2752
          %v2833 = vadd.f32 %v2641, %v2755
          %v2834 = vadd.f32 %v2642, %v2758
          %v2835 = vadd.f32 %v2643, %v2761
          %v2836 = vadd.f32 %v2644, %v2764
          %v2837 = vadd.f32 %v2645, %v2767
          %v2838 = vadd.f32 %v2646, %v2770
          %v2839 = vadd.f32 %v2647, %v2773
          %v2840 = vadd.f32 %v2648, %v2776
          %v2841 = vadd.f32 %v2649, %v2779
          %v2842 = vadd.f32 %v2650, %v2782
          %v2843 = vadd.f32 %v2651, %v2785
          %v2844 = vadd.f32 %v2652, %v2788
          %v2845 = vadd.f32 %v2653, %v2791
          %v2846 = vadd.f32 %v2654, %v2794
          %v2847 = vadd.f32 %v2655, %v2797
          %v2848 = vadd.f32 %v2656, %v2800
          %v2849 = vadd.f32 %v2657, %v2803
          %v2850 = vadd.f32 %v2658, %v2806
          %v2851 = vadd.f32 %v2659, %v2809
          %v2852 = vadd.f32 %v2660, %v2812
          %v2853 = vadd.f32 %v2661, %v2815
          %v2854 = vadd.f32 %v2662, %v2818
          %v2855 = vadd.f32 %v2663, %v2821
          %v2856 = vadd.f32 %v2664, %v2824
          %2857 = vst.msk [vmem:[#allocation5] sm:$0xff] %vm2600, %v2825
          %2858 = vst.msk [vmem:[#allocation5 + $0x8] sm:$0xff] %vm2600, %v2826
          %2859 = vst.msk [vmem:[#allocation5 + $0x10] sm:$0xff] %vm2600, %v2827
          %2860 = vst.msk [vmem:[#allocation5 + $0x18] sm:$0xff] %vm2600, %v2828
          %2861 = vst.msk [vmem:[#allocation5 + $0x20] sm:$0xff] %vm2600, %v2829
          %2862 = vst.msk [vmem:[#allocation5 + $0x28] sm:$0xff] %vm2600, %v2830
          %2863 = vst.msk [vmem:[#allocation5 + $0x30] sm:$0xff] %vm2600, %v2831
          %2864 = vst.msk [vmem:[#allocation5 + $0x38] sm:$0xff] %vm2600, %v2832
          %2865 = vst.msk [vmem:[#allocation5 + $0x40] sm:$0xff] %vm2600, %v2833
          %2866 = vst.msk [vmem:[#allocation5 + $0x48] sm:$0xff] %vm2600, %v2834
          %2867 = vst.msk [vmem:[#allocation5 + $0x50] sm:$0xff] %vm2600, %v2835
          %2868 = vst.msk [vmem:[#allocation5 + $0x58] sm:$0xff] %vm2600, %v2836
          %2869 = vst.msk [vmem:[#allocation5 + $0x60] sm:$0xff] %vm2600, %v2837
          %2870 = vst.msk [vmem:[#allocation5 + $0x68] sm:$0xff] %vm2600, %v2838
          %2871 = vst.msk [vmem:[#allocation5 + $0x70] sm:$0xff] %vm2600, %v2839
          %2872 = vst.msk [vmem:[#allocation5 + $0x78] sm:$0xff] %vm2600, %v2840
          %2873 = vst.msk [vmem:[#allocation5 + $0x80] sm:$0xff] %vm2600, %v2841
          %2874 = vst.msk [vmem:[#allocation5 + $0x88] sm:$0xff] %vm2600, %v2842
          %2875 = vst.msk [vmem:[#allocation5 + $0x90] sm:$0xff] %vm2600, %v2843
          %2876 = vst.msk [vmem:[#allocation5 + $0x98] sm:$0xff] %vm2600, %v2844
          %2877 = vst.msk [vmem:[#allocation5 + $0xa0] sm:$0xff] %vm2600, %v2845
          %2878 = vst.msk [vmem:[#allocation5 + $0xa8] sm:$0xff] %vm2600, %v2846
          %2879 = vst.msk [vmem:[#allocation5 + $0xb0] sm:$0xff] %vm2600, %v2847
          %2880 = vst.msk [vmem:[#allocation5 + $0xb8] sm:$0xff] %vm2600, %v2848
          %2881 = vst.msk [vmem:[#allocation5 + $0xc0] sm:$0xff] %vm2600, %v2849
          %2882 = vst.msk [vmem:[#allocation5 + $0xc8] sm:$0xff] %vm2600, %v2850
          %2883 = vst.msk [vmem:[#allocation5 + $0xd0] sm:$0xff] %vm2600, %v2851
          %2884 = vst.msk [vmem:[#allocation5 + $0xd8] sm:$0xff] %vm2600, %v2852
          %2885 = vst.msk [vmem:[#allocation5 + $0xe0] sm:$0xff] %vm2600, %v2853
          %2886 = vst.msk [vmem:[#allocation5 + $0xe8] sm:$0xff] %vm2600, %v2854
          %2887 = vst.msk [vmem:[#allocation5 + $0xf0] sm:$0xff] %vm2600, %v2855
          %2888 = vst.msk [vmem:[#allocation5 + $0xf8] sm:$0xff] %vm2600, %v2856
          // Predicated region
          $region57: #{tpu_custom_call.1} parent=55 // pred_check
            %p2889 = pneg %p293
          $region58: #{tpu_custom_call.1} parent=55 // pred_check_branch
            %2891 = sbr.rel (%p2889) target = $region60
          $region59: #{tpu_custom_call.1} parent=55 // pred_region
            %v2892 = vld [vmem:[#allocation5] sm:$0xff]
            %v2893 = vld [vmem:[#allocation5 + $0x8] sm:$0xff]
            %v2894 = vld [vmem:[#allocation5 + $0x10] sm:$0xff]
            %v2895 = vld [vmem:[#allocation5 + $0x18] sm:$0xff]
            %v2896 = vld [vmem:[#allocation5 + $0x20] sm:$0xff]
            %v2897 = vld [vmem:[#allocation5 + $0x28] sm:$0xff]
            %v2898 = vld [vmem:[#allocation5 + $0x30] sm:$0xff]
            %v2899 = vld [vmem:[#allocation5 + $0x38] sm:$0xff]
            %v2900 = vld [vmem:[#allocation5 + $0x40] sm:$0xff]
            %v2901 = vld [vmem:[#allocation5 + $0x48] sm:$0xff]
            %v2902 = vld [vmem:[#allocation5 + $0x50] sm:$0xff]
            %v2903 = vld [vmem:[#allocation5 + $0x58] sm:$0xff]
            %v2904 = vld [vmem:[#allocation5 + $0x60] sm:$0xff]
            %v2905 = vld [vmem:[#allocation5 + $0x68] sm:$0xff]
            %v2906 = vld [vmem:[#allocation5 + $0x70] sm:$0xff]
            %v2907 = vld [vmem:[#allocation5 + $0x78] sm:$0xff]
            %v2908 = vld [vmem:[#allocation5 + $0x80] sm:$0xff]
            %v2909 = vld [vmem:[#allocation5 + $0x88] sm:$0xff]
            %v2910 = vld [vmem:[#allocation5 + $0x90] sm:$0xff]
            %v2911 = vld [vmem:[#allocation5 + $0x98] sm:$0xff]
            %v2912 = vld [vmem:[#allocation5 + $0xa0] sm:$0xff]
            %v2913 = vld [vmem:[#allocation5 + $0xa8] sm:$0xff]
            %v2914 = vld [vmem:[#allocation5 + $0xb0] sm:$0xff]
            %v2915 = vld [vmem:[#allocation5 + $0xb8] sm:$0xff]
            %v2916 = vld [vmem:[#allocation5 + $0xc0] sm:$0xff]
            %v2917 = vld [vmem:[#allocation5 + $0xc8] sm:$0xff]
            %v2918 = vld [vmem:[#allocation5 + $0xd0] sm:$0xff]
            %v2919 = vld [vmem:[#allocation5 + $0xd8] sm:$0xff]
            %v2920 = vld [vmem:[#allocation5 + $0xe0] sm:$0xff]
            %v2921 = vld [vmem:[#allocation5 + $0xe8] sm:$0xff]
            %v2922 = vld [vmem:[#allocation5 + $0xf0] sm:$0xff]
            %v2923 = vld [vmem:[#allocation5 + $0xf8] sm:$0xff]
            %v2924 = vld [vmem:[#allocation4] sm:$0xff]
            %v2925 = vld [vmem:[#allocation4 + $0x8] sm:$0xff]
            %v2926 = vld [vmem:[#allocation4 + $0x10] sm:$0xff]
            %v2927 = vld [vmem:[#allocation4 + $0x18] sm:$0xff]
            %v2928 = vld [vmem:[#allocation4 + $0x20] sm:$0xff]
            %v2929 = vld [vmem:[#allocation4 + $0x28] sm:$0xff]
            %v2930 = vld [vmem:[#allocation4 + $0x30] sm:$0xff]
            %v2931 = vld [vmem:[#allocation4 + $0x38] sm:$0xff]
            %v2932 = vld [vmem:[#allocation4 + $0x40] sm:$0xff]
            %v2933 = vld [vmem:[#allocation4 + $0x48] sm:$0xff]
            %v2934 = vld [vmem:[#allocation4 + $0x50] sm:$0xff]
            %v2935 = vld [vmem:[#allocation4 + $0x58] sm:$0xff]
            %v2936 = vld [vmem:[#allocation4 + $0x60] sm:$0xff]
            %v2937 = vld [vmem:[#allocation4 + $0x68] sm:$0xff]
            %v2938 = vld [vmem:[#allocation4 + $0x70] sm:$0xff]
            %v2939 = vld [vmem:[#allocation4 + $0x78] sm:$0xff]
            %v2940 = vld [vmem:[#allocation4 + $0x80] sm:$0xff]
            %v2941 = vld [vmem:[#allocation4 + $0x88] sm:$0xff]
            %v2942 = vld [vmem:[#allocation4 + $0x90] sm:$0xff]
            %v2943 = vld [vmem:[#allocation4 + $0x98] sm:$0xff]
            %v2944 = vld [vmem:[#allocation4 + $0xa0] sm:$0xff]
            %v2945 = vld [vmem:[#allocation4 + $0xa8] sm:$0xff]
            %v2946 = vld [vmem:[#allocation4 + $0xb0] sm:$0xff]
            %v2947 = vld [vmem:[#allocation4 + $0xb8] sm:$0xff]
            %v2948 = vld [vmem:[#allocation4 + $0xc0] sm:$0xff]
            %v2949 = vld [vmem:[#allocation4 + $0xc8] sm:$0xff]
            %v2950 = vld [vmem:[#allocation4 + $0xd0] sm:$0xff]
            %v2951 = vld [vmem:[#allocation4 + $0xd8] sm:$0xff]
            %v2952 = vld [vmem:[#allocation4 + $0xe0] sm:$0xff]
            %v2953 = vld [vmem:[#allocation4 + $0xe8] sm:$0xff]
            %v2954 = vld [vmem:[#allocation4 + $0xf0] sm:$0xff]
            %v2955 = vld [vmem:[#allocation4 + $0xf8] sm:$0xff]
            %v2956 = vlog2.pop %v2924
            %v2957 = vmul.f32 %v2956, 0.6931472
            %v2958 = vlog2.pop %v2925
            %v2959 = vmul.f32 %v2958, 0.6931472
            %v2960 = vlog2.pop %v2926
            %v2961 = vmul.f32 %v2960, 0.6931472
            %v2962 = vlog2.pop %v2927
            %v2963 = vmul.f32 %v2962, 0.6931472
            %v2964 = vlog2.pop %v2928
            %v2965 = vmul.f32 %v2964, 0.6931472
            %v2966 = vlog2.pop %v2929
            %v2967 = vmul.f32 %v2966, 0.6931472
            %v2968 = vlog2.pop %v2930
            %v2969 = vmul.f32 %v2968, 0.6931472
            %v2970 = vlog2.pop %v2931
            %v2971 = vmul.f32 %v2970, 0.6931472
            %v2972 = vlog2.pop %v2932
            %v2973 = vmul.f32 %v2972, 0.6931472
            %v2974 = vlog2.pop %v2933
            %v2975 = vmul.f32 %v2974, 0.6931472
            %v2976 = vlog2.pop %v2934
            %v2977 = vmul.f32 %v2976, 0.6931472
            %v2978 = vlog2.pop %v2935
            %v2979 = vmul.f32 %v2978, 0.6931472
            %v2980 = vlog2.pop %v2936
            %v2981 = vmul.f32 %v2980, 0.6931472
            %v2982 = vlog2.pop %v2937
            %v2983 = vmul.f32 %v2982, 0.6931472
            %v2984 = vlog2.pop %v2938
            %v2985 = vmul.f32 %v2984, 0.6931472
            %v2986 = vlog2.pop %v2939
            %v2987 = vmul.f32 %v2986, 0.6931472
            %v2988 = vlog2.pop %v2940
            %v2989 = vmul.f32 %v2988, 0.6931472
            %v2990 = vlog2.pop %v2941
            %v2991 = vmul.f32 %v2990, 0.6931472
            %v2992 = vlog2.pop %v2942
            %v2993 = vmul.f32 %v2992, 0.6931472
            %v2994 = vlog2.pop %v2943
            %v2995 = vmul.f32 %v2994, 0.6931472
            %v2996 = vlog2.pop %v2944
            %v2997 = vmul.f32 %v2996, 0.6931472
            %v2998 = vlog2.pop %v2945
            %v2999 = vmul.f32 %v2998, 0.6931472
            %v3000 = vlog2.pop %v2946
            %v3001 = vmul.f32 %v3000, 0.6931472
            %v3002 = vlog2.pop %v2947
            %v3003 = vmul.f32 %v3002, 0.6931472
            %v3004 = vlog2.pop %v2948
            %v3005 = vmul.f32 %v3004, 0.6931472
            %v3006 = vlog2.pop %v2949
            %v3007 = vmul.f32 %v3006, 0.6931472
            %v3008 = vlog2.pop %v2950
            %v3009 = vmul.f32 %v3008, 0.6931472
            %v3010 = vlog2.pop %v2951
            %v3011 = vmul.f32 %v3010, 0.6931472
            %v3012 = vlog2.pop %v2952
            %v3013 = vmul.f32 %v3012, 0.6931472
            %v3014 = vlog2.pop %v2953
            %v3015 = vmul.f32 %v3014, 0.6931472
            %v3016 = vlog2.pop %v2954
            %v3017 = vmul.f32 %v3016, 0.6931472
            %v3018 = vlog2.pop %v2955
            %v3019 = vmul.f32 %v3018, 0.6931472
            %v3020 = vsub.f32 %v2892, %v2957
            %v3021 = vsub.f32 %v2893, %v2959
            %v3022 = vsub.f32 %v2894, %v2961
            %v3023 = vsub.f32 %v2895, %v2963
            %v3024 = vsub.f32 %v2896, %v2965
            %v3025 = vsub.f32 %v2897, %v2967
            %v3026 = vsub.f32 %v2898, %v2969
            %v3027 = vsub.f32 %v2899, %v2971
            %v3028 = vsub.f32 %v2900, %v2973
            %v3029 = vsub.f32 %v2901, %v2975
            %v3030 = vsub.f32 %v2902, %v2977
            %v3031 = vsub.f32 %v2903, %v2979
            %v3032 = vsub.f32 %v2904, %v2981
            %v3033 = vsub.f32 %v2905, %v2983
            %v3034 = vsub.f32 %v2906, %v2985
            %v3035 = vsub.f32 %v2907, %v2987
            %v3036 = vsub.f32 %v2908, %v2989
            %v3037 = vsub.f32 %v2909, %v2991
            %v3038 = vsub.f32 %v2910, %v2993
            %v3039 = vsub.f32 %v2911, %v2995
            %v3040 = vsub.f32 %v2912, %v2997
            %v3041 = vsub.f32 %v2913, %v2999
            %v3042 = vsub.f32 %v2914, %v3001
            %v3043 = vsub.f32 %v2915, %v3003
            %v3044 = vsub.f32 %v2916, %v3005
            %v3045 = vsub.f32 %v2917, %v3007
            %v3046 = vsub.f32 %v2918, %v3009
            %v3047 = vsub.f32 %v2919, %v3011
            %v3048 = vsub.f32 %v2920, %v3013
            %v3049 = vsub.f32 %v2921, %v3015
            %v3050 = vsub.f32 %v2922, %v3017
            %v3051 = vsub.f32 %v2923, %v3019
            %v3052 = vmul.f32 %v3020, -1.0
            %v3053 = vmul.f32 %v3021, -1.0
            %v3054 = vmul.f32 %v3022, -1.0
            %v3055 = vmul.f32 %v3023, -1.0
            %v3056 = vmul.f32 %v3024, -1.0
            %v3057 = vmul.f32 %v3025, -1.0
            %v3058 = vmul.f32 %v3026, -1.0
            %v3059 = vmul.f32 %v3027, -1.0
            %v3060 = vmul.f32 %v3028, -1.0
            %v3061 = vmul.f32 %v3029, -1.0
            %v3062 = vmul.f32 %v3030, -1.0
            %v3063 = vmul.f32 %v3031, -1.0
            %v3064 = vmul.f32 %v3032, -1.0
            %v3065 = vmul.f32 %v3033, -1.0
            %v3066 = vmul.f32 %v3034, -1.0
            %v3067 = vmul.f32 %v3035, -1.0
            %v3068 = vmul.f32 %v3036, -1.0
            %v3069 = vmul.f32 %v3037, -1.0
            %v3070 = vmul.f32 %v3038, -1.0
            %v3071 = vmul.f32 %v3039, -1.0
            %v3072 = vmul.f32 %v3040, -1.0
            %v3073 = vmul.f32 %v3041, -1.0
            %v3074 = vmul.f32 %v3042, -1.0
            %v3075 = vmul.f32 %v3043, -1.0
            %v3076 = vmul.f32 %v3044, -1.0
            %v3077 = vmul.f32 %v3045, -1.0
            %v3078 = vmul.f32 %v3046, -1.0
            %v3079 = vmul.f32 %v3047, -1.0
            %v3080 = vmul.f32 %v3048, -1.0
            %v3081 = vmul.f32 %v3049, -1.0
            %v3082 = vmul.f32 %v3050, -1.0
            %v3083 = vmul.f32 %v3051, -1.0
            %3084 = vst.msk [vmem:[%s290] sm:$0xff] %vm2600, %v3052
            %3085 = vst.msk [vmem:[%s290 + $0x8] sm:$0xff] %vm2600, %v3053
            %3086 = vst.msk [vmem:[%s290 + $0x10] sm:$0xff] %vm2600, %v3054
            %3087 = vst.msk [vmem:[%s290 + $0x18] sm:$0xff] %vm2600, %v3055
            %3088 = vst.msk [vmem:[%s290 + $0x20] sm:$0xff] %vm2600, %v3056
            %3089 = vst.msk [vmem:[%s290 + $0x28] sm:$0xff] %vm2600, %v3057
            %3090 = vst.msk [vmem:[%s290 + $0x30] sm:$0xff] %vm2600, %v3058
            %3091 = vst.msk [vmem:[%s290 + $0x38] sm:$0xff] %vm2600, %v3059
            %3092 = vst.msk [vmem:[%s290 + $0x40] sm:$0xff] %vm2600, %v3060
            %3093 = vst.msk [vmem:[%s290 + $0x48] sm:$0xff] %vm2600, %v3061
            %3094 = vst.msk [vmem:[%s290 + $0x50] sm:$0xff] %vm2600, %v3062
            %3095 = vst.msk [vmem:[%s290 + $0x58] sm:$0xff] %vm2600, %v3063
            %3096 = vst.msk [vmem:[%s290 + $0x60] sm:$0xff] %vm2600, %v3064
            %3097 = vst.msk [vmem:[%s290 + $0x68] sm:$0xff] %vm2600, %v3065
            %3098 = vst.msk [vmem:[%s290 + $0x70] sm:$0xff] %vm2600, %v3066
            %3099 = vst.msk [vmem:[%s290 + $0x78] sm:$0xff] %vm2600, %v3067
            %3100 = vst.msk [vmem:[%s290 + $0x80] sm:$0xff] %vm2600, %v3068
            %3101 = vst.msk [vmem:[%s290 + $0x88] sm:$0xff] %vm2600, %v3069
            %3102 = vst.msk [vmem:[%s290 + $0x90] sm:$0xff] %vm2600, %v3070
            %3103 = vst.msk [vmem:[%s290 + $0x98] sm:$0xff] %vm2600, %v3071
            %3104 = vst.msk [vmem:[%s290 + $0xa0] sm:$0xff] %vm2600, %v3072
            %3105 = vst.msk [vmem:[%s290 + $0xa8] sm:$0xff] %vm2600, %v3073
            %3106 = vst.msk [vmem:[%s290 + $0xb0] sm:$0xff] %vm2600, %v3074
            %3107 = vst.msk [vmem:[%s290 + $0xb8] sm:$0xff] %vm2600, %v3075
            %3108 = vst.msk [vmem:[%s290 + $0xc0] sm:$0xff] %vm2600, %v3076
            %3109 = vst.msk [vmem:[%s290 + $0xc8] sm:$0xff] %vm2600, %v3077
            %3110 = vst.msk [vmem:[%s290 + $0xd0] sm:$0xff] %vm2600, %v3078
            %3111 = vst.msk [vmem:[%s290 + $0xd8] sm:$0xff] %vm2600, %v3079
            %3112 = vst.msk [vmem:[%s290 + $0xe0] sm:$0xff] %vm2600, %v3080
            %3113 = vst.msk [vmem:[%s290 + $0xe8] sm:$0xff] %vm2600, %v3081
            %3114 = vst.msk [vmem:[%s290 + $0xf0] sm:$0xff] %vm2600, %v3082
            %3115 = vst.msk [vmem:[%s290 + $0xf8] sm:$0xff] %vm2600, %v3083
          $region60: #{tpu_custom_call.1} parent=55 // pred_fallthru
            _
        $region56: #{tpu_custom_call.1} parent=31 // pred_fallthru
          _
        %s3116 = smul.u32 32, %s23
        %p3117 = scmp.lt.s32.totalorder %s3116, 31
        %s3118 = scalar_select %p3117, %s3116, 31
        %s3119 = smul.addr %s3118, 8
        %s3120 = scalar_lea.vmem %s3, %s3119
        // Predicated region
        $region61: #{tpu_custom_call.1} parent=31 // pred_check
          %p3121 = pneg %p141
        $region62: #{tpu_custom_call.1} parent=31 // pred_check_branch
          %3123 = sbr.rel (%p3121) target = $region64
        $region63: #{tpu_custom_call.1} parent=31 // pred_region
          %s3124 = smul.u32 32, %s23
        $region64: #{tpu_custom_call.1} parent=31 // pred_fallthru
          _
        // Predicated region
        $region65: #{tpu_custom_call.1} parent=31 // pred_check
          %p3125 = pneg %p141
        $region66: #{tpu_custom_call.1} parent=31 // pred_check_branch
          %3127 = sbr.rel (%p3125) target = $region68
        $region67: #{tpu_custom_call.1} parent=31 // pred_region
          %s3128 = smul.u32 32, %s23
          %p3129 = scmp.lt.s32.totalorder %s3128, 31
          %s3130 = scalar_select %p3129, %s3128, 31
          %s3131 = smul.addr %s3130, 8
          %s3132 = scalar_lea.vmem %s3, %s3131
        $region68: #{tpu_custom_call.1} parent=31 // pred_fallthru
          _
      $region32: #{tpu_custom_call.1} parent=5 // pred_fallthru
        _
      %p3133 = scmp.le.s32.totalorder 2, %s13
      // Predicated region
      $region69: #{tpu_custom_call.1} parent=5 // pred_check
        %p3134 = pneg %p3133
      $region70: #{tpu_custom_call.1} parent=5 // pred_check_branch
        %3136 = sbr.rel (%p3134) target = $region72
      $region71: #{tpu_custom_call.1} parent=5 // pred_region
        %s3137 = ssub.s32 %s13, 2
      $region72: #{tpu_custom_call.1} parent=5 // pred_fallthru
        _
    $region6: #{tpu_custom_call.1} parent=1 // loop_footer
      %s17 = sadd.s32 1, %s13
    $region7: #{tpu_custom_call.1} parent=1 // loop_footer_branch
      %12 = sbr.rel target = $region3
    $region8: #{tpu_custom_call.1} parent=1 // loop_exit
      _
    %3138 = vsyncpa [#allocation7], 1
    %s3139 = scalar_lea.sflag [#allocation7], 1
    %3140 = vsyncpa %s3139, 1
    %3141 = vsyncpa [#allocation9], 1
    %s3142 = scalar_lea.sflag [#allocation9], 1
    %3143 = vsyncpa %s3142, 1

</llo_original>
